<compile_context>
chip_gen: v7x
topology: tpu7x:2x2x1
jax: 0.10.0
libtpu: 0.0.40
codegen_flags: <defaults>
</compile_context>

<pallas_src>
import functools

import numpy as np
import jax
import jax.numpy as jnp
from jax.experimental import pallas as pl
from jax.experimental.pallas import tpu as pltpu


def _shift_lanes(x, off, M):
    """y[:, m] = x[:, (m + off) % M] via two static lane slices + a concat.

    Wrap-around entries are zeroed by the caller's validity mask, so the
    circular shift is equivalent to the zero-padded conv tap access.
    (pltpu.roll is a drop-in alternative that uses the XLU rotate slot.)
    """
    s = off % M
    if s == 0:
        return x
    return jnp.concatenate([x[:, s:], x[:, :s]], axis=1)


# ----------------------------- Pallas kernel --------------------------------
def _lambda_block_kernel(x_ref, w_ref, shift_ref, mask_ref, wt_ref, b_ref, o_ref,
                         *, Nh, dk, dv, du, M, offsets):
    f32 = jnp.float32
    T = len(offsets)
    cq, ck = Nh * dk, du * dk

    x = x_ref[0]                                                    # (C, M) f32

    # q / k / v in one MXU matmul; eval-mode BN scales are folded into the rows
    # and the BN shifts are a single lane-broadcast add.
    qkv = jnp.dot(w_ref[...], x, preferred_element_type=f32) + shift_ref[...]
    q = qkv[:cq]                                                    # (Nh*dk, M)
    kl = qkv[cq:cq + ck]                                            # (du*dk, M)
    vv = qkv[cq + ck:]                                              # (du*dv, M)

    # Key softmax over the spatial (lane) axis -- exact normalization.
    kmax = jnp.max(kl, axis=-1, keepdims=True)
    kexp = jnp.exp(kl - kmax)
    ksm = kexp / jnp.sum(kexp, axis=-1, keepdims=True)              # (du*dk, M)

    # lambda_c^T[v, k] = sum_{u,m} v[u, v, m] * softmax(k)[u, k, m]
    if du == 1:
        vcat, kcat = vv, ksm
    else:
        vcat = jnp.concatenate([vv[u * dv:(u + 1) * dv] for u in range(du)], axis=1)
        kcat = jnp.concatenate([ksm[u * dk:(u + 1) * dk] for u in range(du)], axis=1)
    lc_t = jax.lax.dot_general(vcat, kcat, (((1,), (1,)), ((), ())),
                               preferred_element_type=f32)          # (dv, dk)

    # lambda_p via r*r shifted multiply-accumulates (no O(M^2) Toeplitz operand).
    # Each shifted + masked copy of v is built once and shared across all dk
    # keys; per-key chunks stay (dv, M) and the conv bias is folded into init.
    lp = [jnp.full((dv, M), b_ref[k], dtype=f32) for k in range(dk)]
    for u in range(du):
        v_u = vv[u * dv:(u + 1) * dv]                               # (dv, M)
        for t, off in enumerate(offsets):
            rolled = _shift_lanes(v_u, off, M)
            s_t = rolled * mask_ref[t:t + 1, :]                     # zero OOB taps
            for k in range(dk):
                lp[k] = lp[k] + wt_ref[k, u * T + t] * s_t          # scalar VPU FMA

    # y[h] = lc_t @ q_h   (content term, tiny MXU dot)
    #      + sum_k q_h[k] * lambda_p[k]   (position term, VPU FMAs)
    for h in range(Nh):
        q_h = q[h * dk:(h + 1) * dk]                                # (dk, M)
        y_h = jnp.dot(lc_t, q_h, preferred_element_type=f32)        # (dv, M)
        for k in range(dk):
            y_h = y_h + q_h[k:k + 1, :] * lp[k]
        o_ref[0, h * dv:(h + 1) * dv, :] = y_h                      # lane-dense store


# --------------------- one-time parameter preparation ------------------------
def prepare_lambda_params(w_qkv, scale_q, shift_q, scale_v, shift_v,
                          w_lambda, b_lambda, *, Nh, dk, du, r, H, W):
    """Fold BN into the 1x1-conv rows and lower the (1,r,r) conv into per-tap
    scalar weights + spatial offsets + validity masks.  Called once at init,
    NOT per forward."""
    cq, ck = Nh * dk, du * dk
    p = (r - 1) // 2
    M = H * W
    T = r * r

    w_q = w_qkv[:cq] * scale_q[:, None]
    w_k = w_qkv[cq:cq + ck]
    w_v = w_qkv[cq + ck:] * scale_v[:, None]
    w_folded = jnp.concatenate([w_q, w_k, w_v], axis=0).astype(jnp.float32)
    shifts = jnp.concatenate(
        [shift_q, jnp.zeros((ck,), jnp.float32), shift_v]
    ).astype(jnp.float32)[:, None]                                   # (ctot, 1)

    h_idx = np.repeat(np.arange(H), W)
    w_idx = np.tile(np.arange(W), H)
    offsets = []
    masks = np.zeros((T, M), np.float32)
    for i in range(r):
        for j in range(r):
            di, dj = i - p, j - p
            offsets.append(di * W + dj)
            valid = ((h_idx + di >= 0) & (h_idx + di < H)
                     & (w_idx + dj >= 0) & (w_idx + dj < W))
            masks[i * r + j] = valid.astype(np.float32)

    w_taps = w_lambda[:, :, 0, :, :].reshape(dk, du * T).astype(jnp.float32)
    return dict(w_folded=w_folded, shifts=shifts, masks=jnp.asarray(masks),
                w_taps=w_taps, b_lambda=b_lambda.astype(jnp.float32),
                offsets=tuple(int(o) for o in offsets))


# --------------------------------- forward -----------------------------------
def lambda_block_forward(x, params, *, Nh, dk, du):
    N, C, H, W = x.shape
    assert C % Nh == 0
    dv = C // Nh
    M = H * W
    cq, ck, cv = Nh * dk, du * dk, du * dv
    ctot = cq + ck + cv

    offsets = params["offsets"]
    T = len(offsets)
    assert params["masks"].shape == (T, M)
    assert params["w_folded"].shape == (ctot, C)

    x_f = x.reshape(N, C, M).astype(jnp.float32)

    kernel = functools.partial(_lambda_block_kernel, Nh=Nh, dk=dk, dv=dv, du=du,
                               M=M, offsets=offsets)

    flops = N * 2 * (ctot * C * M                 # qkv matmul
                     + du * dk * dv * M           # lambda_c
                     + du * T * dk * dv * M       # lambda_p tap FMAs
                     + 2 * Nh * dk * dv * M)      # yc + yp
    bytes_accessed = 4 * (2 * N * C * M + ctot * (C + 1) + T * M
                          + dk * (du * T + 1))
    cost = pl.CostEstimate(flops=flops, transcendentals=N * du * dk * M,
                           bytes_accessed=bytes_accessed)

    out = pl.pallas_call(
        kernel,
        out_shape=jax.ShapeDtypeStruct((N, C, M), jnp.float32),
        grid=(N,),
        in_specs=[
            pl.BlockSpec((1, C, M), lambda b: (b, 0, 0)),            # x
            pl.BlockSpec((ctot, C), lambda b: (0, 0)),               # folded qkv weight
            pl.BlockSpec((ctot, 1), lambda b: (0, 0)),               # BN shifts
            pl.BlockSpec((T, M), lambda b: (0, 0)),                  # tap validity masks
            pl.BlockSpec(memory_space=pltpu.MemorySpace.SMEM),       # tap weights (dk, du*T)
            pl.BlockSpec(memory_space=pltpu.MemorySpace.SMEM),       # conv bias (dk,)
        ],
        out_specs=pl.BlockSpec((1, C, M), lambda b: (b, 0, 0)),
        compiler_params=pltpu.CompilerParams(
            dimension_semantics=("parallel",),
            vmem_limit_bytes=32 * 1024 * 1024),
        cost_estimate=cost,
    )(x_f, params["w_folded"], params["shifts"], params["masks"],
      params["w_taps"], params["b_lambda"])

    return out.reshape(N, C, H, W)


# ------------------------------ pure-JAX reference ---------------------------
def reference_forward(x, w_qkv, scale_q, shift_q, scale_v, shift_v,
                      w_lambda, b_lambda, *, Nh, dk, du, r):
    N, C, H, W = x.shape
    dv = C // Nh
    M = H * W
    p = (r - 1) // 2
    cq, ck = Nh * dk, du * dk

    xf = x.reshape(N, C, M)
    qkv = jnp.einsum('oc,ncm->nom', w_qkv, xf)
    q = qkv[:, :cq] * scale_q[None, :, None] + shift_q[None, :, None]
    k = qkv[:, cq:cq + ck]
    v = qkv[:, cq + ck:] * scale_v[None, :, None] + shift_v[None, :, None]

    q = q.reshape(N, Nh, dk, M)
    v = v.reshape(N, du, dv, M)
    k = jax.nn.softmax(k.reshape(N, du, dk, M), axis=-1)

    lambda_c = jnp.einsum('bukm,buvm->bkv', k, v)
    yc = jnp.einsum('bhkm,bkv->bhvm', q, lambda_c)

    v5 = v.reshape(N, du, dv, H, W)
    vpad = jnp.pad(v5, ((0, 0), (0, 0), (0, 0), (p, p), (p, p)))
    lp = jnp.zeros((N, dk, dv, H, W), jnp.float32)
    for i in range(r):
        for j in range(r):
            sl = vpad[:, :, :, i:i + H, j:j + W]
            lp = lp + jnp.einsum('ku,nuvhw->nkvhw', w_lambda[:, :, 0, i, j], sl)
    lp = lp + b_lambda[None, :, None, None, None]
    lp = lp.reshape(N, dk, dv, M)

    yp = jnp.einsum('bhkm,bkvm->bhvm', q, lp)
    return (yc + yp).reshape(N, C, H, W)


# ----------------------------------- main ------------------------------------
if __name__ == "__main__":
    # Small config consistent with LambdaBlock.__init__; M = H*W = 256 so the
    # output layout is already lane-dense.
    N, d, H, W = 2, 16, 16, 16
    dk, du, Nh, r, stride = 8, 1, 4, 5, 1
    dv = d // Nh
    cq, ck, cv = Nh * dk, du * dk, du * dv
    eps = 1e-5

    keys = jax.random.split(jax.random.PRNGKey(0), 12)
    x = jax.random.normal(keys[0], (N, d, H, W), jnp.float32)

    # conv_qkv weight: (Cout, Cin) for the 1x1 conv (no bias)
    w_qkv = jax.random.normal(keys[1], (cq + ck + cv, d), jnp.float32) * 0.2

    # BatchNorm2d parameters (eval mode: running stats + affine)
    gamma_q = 1.0 + 0.1 * jax.random.normal(keys[2], (cq,), jnp.float32)
    beta_q = 0.1 * jax.random.normal(keys[3], (cq,), jnp.float32)
    mean_q = 0.1 * jax.random.normal(keys[4], (cq,), jnp.float32)
    var_q = 0.5 + jax.random.uniform(keys[5], (cq,), jnp.float32)
    gamma_v = 1.0 + 0.1 * jax.random.normal(keys[6], (cv,), jnp.float32)
    beta_v = 0.1 * jax.random.normal(keys[7], (cv,), jnp.float32)
    mean_v = 0.1 * jax.random.normal(keys[8], (cv,), jnp.float32)
    var_v = 0.5 + jax.random.uniform(keys[9], (cv,), jnp.float32)

    scale_q = gamma_q / jnp.sqrt(var_q + eps)
    shift_q = beta_q - mean_q * scale_q
    scale_v = gamma_v / jnp.sqrt(var_v + eps)
    shift_v = beta_v - mean_v * scale_v

    # lambda_conv: Conv3d(du, dk, (1, r, r)) weight + bias
    w_lambda = jax.random.normal(keys[10], (dk, du, 1, r, r), jnp.float32) * 0.1
    b_lambda = 0.1 * jax.random.normal(keys[11], (dk,), jnp.float32)

    # One-time parameter prep (hoisted out of the forward path).
    params = prepare_lambda_params(w_qkv, scale_q, shift_q, scale_v, shift_v,
                                   w_lambda, b_lambda,
                                   Nh=Nh, dk=dk, du=du, r=r, H=H, W=W)

    out = lambda_block_forward(x, params, Nh=Nh, dk=dk, du=du)
    out = jax.block_until_ready(out)

    ref = reference_forward(x, w_qkv, scale_q, shift_q, scale_v, shift_v,
                            w_lambda, b_lambda, Nh=Nh, dk=dk, du=du, r=r)
    # Kernel math is f32 end-to-end (observed error ~1e-5); tolerance keeps
    # margin for MXU f32 pass-decomposition modes on real hardware.
    np.testing.assert_allclose(np.asarray(out), np.asarray(ref),
                               rtol=2e-2, atol=2e-2)

    print("KERNEL_OK")
</pallas_src>

<mosaic_0001>
module attributes {stable_mosaic.version = 11 : i64} {
  func.func @_lambda_block_kernel(%arg0: i32, %arg1: memref<1x16x256xf32, #tpu.memory_space<vmem>>, %arg2: memref<44x16xf32, #tpu.memory_space<vmem>>, %arg3: memref<44x1xf32, #tpu.memory_space<vmem>>, %arg4: memref<25x256xf32, #tpu.memory_space<vmem>>, %arg5: memref<8x25xf32, #tpu.memory_space<smem>>, %arg6: memref<8xf32, #tpu.memory_space<smem>>, %arg7: memref<1x16x256xf32, #tpu.memory_space<vmem>>) attributes {dimension_semantics = [#tpu.dimension_semantics<parallel>], iteration_bounds = array<i64: 2>, scalar_prefetch = 0 : i64, scratch_operands = 0 : i64, tpu.core_type = #tpu.core_type<tc>, window_params = [{transform_indices = @transform_0, window_bounds = array<i64: 1, 16, 256>}, {pipeline_mode = #tpu.pipeline_mode<synchronous>, transform_indices = @transform_1, window_bounds = array<i64: 44, 16>}, {pipeline_mode = #tpu.pipeline_mode<synchronous>, transform_indices = @transform_2, window_bounds = array<i64: 44, 1>}, {pipeline_mode = #tpu.pipeline_mode<synchronous>, transform_indices = @transform_3, window_bounds = array<i64: 25, 256>}, {transform_indices = @transform_4, window_bounds = array<i64: 8, 25>}, {transform_indices = @transform_5, window_bounds = array<i64: 8>}, {transform_indices = @transform_6, window_bounds = array<i64: 1, 16, 256>}]} {
    %c0 = arith.constant 0 : index
    %c0_0 = arith.constant 0 : index
    %c0_1 = arith.constant 0 : index
    %0 = vector.load %arg1[%c0, %c0_0, %c0_1] : memref<1x16x256xf32, #tpu.memory_space<vmem>>, vector<1x16x256xf32>
    %1 = vector.shape_cast %0 : vector<1x16x256xf32> to vector<16x256xf32>
    %c0_2 = arith.constant 0 : index
    %c0_3 = arith.constant 0 : index
    %2 = vector.load %arg2[%c0_2, %c0_3] : memref<44x16xf32, #tpu.memory_space<vmem>>, vector<44x16xf32>
    %cst = arith.constant dense<0.000000e+00> : vector<44x256xf32>
    %3 = tpu.matmul %2, %1, %cst {dimension_numbers = #tpu.dot_dimension_numbers<[1], [0], [0], [1], [0, 0, 1, 1], [], []>} : vector<44x16xf32>, vector<16x256xf32>, vector<44x256xf32> -> vector<44x256xf32>
    %c0_4 = arith.constant 0 : index
    %c0_5 = arith.constant 0 : index
    %4 = vector.load %arg3[%c0_4, %c0_5] : memref<44x1xf32, #tpu.memory_space<vmem>>, vector<44x1xf32>
    %5 = vector.broadcast %4 : vector<44x1xf32> to vector<44x256xf32>
    %6 = arith.addf %3, %5 : vector<44x256xf32>
    %7 = vector.extract_strided_slice %6 {offsets = [0, 0], sizes = [32, 256], strides = [1, 1]} : vector<44x256xf32> to vector<32x256xf32>
    %8 = vector.extract_strided_slice %6 {offsets = [32, 0], sizes = [8, 256], strides = [1, 1]} : vector<44x256xf32> to vector<8x256xf32>
    %9 = vector.extract_strided_slice %6 {offsets = [40, 0], sizes = [4, 256], strides = [1, 1]} : vector<44x256xf32> to vector<4x256xf32>
    %cst_6 = arith.constant dense<0xFF800000> : vector<8xf32>
    %10 = vector.multi_reduction <maximumf>, %8, %cst_6 [1] : vector<8x256xf32> to vector<8xf32>
    %11 = vector.shape_cast %10 : vector<8xf32> to vector<8x1xf32>
    %12 = vector.broadcast %11 : vector<8x1xf32> to vector<8x256xf32>
    %13 = arith.subf %8, %12 : vector<8x256xf32>
    %14 = math.exp %13 : vector<8x256xf32>
    %cst_7 = arith.constant dense<0.000000e+00> : vector<8xf32>
    %15 = vector.multi_reduction <add>, %14, %cst_7 [1] : vector<8x256xf32> to vector<8xf32>
    %16 = vector.shape_cast %15 : vector<8xf32> to vector<8x1xf32>
    %17 = vector.broadcast %16 : vector<8x1xf32> to vector<8x256xf32>
    %18 = arith.divf %14, %17 : vector<8x256xf32>
    %cst_8 = arith.constant dense<0.000000e+00> : vector<4x8xf32>
    %19 = tpu.matmul %9, %18, %cst_8 {dimension_numbers = #tpu.dot_dimension_numbers<[1], [1], [0], [0], [0, 0, 1, 0], [], []>} : vector<4x256xf32>, vector<8x256xf32>, vector<4x8xf32> -> vector<4x8xf32>
    %c0_9 = arith.constant 0 : index
    %20 = memref.load %arg6[%c0_9] : memref<8xf32, #tpu.memory_space<smem>>
    %21 = vector.broadcast %20 : f32 to vector<4x256xf32>
    %c1 = arith.constant 1 : index
    %22 = memref.load %arg6[%c1] : memref<8xf32, #tpu.memory_space<smem>>
    %23 = vector.broadcast %22 : f32 to vector<4x256xf32>
    %c2 = arith.constant 2 : index
    %24 = memref.load %arg6[%c2] : memref<8xf32, #tpu.memory_space<smem>>
    %25 = vector.broadcast %24 : f32 to vector<4x256xf32>
    %c3 = arith.constant 3 : index
    %26 = memref.load %arg6[%c3] : memref<8xf32, #tpu.memory_space<smem>>
    %27 = vector.broadcast %26 : f32 to vector<4x256xf32>
    %c4 = arith.constant 4 : index
    %28 = memref.load %arg6[%c4] : memref<8xf32, #tpu.memory_space<smem>>
    %29 = vector.broadcast %28 : f32 to vector<4x256xf32>
    %c5 = arith.constant 5 : index
    %30 = memref.load %arg6[%c5] : memref<8xf32, #tpu.memory_space<smem>>
    %31 = vector.broadcast %30 : f32 to vector<4x256xf32>
    %c6 = arith.constant 6 : index
    %32 = memref.load %arg6[%c6] : memref<8xf32, #tpu.memory_space<smem>>
    %33 = vector.broadcast %32 : f32 to vector<4x256xf32>
    %c7 = arith.constant 7 : index
    %34 = memref.load %arg6[%c7] : memref<8xf32, #tpu.memory_space<smem>>
    %35 = vector.broadcast %34 : f32 to vector<4x256xf32>
    %36 = vector.extract_strided_slice %9 {offsets = [0, 222], sizes = [4, 34], strides = [1, 1]} : vector<4x256xf32> to vector<4x34xf32>
    %37 = vector.extract_strided_slice %9 {offsets = [0, 0], sizes = [4, 222], strides = [1, 1]} : vector<4x256xf32> to vector<4x222xf32>
    %38 = tpu.concatenate %36, %37 in 1 : vector<4x34xf32>, vector<4x222xf32> -> vector<4x256xf32>
    %c0_10 = arith.constant 0 : index
    %c0_11 = arith.constant 0 : index
    %39 = vector.load %arg4[%c0_10, %c0_11] : memref<25x256xf32, #tpu.memory_space<vmem>>, vector<1x256xf32>
    %40 = vector.broadcast %39 : vector<1x256xf32> to vector<4x256xf32>
    %41 = arith.mulf %38, %40 : vector<4x256xf32>
    %c0_12 = arith.constant 0 : index
    %c0_13 = arith.constant 0 : index
    %42 = memref.load %arg5[%c0_12, %c0_13] : memref<8x25xf32, #tpu.memory_space<smem>>
    %43 = vector.broadcast %42 : f32 to vector<4x256xf32>
    %44 = arith.mulf %43, %41 : vector<4x256xf32>
    %45 = arith.addf %21, %44 : vector<4x256xf32>
    %c1_14 = arith.constant 1 : index
    %c0_15 = arith.constant 0 : index
    %46 = memref.load %arg5[%c1_14, %c0_15] : memref<8x25xf32, #tpu.memory_space<smem>>
    %47 = vector.broadcast %46 : f32 to vector<4x256xf32>
    %48 = arith.mulf %47, %41 : vector<4x256xf32>
    %49 = arith.addf %23, %48 : vector<4x256xf32>
    %c2_16 = arith.constant 2 : index
    %c0_17 = arith.constant 0 : index
    %50 = memref.load %arg5[%c2_16, %c0_17] : memref<8x25xf32, #tpu.memory_space<smem>>
    %51 = vector.broadcast %50 : f32 to vector<4x256xf32>
    %52 = arith.mulf %51, %41 : vector<4x256xf32>
    %53 = arith.addf %25, %52 : vector<4x256xf32>
    %c3_18 = arith.constant 3 : index
    %c0_19 = arith.constant 0 : index
    %54 = memref.load %arg5[%c3_18, %c0_19] : memref<8x25xf32, #tpu.memory_space<smem>>
    %55 = vector.broadcast %54 : f32 to vector<4x256xf32>
    %56 = arith.mulf %55, %41 : vector<4x256xf32>
    %57 = arith.addf %27, %56 : vector<4x256xf32>
    %c4_20 = arith.constant 4 : index
    %c0_21 = arith.constant 0 : index
    %58 = memref.load %arg5[%c4_20, %c0_21] : memref<8x25xf32, #tpu.memory_space<smem>>
    %59 = vector.broadcast %58 : f32 to vector<4x256xf32>
    %60 = arith.mulf %59, %41 : vector<4x256xf32>
    %61 = arith.addf %29, %60 : vector<4x256xf32>
    %c5_22 = arith.constant 5 : index
    %c0_23 = arith.constant 0 : index
    %62 = memref.load %arg5[%c5_22, %c0_23] : memref<8x25xf32, #tpu.memory_space<smem>>
    %63 = vector.broadcast %62 : f32 to vector<4x256xf32>
    %64 = arith.mulf %63, %41 : vector<4x256xf32>
    %65 = arith.addf %31, %64 : vector<4x256xf32>
    %c6_24 = arith.constant 6 : index
    %c0_25 = arith.constant 0 : index
    %66 = memref.load %arg5[%c6_24, %c0_25] : memref<8x25xf32, #tpu.memory_space<smem>>
    %67 = vector.broadcast %66 : f32 to vector<4x256xf32>
    %68 = arith.mulf %67, %41 : vector<4x256xf32>
    %69 = arith.addf %33, %68 : vector<4x256xf32>
    %c7_26 = arith.constant 7 : index
    %c0_27 = arith.constant 0 : index
    %70 = memref.load %arg5[%c7_26, %c0_27] : memref<8x25xf32, #tpu.memory_space<smem>>
    %71 = vector.broadcast %70 : f32 to vector<4x256xf32>
    %72 = arith.mulf %71, %41 : vector<4x256xf32>
    %73 = arith.addf %35, %72 : vector<4x256xf32>
    %74 = vector.extract_strided_slice %9 {offsets = [0, 223], sizes = [4, 33], strides = [1, 1]} : vector<4x256xf32> to vector<4x33xf32>
    %75 = vector.extract_strided_slice %9 {offsets = [0, 0], sizes = [4, 223], strides = [1, 1]} : vector<4x256xf32> to vector<4x223xf32>
    %76 = tpu.concatenate %74, %75 in 1 : vector<4x33xf32>, vector<4x223xf32> -> vector<4x256xf32>
    %c1_28 = arith.constant 1 : index
    %c0_29 = arith.constant 0 : index
    %77 = vector.load %arg4[%c1_28, %c0_29] : memref<25x256xf32, #tpu.memory_space<vmem>>, vector<1x256xf32>
    %78 = vector.broadcast %77 : vector<1x256xf32> to vector<4x256xf32>
    %79 = arith.mulf %76, %78 : vector<4x256xf32>
    %c0_30 = arith.constant 0 : index
    %c1_31 = arith.constant 1 : index
    %80 = memref.load %arg5[%c0_30, %c1_31] : memref<8x25xf32, #tpu.memory_space<smem>>
    %81 = vector.broadcast %80 : f32 to vector<4x256xf32>
    %82 = arith.mulf %81, %79 : vector<4x256xf32>
    %83 = arith.addf %45, %82 : vector<4x256xf32>
    %c1_32 = arith.constant 1 : index
    %c1_33 = arith.constant 1 : index
    %84 = memref.load %arg5[%c1_32, %c1_33] : memref<8x25xf32, #tpu.memory_space<smem>>
    %85 = vector.broadcast %84 : f32 to vector<4x256xf32>
    %86 = arith.mulf %85, %79 : vector<4x256xf32>
    %87 = arith.addf %49, %86 : vector<4x256xf32>
    %c2_34 = arith.constant 2 : index
    %c1_35 = arith.constant 1 : index
    %88 = memref.load %arg5[%c2_34, %c1_35] : memref<8x25xf32, #tpu.memory_space<smem>>
    %89 = vector.broadcast %88 : f32 to vector<4x256xf32>
    %90 = arith.mulf %89, %79 : vector<4x256xf32>
    %91 = arith.addf %53, %90 : vector<4x256xf32>
    %c3_36 = arith.constant 3 : index
    %c1_37 = arith.constant 1 : index
    %92 = memref.load %arg5[%c3_36, %c1_37] : memref<8x25xf32, #tpu.memory_space<smem>>
    %93 = vector.broadcast %92 : f32 to vector<4x256xf32>
    %94 = arith.mulf %93, %79 : vector<4x256xf32>
    %95 = arith.addf %57, %94 : vector<4x256xf32>
    %c4_38 = arith.constant 4 : index
    %c1_39 = arith.constant 1 : index
    %96 = memref.load %arg5[%c4_38, %c1_39] : memref<8x25xf32, #tpu.memory_space<smem>>
    %97 = vector.broadcast %96 : f32 to vector<4x256xf32>
    %98 = arith.mulf %97, %79 : vector<4x256xf32>
    %99 = arith.addf %61, %98 : vector<4x256xf32>
    %c5_40 = arith.constant 5 : index
    %c1_41 = arith.constant 1 : index
    %100 = memref.load %arg5[%c5_40, %c1_41] : memref<8x25xf32, #tpu.memory_space<smem>>
    %101 = vector.broadcast %100 : f32 to vector<4x256xf32>
    %102 = arith.mulf %101, %79 : vector<4x256xf32>
    %103 = arith.addf %65, %102 : vector<4x256xf32>
    %c6_42 = arith.constant 6 : index
    %c1_43 = arith.constant 1 : index
    %104 = memref.load %arg5[%c6_42, %c1_43] : memref<8x25xf32, #tpu.memory_space<smem>>
    %105 = vector.broadcast %104 : f32 to vector<4x256xf32>
    %106 = arith.mulf %105, %79 : vector<4x256xf32>
    %107 = arith.addf %69, %106 : vector<4x256xf32>
    %c7_44 = arith.constant 7 : index
    %c1_45 = arith.constant 1 : index
    %108 = memref.load %arg5[%c7_44, %c1_45] : memref<8x25xf32, #tpu.memory_space<smem>>
    %109 = vector.broadcast %108 : f32 to vector<4x256xf32>
    %110 = arith.mulf %109, %79 : vector<4x256xf32>
    %111 = arith.addf %73, %110 : vector<4x256xf32>
    %112 = vector.extract_strided_slice %9 {offsets = [0, 224], sizes = [4, 32], strides = [1, 1]} : vector<4x256xf32> to vector<4x32xf32>
    %113 = vector.extract_strided_slice %9 {offsets = [0, 0], sizes = [4, 224], strides = [1, 1]} : vector<4x256xf32> to vector<4x224xf32>
    %114 = tpu.concatenate %112, %113 in 1 : vector<4x32xf32>, vector<4x224xf32> -> vector<4x256xf32>
    %c2_46 = arith.constant 2 : index
    %c0_47 = arith.constant 0 : index
    %115 = vector.load %arg4[%c2_46, %c0_47] : memref<25x256xf32, #tpu.memory_space<vmem>>, vector<1x256xf32>
    %116 = vector.broadcast %115 : vector<1x256xf32> to vector<4x256xf32>
    %117 = arith.mulf %114, %116 : vector<4x256xf32>
    %c0_48 = arith.constant 0 : index
    %c2_49 = arith.constant 2 : index
    %118 = memref.load %arg5[%c0_48, %c2_49] : memref<8x25xf32, #tpu.memory_space<smem>>
    %119 = vector.broadcast %118 : f32 to vector<4x256xf32>
    %120 = arith.mulf %119, %117 : vector<4x256xf32>
    %121 = arith.addf %83, %120 : vector<4x256xf32>
    %c1_50 = arith.constant 1 : index
    %c2_51 = arith.constant 2 : index
    %122 = memref.load %arg5[%c1_50, %c2_51] : memref<8x25xf32, #tpu.memory_space<smem>>
    %123 = vector.broadcast %122 : f32 to vector<4x256xf32>
    %124 = arith.mulf %123, %117 : vector<4x256xf32>
    %125 = arith.addf %87, %124 : vector<4x256xf32>
    %c2_52 = arith.constant 2 : index
    %c2_53 = arith.constant 2 : index
    %126 = memref.load %arg5[%c2_52, %c2_53] : memref<8x25xf32, #tpu.memory_space<smem>>
    %127 = vector.broadcast %126 : f32 to vector<4x256xf32>
    %128 = arith.mulf %127, %117 : vector<4x256xf32>
    %129 = arith.addf %91, %128 : vector<4x256xf32>
    %c3_54 = arith.constant 3 : index
    %c2_55 = arith.constant 2 : index
    %130 = memref.load %arg5[%c3_54, %c2_55] : memref<8x25xf32, #tpu.memory_space<smem>>
    %131 = vector.broadcast %130 : f32 to vector<4x256xf32>
    %132 = arith.mulf %131, %117 : vector<4x256xf32>
    %133 = arith.addf %95, %132 : vector<4x256xf32>
    %c4_56 = arith.constant 4 : index
    %c2_57 = arith.constant 2 : index
    %134 = memref.load %arg5[%c4_56, %c2_57] : memref<8x25xf32, #tpu.memory_space<smem>>
    %135 = vector.broadcast %134 : f32 to vector<4x256xf32>
    %136 = arith.mulf %135, %117 : vector<4x256xf32>
    %137 = arith.addf %99, %136 : vector<4x256xf32>
    %c5_58 = arith.constant 5 : index
    %c2_59 = arith.constant 2 : index
    %138 = memref.load %arg5[%c5_58, %c2_59] : memref<8x25xf32, #tpu.memory_space<smem>>
    %139 = vector.broadcast %138 : f32 to vector<4x256xf32>
    %140 = arith.mulf %139, %117 : vector<4x256xf32>
    %141 = arith.addf %103, %140 : vector<4x256xf32>
    %c6_60 = arith.constant 6 : index
    %c2_61 = arith.constant 2 : index
    %142 = memref.load %arg5[%c6_60, %c2_61] : memref<8x25xf32, #tpu.memory_space<smem>>
    %143 = vector.broadcast %142 : f32 to vector<4x256xf32>
    %144 = arith.mulf %143, %117 : vector<4x256xf32>
    %145 = arith.addf %107, %144 : vector<4x256xf32>
    %c7_62 = arith.constant 7 : index
    %c2_63 = arith.constant 2 : index
    %146 = memref.load %arg5[%c7_62, %c2_63] : memref<8x25xf32, #tpu.memory_space<smem>>
    %147 = vector.broadcast %146 : f32 to vector<4x256xf32>
    %148 = arith.mulf %147, %117 : vector<4x256xf32>
    %149 = arith.addf %111, %148 : vector<4x256xf32>
    %150 = vector.extract_strided_slice %9 {offsets = [0, 225], sizes = [4, 31], strides = [1, 1]} : vector<4x256xf32> to vector<4x31xf32>
    %151 = vector.extract_strided_slice %9 {offsets = [0, 0], sizes = [4, 225], strides = [1, 1]} : vector<4x256xf32> to vector<4x225xf32>
    %152 = tpu.concatenate %150, %151 in 1 : vector<4x31xf32>, vector<4x225xf32> -> vector<4x256xf32>
    %c3_64 = arith.constant 3 : index
    %c0_65 = arith.constant 0 : index
    %153 = vector.load %arg4[%c3_64, %c0_65] : memref<25x256xf32, #tpu.memory_space<vmem>>, vector<1x256xf32>
    %154 = vector.broadcast %153 : vector<1x256xf32> to vector<4x256xf32>
    %155 = arith.mulf %152, %154 : vector<4x256xf32>
    %c0_66 = arith.constant 0 : index
    %c3_67 = arith.constant 3 : index
    %156 = memref.load %arg5[%c0_66, %c3_67] : memref<8x25xf32, #tpu.memory_space<smem>>
    %157 = vector.broadcast %156 : f32 to vector<4x256xf32>
    %158 = arith.mulf %157, %155 : vector<4x256xf32>
    %159 = arith.addf %121, %158 : vector<4x256xf32>
    %c1_68 = arith.constant 1 : index
    %c3_69 = arith.constant 3 : index
    %160 = memref.load %arg5[%c1_68, %c3_69] : memref<8x25xf32, #tpu.memory_space<smem>>
    %161 = vector.broadcast %160 : f32 to vector<4x256xf32>
    %162 = arith.mulf %161, %155 : vector<4x256xf32>
    %163 = arith.addf %125, %162 : vector<4x256xf32>
    %c2_70 = arith.constant 2 : index
    %c3_71 = arith.constant 3 : index
    %164 = memref.load %arg5[%c2_70, %c3_71] : memref<8x25xf32, #tpu.memory_space<smem>>
    %165 = vector.broadcast %164 : f32 to vector<4x256xf32>
    %166 = arith.mulf %165, %155 : vector<4x256xf32>
    %167 = arith.addf %129, %166 : vector<4x256xf32>
    %c3_72 = arith.constant 3 : index
    %c3_73 = arith.constant 3 : index
    %168 = memref.load %arg5[%c3_72, %c3_73] : memref<8x25xf32, #tpu.memory_space<smem>>
    %169 = vector.broadcast %168 : f32 to vector<4x256xf32>
    %170 = arith.mulf %169, %155 : vector<4x256xf32>
    %171 = arith.addf %133, %170 : vector<4x256xf32>
    %c4_74 = arith.constant 4 : index
    %c3_75 = arith.constant 3 : index
    %172 = memref.load %arg5[%c4_74, %c3_75] : memref<8x25xf32, #tpu.memory_space<smem>>
    %173 = vector.broadcast %172 : f32 to vector<4x256xf32>
    %174 = arith.mulf %173, %155 : vector<4x256xf32>
    %175 = arith.addf %137, %174 : vector<4x256xf32>
    %c5_76 = arith.constant 5 : index
    %c3_77 = arith.constant 3 : index
    %176 = memref.load %arg5[%c5_76, %c3_77] : memref<8x25xf32, #tpu.memory_space<smem>>
    %177 = vector.broadcast %176 : f32 to vector<4x256xf32>
    %178 = arith.mulf %177, %155 : vector<4x256xf32>
    %179 = arith.addf %141, %178 : vector<4x256xf32>
    %c6_78 = arith.constant 6 : index
    %c3_79 = arith.constant 3 : index
    %180 = memref.load %arg5[%c6_78, %c3_79] : memref<8x25xf32, #tpu.memory_space<smem>>
    %181 = vector.broadcast %180 : f32 to vector<4x256xf32>
    %182 = arith.mulf %181, %155 : vector<4x256xf32>
    %183 = arith.addf %145, %182 : vector<4x256xf32>
    %c7_80 = arith.constant 7 : index
    %c3_81 = arith.constant 3 : index
    %184 = memref.load %arg5[%c7_80, %c3_81] : memref<8x25xf32, #tpu.memory_space<smem>>
    %185 = vector.broadcast %184 : f32 to vector<4x256xf32>
    %186 = arith.mulf %185, %155 : vector<4x256xf32>
    %187 = arith.addf %149, %186 : vector<4x256xf32>
    %188 = vector.extract_strided_slice %9 {offsets = [0, 226], sizes = [4, 30], strides = [1, 1]} : vector<4x256xf32> to vector<4x30xf32>
    %189 = vector.extract_strided_slice %9 {offsets = [0, 0], sizes = [4, 226], strides = [1, 1]} : vector<4x256xf32> to vector<4x226xf32>
    %190 = tpu.concatenate %188, %189 in 1 : vector<4x30xf32>, vector<4x226xf32> -> vector<4x256xf32>
    %c4_82 = arith.constant 4 : index
    %c0_83 = arith.constant 0 : index
    %191 = vector.load %arg4[%c4_82, %c0_83] : memref<25x256xf32, #tpu.memory_space<vmem>>, vector<1x256xf32>
    %192 = vector.broadcast %191 : vector<1x256xf32> to vector<4x256xf32>
    %193 = arith.mulf %190, %192 : vector<4x256xf32>
    %c0_84 = arith.constant 0 : index
    %c4_85 = arith.constant 4 : index
    %194 = memref.load %arg5[%c0_84, %c4_85] : memref<8x25xf32, #tpu.memory_space<smem>>
    %195 = vector.broadcast %194 : f32 to vector<4x256xf32>
    %196 = arith.mulf %195, %193 : vector<4x256xf32>
    %197 = arith.addf %159, %196 : vector<4x256xf32>
    %c1_86 = arith.constant 1 : index
    %c4_87 = arith.constant 4 : index
    %198 = memref.load %arg5[%c1_86, %c4_87] : memref<8x25xf32, #tpu.memory_space<smem>>
    %199 = vector.broadcast %198 : f32 to vector<4x256xf32>
    %200 = arith.mulf %199, %193 : vector<4x256xf32>
    %201 = arith.addf %163, %200 : vector<4x256xf32>
    %c2_88 = arith.constant 2 : index
    %c4_89 = arith.constant 4 : index
    %202 = memref.load %arg5[%c2_88, %c4_89] : memref<8x25xf32, #tpu.memory_space<smem>>
    %203 = vector.broadcast %202 : f32 to vector<4x256xf32>
    %204 = arith.mulf %203, %193 : vector<4x256xf32>
    %205 = arith.addf %167, %204 : vector<4x256xf32>
    %c3_90 = arith.constant 3 : index
    %c4_91 = arith.constant 4 : index
    %206 = memref.load %arg5[%c3_90, %c4_91] : memref<8x25xf32, #tpu.memory_space<smem>>
    %207 = vector.broadcast %206 : f32 to vector<4x256xf32>
    %208 = arith.mulf %207, %193 : vector<4x256xf32>
    %209 = arith.addf %171, %208 : vector<4x256xf32>
    %c4_92 = arith.constant 4 : index
    %c4_93 = arith.constant 4 : index
    %210 = memref.load %arg5[%c4_92, %c4_93] : memref<8x25xf32, #tpu.memory_space<smem>>
    %211 = vector.broadcast %210 : f32 to vector<4x256xf32>
    %212 = arith.mulf %211, %193 : vector<4x256xf32>
    %213 = arith.addf %175, %212 : vector<4x256xf32>
    %c5_94 = arith.constant 5 : index
    %c4_95 = arith.constant 4 : index
    %214 = memref.load %arg5[%c5_94, %c4_95] : memref<8x25xf32, #tpu.memory_space<smem>>
    %215 = vector.broadcast %214 : f32 to vector<4x256xf32>
    %216 = arith.mulf %215, %193 : vector<4x256xf32>
    %217 = arith.addf %179, %216 : vector<4x256xf32>
    %c6_96 = arith.constant 6 : index
    %c4_97 = arith.constant 4 : index
    %218 = memref.load %arg5[%c6_96, %c4_97] : memref<8x25xf32, #tpu.memory_space<smem>>
    %219 = vector.broadcast %218 : f32 to vector<4x256xf32>
    %220 = arith.mulf %219, %193 : vector<4x256xf32>
    %221 = arith.addf %183, %220 : vector<4x256xf32>
    %c7_98 = arith.constant 7 : index
    %c4_99 = arith.constant 4 : index
    %222 = memref.load %arg5[%c7_98, %c4_99] : memref<8x25xf32, #tpu.memory_space<smem>>
    %223 = vector.broadcast %222 : f32 to vector<4x256xf32>
    %224 = arith.mulf %223, %193 : vector<4x256xf32>
    %225 = arith.addf %187, %224 : vector<4x256xf32>
    %226 = vector.extract_strided_slice %9 {offsets = [0, 238], sizes = [4, 18], strides = [1, 1]} : vector<4x256xf32> to vector<4x18xf32>
    %227 = vector.extract_strided_slice %9 {offsets = [0, 0], sizes = [4, 238], strides = [1, 1]} : vector<4x256xf32> to vector<4x238xf32>
    %228 = tpu.concatenate %226, %227 in 1 : vector<4x18xf32>, vector<4x238xf32> -> vector<4x256xf32>
    %c5_100 = arith.constant 5 : index
    %c0_101 = arith.constant 0 : index
    %229 = vector.load %arg4[%c5_100, %c0_101] : memref<25x256xf32, #tpu.memory_space<vmem>>, vector<1x256xf32>
    %230 = vector.broadcast %229 : vector<1x256xf32> to vector<4x256xf32>
    %231 = arith.mulf %228, %230 : vector<4x256xf32>
    %c0_102 = arith.constant 0 : index
    %c5_103 = arith.constant 5 : index
    %232 = memref.load %arg5[%c0_102, %c5_103] : memref<8x25xf32, #tpu.memory_space<smem>>
    %233 = vector.broadcast %232 : f32 to vector<4x256xf32>
    %234 = arith.mulf %233, %231 : vector<4x256xf32>
    %235 = arith.addf %197, %234 : vector<4x256xf32>
    %c1_104 = arith.constant 1 : index
    %c5_105 = arith.constant 5 : index
    %236 = memref.load %arg5[%c1_104, %c5_105] : memref<8x25xf32, #tpu.memory_space<smem>>
    %237 = vector.broadcast %236 : f32 to vector<4x256xf32>
    %238 = arith.mulf %237, %231 : vector<4x256xf32>
    %239 = arith.addf %201, %238 : vector<4x256xf32>
    %c2_106 = arith.constant 2 : index
    %c5_107 = arith.constant 5 : index
    %240 = memref.load %arg5[%c2_106, %c5_107] : memref<8x25xf32, #tpu.memory_space<smem>>
    %241 = vector.broadcast %240 : f32 to vector<4x256xf32>
    %242 = arith.mulf %241, %231 : vector<4x256xf32>
    %243 = arith.addf %205, %242 : vector<4x256xf32>
    %c3_108 = arith.constant 3 : index
    %c5_109 = arith.constant 5 : index
    %244 = memref.load %arg5[%c3_108, %c5_109] : memref<8x25xf32, #tpu.memory_space<smem>>
    %245 = vector.broadcast %244 : f32 to vector<4x256xf32>
    %246 = arith.mulf %245, %231 : vector<4x256xf32>
    %247 = arith.addf %209, %246 : vector<4x256xf32>
    %c4_110 = arith.constant 4 : index
    %c5_111 = arith.constant 5 : index
    %248 = memref.load %arg5[%c4_110, %c5_111] : memref<8x25xf32, #tpu.memory_space<smem>>
    %249 = vector.broadcast %248 : f32 to vector<4x256xf32>
    %250 = arith.mulf %249, %231 : vector<4x256xf32>
    %251 = arith.addf %213, %250 : vector<4x256xf32>
    %c5_112 = arith.constant 5 : index
    %c5_113 = arith.constant 5 : index
    %252 = memref.load %arg5[%c5_112, %c5_113] : memref<8x25xf32, #tpu.memory_space<smem>>
    %253 = vector.broadcast %252 : f32 to vector<4x256xf32>
    %254 = arith.mulf %253, %231 : vector<4x256xf32>
    %255 = arith.addf %217, %254 : vector<4x256xf32>
    %c6_114 = arith.constant 6 : index
    %c5_115 = arith.constant 5 : index
    %256 = memref.load %arg5[%c6_114, %c5_115] : memref<8x25xf32, #tpu.memory_space<smem>>
    %257 = vector.broadcast %256 : f32 to vector<4x256xf32>
    %258 = arith.mulf %257, %231 : vector<4x256xf32>
    %259 = arith.addf %221, %258 : vector<4x256xf32>
    %c7_116 = arith.constant 7 : index
    %c5_117 = arith.constant 5 : index
    %260 = memref.load %arg5[%c7_116, %c5_117] : memref<8x25xf32, #tpu.memory_space<smem>>
    %261 = vector.broadcast %260 : f32 to vector<4x256xf32>
    %262 = arith.mulf %261, %231 : vector<4x256xf32>
    %263 = arith.addf %225, %262 : vector<4x256xf32>
    %264 = vector.extract_strided_slice %9 {offsets = [0, 239], sizes = [4, 17], strides = [1, 1]} : vector<4x256xf32> to vector<4x17xf32>
    %265 = vector.extract_strided_slice %9 {offsets = [0, 0], sizes = [4, 239], strides = [1, 1]} : vector<4x256xf32> to vector<4x239xf32>
    %266 = tpu.concatenate %264, %265 in 1 : vector<4x17xf32>, vector<4x239xf32> -> vector<4x256xf32>
    %c6_118 = arith.constant 6 : index
    %c0_119 = arith.constant 0 : index
    %267 = vector.load %arg4[%c6_118, %c0_119] : memref<25x256xf32, #tpu.memory_space<vmem>>, vector<1x256xf32>
    %268 = vector.broadcast %267 : vector<1x256xf32> to vector<4x256xf32>
    %269 = arith.mulf %266, %268 : vector<4x256xf32>
    %c0_120 = arith.constant 0 : index
    %c6_121 = arith.constant 6 : index
    %270 = memref.load %arg5[%c0_120, %c6_121] : memref<8x25xf32, #tpu.memory_space<smem>>
    %271 = vector.broadcast %270 : f32 to vector<4x256xf32>
    %272 = arith.mulf %271, %269 : vector<4x256xf32>
    %273 = arith.addf %235, %272 : vector<4x256xf32>
    %c1_122 = arith.constant 1 : index
    %c6_123 = arith.constant 6 : index
    %274 = memref.load %arg5[%c1_122, %c6_123] : memref<8x25xf32, #tpu.memory_space<smem>>
    %275 = vector.broadcast %274 : f32 to vector<4x256xf32>
    %276 = arith.mulf %275, %269 : vector<4x256xf32>
    %277 = arith.addf %239, %276 : vector<4x256xf32>
    %c2_124 = arith.constant 2 : index
    %c6_125 = arith.constant 6 : index
    %278 = memref.load %arg5[%c2_124, %c6_125] : memref<8x25xf32, #tpu.memory_space<smem>>
    %279 = vector.broadcast %278 : f32 to vector<4x256xf32>
    %280 = arith.mulf %279, %269 : vector<4x256xf32>
    %281 = arith.addf %243, %280 : vector<4x256xf32>
    %c3_126 = arith.constant 3 : index
    %c6_127 = arith.constant 6 : index
    %282 = memref.load %arg5[%c3_126, %c6_127] : memref<8x25xf32, #tpu.memory_space<smem>>
    %283 = vector.broadcast %282 : f32 to vector<4x256xf32>
    %284 = arith.mulf %283, %269 : vector<4x256xf32>
    %285 = arith.addf %247, %284 : vector<4x256xf32>
    %c4_128 = arith.constant 4 : index
    %c6_129 = arith.constant 6 : index
    %286 = memref.load %arg5[%c4_128, %c6_129] : memref<8x25xf32, #tpu.memory_space<smem>>
    %287 = vector.broadcast %286 : f32 to vector<4x256xf32>
    %288 = arith.mulf %287, %269 : vector<4x256xf32>
    %289 = arith.addf %251, %288 : vector<4x256xf32>
    %c5_130 = arith.constant 5 : index
    %c6_131 = arith.constant 6 : index
    %290 = memref.load %arg5[%c5_130, %c6_131] : memref<8x25xf32, #tpu.memory_space<smem>>
    %291 = vector.broadcast %290 : f32 to vector<4x256xf32>
    %292 = arith.mulf %291, %269 : vector<4x256xf32>
    %293 = arith.addf %255, %292 : vector<4x256xf32>
    %c6_132 = arith.constant 6 : index
    %c6_133 = arith.constant 6 : index
    %294 = memref.load %arg5[%c6_132, %c6_133] : memref<8x25xf32, #tpu.memory_space<smem>>
    %295 = vector.broadcast %294 : f32 to vector<4x256xf32>
    %296 = arith.mulf %295, %269 : vector<4x256xf32>
    %297 = arith.addf %259, %296 : vector<4x256xf32>
    %c7_134 = arith.constant 7 : index
    %c6_135 = arith.constant 6 : index
    %298 = memref.load %arg5[%c7_134, %c6_135] : memref<8x25xf32, #tpu.memory_space<smem>>
    %299 = vector.broadcast %298 : f32 to vector<4x256xf32>
    %300 = arith.mulf %299, %269 : vector<4x256xf32>
    %301 = arith.addf %263, %300 : vector<4x256xf32>
    %302 = vector.extract_strided_slice %9 {offsets = [0, 240], sizes = [4, 16], strides = [1, 1]} : vector<4x256xf32> to vector<4x16xf32>
    %303 = vector.extract_strided_slice %9 {offsets = [0, 0], sizes = [4, 240], strides = [1, 1]} : vector<4x256xf32> to vector<4x240xf32>
    %304 = tpu.concatenate %302, %303 in 1 : vector<4x16xf32>, vector<4x240xf32> -> vector<4x256xf32>
    %c7_136 = arith.constant 7 : index
    %c0_137 = arith.constant 0 : index
    %305 = vector.load %arg4[%c7_136, %c0_137] : memref<25x256xf32, #tpu.memory_space<vmem>>, vector<1x256xf32>
    %306 = vector.broadcast %305 : vector<1x256xf32> to vector<4x256xf32>
    %307 = arith.mulf %304, %306 : vector<4x256xf32>
    %c0_138 = arith.constant 0 : index
    %c7_139 = arith.constant 7 : index
    %308 = memref.load %arg5[%c0_138, %c7_139] : memref<8x25xf32, #tpu.memory_space<smem>>
    %309 = vector.broadcast %308 : f32 to vector<4x256xf32>
    %310 = arith.mulf %309, %307 : vector<4x256xf32>
    %311 = arith.addf %273, %310 : vector<4x256xf32>
    %c1_140 = arith.constant 1 : index
    %c7_141 = arith.constant 7 : index
    %312 = memref.load %arg5[%c1_140, %c7_141] : memref<8x25xf32, #tpu.memory_space<smem>>
    %313 = vector.broadcast %312 : f32 to vector<4x256xf32>
    %314 = arith.mulf %313, %307 : vector<4x256xf32>
    %315 = arith.addf %277, %314 : vector<4x256xf32>
    %c2_142 = arith.constant 2 : index
    %c7_143 = arith.constant 7 : index
    %316 = memref.load %arg5[%c2_142, %c7_143] : memref<8x25xf32, #tpu.memory_space<smem>>
    %317 = vector.broadcast %316 : f32 to vector<4x256xf32>
    %318 = arith.mulf %317, %307 : vector<4x256xf32>
    %319 = arith.addf %281, %318 : vector<4x256xf32>
    %c3_144 = arith.constant 3 : index
    %c7_145 = arith.constant 7 : index
    %320 = memref.load %arg5[%c3_144, %c7_145] : memref<8x25xf32, #tpu.memory_space<smem>>
    %321 = vector.broadcast %320 : f32 to vector<4x256xf32>
    %322 = arith.mulf %321, %307 : vector<4x256xf32>
    %323 = arith.addf %285, %322 : vector<4x256xf32>
    %c4_146 = arith.constant 4 : index
    %c7_147 = arith.constant 7 : index
    %324 = memref.load %arg5[%c4_146, %c7_147] : memref<8x25xf32, #tpu.memory_space<smem>>
    %325 = vector.broadcast %324 : f32 to vector<4x256xf32>
    %326 = arith.mulf %325, %307 : vector<4x256xf32>
    %327 = arith.addf %289, %326 : vector<4x256xf32>
    %c5_148 = arith.constant 5 : index
    %c7_149 = arith.constant 7 : index
    %328 = memref.load %arg5[%c5_148, %c7_149] : memref<8x25xf32, #tpu.memory_space<smem>>
    %329 = vector.broadcast %328 : f32 to vector<4x256xf32>
    %330 = arith.mulf %329, %307 : vector<4x256xf32>
    %331 = arith.addf %293, %330 : vector<4x256xf32>
    %c6_150 = arith.constant 6 : index
    %c7_151 = arith.constant 7 : index
    %332 = memref.load %arg5[%c6_150, %c7_151] : memref<8x25xf32, #tpu.memory_space<smem>>
    %333 = vector.broadcast %332 : f32 to vector<4x256xf32>
    %334 = arith.mulf %333, %307 : vector<4x256xf32>
    %335 = arith.addf %297, %334 : vector<4x256xf32>
    %c7_152 = arith.constant 7 : index
    %c7_153 = arith.constant 7 : index
    %336 = memref.load %arg5[%c7_152, %c7_153] : memref<8x25xf32, #tpu.memory_space<smem>>
    %337 = vector.broadcast %336 : f32 to vector<4x256xf32>
    %338 = arith.mulf %337, %307 : vector<4x256xf32>
    %339 = arith.addf %301, %338 : vector<4x256xf32>
    %340 = vector.extract_strided_slice %9 {offsets = [0, 241], sizes = [4, 15], strides = [1, 1]} : vector<4x256xf32> to vector<4x15xf32>
    %341 = vector.extract_strided_slice %9 {offsets = [0, 0], sizes = [4, 241], strides = [1, 1]} : vector<4x256xf32> to vector<4x241xf32>
    %342 = tpu.concatenate %340, %341 in 1 : vector<4x15xf32>, vector<4x241xf32> -> vector<4x256xf32>
    %c8 = arith.constant 8 : index
    %c0_154 = arith.constant 0 : index
    %343 = vector.load %arg4[%c8, %c0_154] : memref<25x256xf32, #tpu.memory_space<vmem>>, vector<1x256xf32>
    %344 = vector.broadcast %343 : vector<1x256xf32> to vector<4x256xf32>
    %345 = arith.mulf %342, %344 : vector<4x256xf32>
    %c0_155 = arith.constant 0 : index
    %c8_156 = arith.constant 8 : index
    %346 = memref.load %arg5[%c0_155, %c8_156] : memref<8x25xf32, #tpu.memory_space<smem>>
    %347 = vector.broadcast %346 : f32 to vector<4x256xf32>
    %348 = arith.mulf %347, %345 : vector<4x256xf32>
    %349 = arith.addf %311, %348 : vector<4x256xf32>
    %c1_157 = arith.constant 1 : index
    %c8_158 = arith.constant 8 : index
    %350 = memref.load %arg5[%c1_157, %c8_158] : memref<8x25xf32, #tpu.memory_space<smem>>
    %351 = vector.broadcast %350 : f32 to vector<4x256xf32>
    %352 = arith.mulf %351, %345 : vector<4x256xf32>
    %353 = arith.addf %315, %352 : vector<4x256xf32>
    %c2_159 = arith.constant 2 : index
    %c8_160 = arith.constant 8 : index
    %354 = memref.load %arg5[%c2_159, %c8_160] : memref<8x25xf32, #tpu.memory_space<smem>>
    %355 = vector.broadcast %354 : f32 to vector<4x256xf32>
    %356 = arith.mulf %355, %345 : vector<4x256xf32>
    %357 = arith.addf %319, %356 : vector<4x256xf32>
    %c3_161 = arith.constant 3 : index
    %c8_162 = arith.constant 8 : index
    %358 = memref.load %arg5[%c3_161, %c8_162] : memref<8x25xf32, #tpu.memory_space<smem>>
    %359 = vector.broadcast %358 : f32 to vector<4x256xf32>
    %360 = arith.mulf %359, %345 : vector<4x256xf32>
    %361 = arith.addf %323, %360 : vector<4x256xf32>
    %c4_163 = arith.constant 4 : index
    %c8_164 = arith.constant 8 : index
    %362 = memref.load %arg5[%c4_163, %c8_164] : memref<8x25xf32, #tpu.memory_space<smem>>
    %363 = vector.broadcast %362 : f32 to vector<4x256xf32>
    %364 = arith.mulf %363, %345 : vector<4x256xf32>
    %365 = arith.addf %327, %364 : vector<4x256xf32>
    %c5_165 = arith.constant 5 : index
    %c8_166 = arith.constant 8 : index
    %366 = memref.load %arg5[%c5_165, %c8_166] : memref<8x25xf32, #tpu.memory_space<smem>>
    %367 = vector.broadcast %366 : f32 to vector<4x256xf32>
    %368 = arith.mulf %367, %345 : vector<4x256xf32>
    %369 = arith.addf %331, %368 : vector<4x256xf32>
    %c6_167 = arith.constant 6 : index
    %c8_168 = arith.constant 8 : index
    %370 = memref.load %arg5[%c6_167, %c8_168] : memref<8x25xf32, #tpu.memory_space<smem>>
    %371 = vector.broadcast %370 : f32 to vector<4x256xf32>
    %372 = arith.mulf %371, %345 : vector<4x256xf32>
    %373 = arith.addf %335, %372 : vector<4x256xf32>
    %c7_169 = arith.constant 7 : index
    %c8_170 = arith.constant 8 : index
    %374 = memref.load %arg5[%c7_169, %c8_170] : memref<8x25xf32, #tpu.memory_space<smem>>
    %375 = vector.broadcast %374 : f32 to vector<4x256xf32>
    %376 = arith.mulf %375, %345 : vector<4x256xf32>
    %377 = arith.addf %339, %376 : vector<4x256xf32>
    %378 = vector.extract_strided_slice %9 {offsets = [0, 242], sizes = [4, 14], strides = [1, 1]} : vector<4x256xf32> to vector<4x14xf32>
    %379 = vector.extract_strided_slice %9 {offsets = [0, 0], sizes = [4, 242], strides = [1, 1]} : vector<4x256xf32> to vector<4x242xf32>
    %380 = tpu.concatenate %378, %379 in 1 : vector<4x14xf32>, vector<4x242xf32> -> vector<4x256xf32>
    %c9 = arith.constant 9 : index
    %c0_171 = arith.constant 0 : index
    %381 = vector.load %arg4[%c9, %c0_171] : memref<25x256xf32, #tpu.memory_space<vmem>>, vector<1x256xf32>
    %382 = vector.broadcast %381 : vector<1x256xf32> to vector<4x256xf32>
    %383 = arith.mulf %380, %382 : vector<4x256xf32>
    %c0_172 = arith.constant 0 : index
    %c9_173 = arith.constant 9 : index
    %384 = memref.load %arg5[%c0_172, %c9_173] : memref<8x25xf32, #tpu.memory_space<smem>>
    %385 = vector.broadcast %384 : f32 to vector<4x256xf32>
    %386 = arith.mulf %385, %383 : vector<4x256xf32>
    %387 = arith.addf %349, %386 : vector<4x256xf32>
    %c1_174 = arith.constant 1 : index
    %c9_175 = arith.constant 9 : index
    %388 = memref.load %arg5[%c1_174, %c9_175] : memref<8x25xf32, #tpu.memory_space<smem>>
    %389 = vector.broadcast %388 : f32 to vector<4x256xf32>
    %390 = arith.mulf %389, %383 : vector<4x256xf32>
    %391 = arith.addf %353, %390 : vector<4x256xf32>
    %c2_176 = arith.constant 2 : index
    %c9_177 = arith.constant 9 : index
    %392 = memref.load %arg5[%c2_176, %c9_177] : memref<8x25xf32, #tpu.memory_space<smem>>
    %393 = vector.broadcast %392 : f32 to vector<4x256xf32>
    %394 = arith.mulf %393, %383 : vector<4x256xf32>
    %395 = arith.addf %357, %394 : vector<4x256xf32>
    %c3_178 = arith.constant 3 : index
    %c9_179 = arith.constant 9 : index
    %396 = memref.load %arg5[%c3_178, %c9_179] : memref<8x25xf32, #tpu.memory_space<smem>>
    %397 = vector.broadcast %396 : f32 to vector<4x256xf32>
    %398 = arith.mulf %397, %383 : vector<4x256xf32>
    %399 = arith.addf %361, %398 : vector<4x256xf32>
    %c4_180 = arith.constant 4 : index
    %c9_181 = arith.constant 9 : index
    %400 = memref.load %arg5[%c4_180, %c9_181] : memref<8x25xf32, #tpu.memory_space<smem>>
    %401 = vector.broadcast %400 : f32 to vector<4x256xf32>
    %402 = arith.mulf %401, %383 : vector<4x256xf32>
    %403 = arith.addf %365, %402 : vector<4x256xf32>
    %c5_182 = arith.constant 5 : index
    %c9_183 = arith.constant 9 : index
    %404 = memref.load %arg5[%c5_182, %c9_183] : memref<8x25xf32, #tpu.memory_space<smem>>
    %405 = vector.broadcast %404 : f32 to vector<4x256xf32>
    %406 = arith.mulf %405, %383 : vector<4x256xf32>
    %407 = arith.addf %369, %406 : vector<4x256xf32>
    %c6_184 = arith.constant 6 : index
    %c9_185 = arith.constant 9 : index
    %408 = memref.load %arg5[%c6_184, %c9_185] : memref<8x25xf32, #tpu.memory_space<smem>>
    %409 = vector.broadcast %408 : f32 to vector<4x256xf32>
    %410 = arith.mulf %409, %383 : vector<4x256xf32>
    %411 = arith.addf %373, %410 : vector<4x256xf32>
    %c7_186 = arith.constant 7 : index
    %c9_187 = arith.constant 9 : index
    %412 = memref.load %arg5[%c7_186, %c9_187] : memref<8x25xf32, #tpu.memory_space<smem>>
    %413 = vector.broadcast %412 : f32 to vector<4x256xf32>
    %414 = arith.mulf %413, %383 : vector<4x256xf32>
    %415 = arith.addf %377, %414 : vector<4x256xf32>
    %416 = vector.extract_strided_slice %9 {offsets = [0, 254], sizes = [4, 2], strides = [1, 1]} : vector<4x256xf32> to vector<4x2xf32>
    %417 = vector.extract_strided_slice %9 {offsets = [0, 0], sizes = [4, 254], strides = [1, 1]} : vector<4x256xf32> to vector<4x254xf32>
    %418 = tpu.concatenate %416, %417 in 1 : vector<4x2xf32>, vector<4x254xf32> -> vector<4x256xf32>
    %c10 = arith.constant 10 : index
    %c0_188 = arith.constant 0 : index
    %419 = vector.load %arg4[%c10, %c0_188] : memref<25x256xf32, #tpu.memory_space<vmem>>, vector<1x256xf32>
    %420 = vector.broadcast %419 : vector<1x256xf32> to vector<4x256xf32>
    %421 = arith.mulf %418, %420 : vector<4x256xf32>
    %c0_189 = arith.constant 0 : index
    %c10_190 = arith.constant 10 : index
    %422 = memref.load %arg5[%c0_189, %c10_190] : memref<8x25xf32, #tpu.memory_space<smem>>
    %423 = vector.broadcast %422 : f32 to vector<4x256xf32>
    %424 = arith.mulf %423, %421 : vector<4x256xf32>
    %425 = arith.addf %387, %424 : vector<4x256xf32>
    %c1_191 = arith.constant 1 : index
    %c10_192 = arith.constant 10 : index
    %426 = memref.load %arg5[%c1_191, %c10_192] : memref<8x25xf32, #tpu.memory_space<smem>>
    %427 = vector.broadcast %426 : f32 to vector<4x256xf32>
    %428 = arith.mulf %427, %421 : vector<4x256xf32>
    %429 = arith.addf %391, %428 : vector<4x256xf32>
    %c2_193 = arith.constant 2 : index
    %c10_194 = arith.constant 10 : index
    %430 = memref.load %arg5[%c2_193, %c10_194] : memref<8x25xf32, #tpu.memory_space<smem>>
    %431 = vector.broadcast %430 : f32 to vector<4x256xf32>
    %432 = arith.mulf %431, %421 : vector<4x256xf32>
    %433 = arith.addf %395, %432 : vector<4x256xf32>
    %c3_195 = arith.constant 3 : index
    %c10_196 = arith.constant 10 : index
    %434 = memref.load %arg5[%c3_195, %c10_196] : memref<8x25xf32, #tpu.memory_space<smem>>
    %435 = vector.broadcast %434 : f32 to vector<4x256xf32>
    %436 = arith.mulf %435, %421 : vector<4x256xf32>
    %437 = arith.addf %399, %436 : vector<4x256xf32>
    %c4_197 = arith.constant 4 : index
    %c10_198 = arith.constant 10 : index
    %438 = memref.load %arg5[%c4_197, %c10_198] : memref<8x25xf32, #tpu.memory_space<smem>>
    %439 = vector.broadcast %438 : f32 to vector<4x256xf32>
    %440 = arith.mulf %439, %421 : vector<4x256xf32>
    %441 = arith.addf %403, %440 : vector<4x256xf32>
    %c5_199 = arith.constant 5 : index
    %c10_200 = arith.constant 10 : index
    %442 = memref.load %arg5[%c5_199, %c10_200] : memref<8x25xf32, #tpu.memory_space<smem>>
    %443 = vector.broadcast %442 : f32 to vector<4x256xf32>
    %444 = arith.mulf %443, %421 : vector<4x256xf32>
    %445 = arith.addf %407, %444 : vector<4x256xf32>
    %c6_201 = arith.constant 6 : index
    %c10_202 = arith.constant 10 : index
    %446 = memref.load %arg5[%c6_201, %c10_202] : memref<8x25xf32, #tpu.memory_space<smem>>
    %447 = vector.broadcast %446 : f32 to vector<4x256xf32>
    %448 = arith.mulf %447, %421 : vector<4x256xf32>
    %449 = arith.addf %411, %448 : vector<4x256xf32>
    %c7_203 = arith.constant 7 : index
    %c10_204 = arith.constant 10 : index
    %450 = memref.load %arg5[%c7_203, %c10_204] : memref<8x25xf32, #tpu.memory_space<smem>>
    %451 = vector.broadcast %450 : f32 to vector<4x256xf32>
    %452 = arith.mulf %451, %421 : vector<4x256xf32>
    %453 = arith.addf %415, %452 : vector<4x256xf32>
    %454 = vector.extract_strided_slice %9 {offsets = [0, 255], sizes = [4, 1], strides = [1, 1]} : vector<4x256xf32> to vector<4x1xf32>
    %455 = vector.extract_strided_slice %9 {offsets = [0, 0], sizes = [4, 255], strides = [1, 1]} : vector<4x256xf32> to vector<4x255xf32>
    %456 = tpu.concatenate %454, %455 in 1 : vector<4x1xf32>, vector<4x255xf32> -> vector<4x256xf32>
    %c11 = arith.constant 11 : index
    %c0_205 = arith.constant 0 : index
    %457 = vector.load %arg4[%c11, %c0_205] : memref<25x256xf32, #tpu.memory_space<vmem>>, vector<1x256xf32>
    %458 = vector.broadcast %457 : vector<1x256xf32> to vector<4x256xf32>
    %459 = arith.mulf %456, %458 : vector<4x256xf32>
    %c0_206 = arith.constant 0 : index
    %c11_207 = arith.constant 11 : index
    %460 = memref.load %arg5[%c0_206, %c11_207] : memref<8x25xf32, #tpu.memory_space<smem>>
    %461 = vector.broadcast %460 : f32 to vector<4x256xf32>
    %462 = arith.mulf %461, %459 : vector<4x256xf32>
    %463 = arith.addf %425, %462 : vector<4x256xf32>
    %c1_208 = arith.constant 1 : index
    %c11_209 = arith.constant 11 : index
    %464 = memref.load %arg5[%c1_208, %c11_209] : memref<8x25xf32, #tpu.memory_space<smem>>
    %465 = vector.broadcast %464 : f32 to vector<4x256xf32>
    %466 = arith.mulf %465, %459 : vector<4x256xf32>
    %467 = arith.addf %429, %466 : vector<4x256xf32>
    %c2_210 = arith.constant 2 : index
    %c11_211 = arith.constant 11 : index
    %468 = memref.load %arg5[%c2_210, %c11_211] : memref<8x25xf32, #tpu.memory_space<smem>>
    %469 = vector.broadcast %468 : f32 to vector<4x256xf32>
    %470 = arith.mulf %469, %459 : vector<4x256xf32>
    %471 = arith.addf %433, %470 : vector<4x256xf32>
    %c3_212 = arith.constant 3 : index
    %c11_213 = arith.constant 11 : index
    %472 = memref.load %arg5[%c3_212, %c11_213] : memref<8x25xf32, #tpu.memory_space<smem>>
    %473 = vector.broadcast %472 : f32 to vector<4x256xf32>
    %474 = arith.mulf %473, %459 : vector<4x256xf32>
    %475 = arith.addf %437, %474 : vector<4x256xf32>
    %c4_214 = arith.constant 4 : index
    %c11_215 = arith.constant 11 : index
    %476 = memref.load %arg5[%c4_214, %c11_215] : memref<8x25xf32, #tpu.memory_space<smem>>
    %477 = vector.broadcast %476 : f32 to vector<4x256xf32>
    %478 = arith.mulf %477, %459 : vector<4x256xf32>
    %479 = arith.addf %441, %478 : vector<4x256xf32>
    %c5_216 = arith.constant 5 : index
    %c11_217 = arith.constant 11 : index
    %480 = memref.load %arg5[%c5_216, %c11_217] : memref<8x25xf32, #tpu.memory_space<smem>>
    %481 = vector.broadcast %480 : f32 to vector<4x256xf32>
    %482 = arith.mulf %481, %459 : vector<4x256xf32>
    %483 = arith.addf %445, %482 : vector<4x256xf32>
    %c6_218 = arith.constant 6 : index
    %c11_219 = arith.constant 11 : index
    %484 = memref.load %arg5[%c6_218, %c11_219] : memref<8x25xf32, #tpu.memory_space<smem>>
    %485 = vector.broadcast %484 : f32 to vector<4x256xf32>
    %486 = arith.mulf %485, %459 : vector<4x256xf32>
    %487 = arith.addf %449, %486 : vector<4x256xf32>
    %c7_220 = arith.constant 7 : index
    %c11_221 = arith.constant 11 : index
    %488 = memref.load %arg5[%c7_220, %c11_221] : memref<8x25xf32, #tpu.memory_space<smem>>
    %489 = vector.broadcast %488 : f32 to vector<4x256xf32>
    %490 = arith.mulf %489, %459 : vector<4x256xf32>
    %491 = arith.addf %453, %490 : vector<4x256xf32>
    %c12 = arith.constant 12 : index
    %c0_222 = arith.constant 0 : index
    %492 = vector.load %arg4[%c12, %c0_222] : memref<25x256xf32, #tpu.memory_space<vmem>>, vector<1x256xf32>
    %493 = vector.broadcast %492 : vector<1x256xf32> to vector<4x256xf32>
    %494 = arith.mulf %9, %493 : vector<4x256xf32>
    %c0_223 = arith.constant 0 : index
    %c12_224 = arith.constant 12 : index
    %495 = memref.load %arg5[%c0_223, %c12_224] : memref<8x25xf32, #tpu.memory_space<smem>>
    %496 = vector.broadcast %495 : f32 to vector<4x256xf32>
    %497 = arith.mulf %496, %494 : vector<4x256xf32>
    %498 = arith.addf %463, %497 : vector<4x256xf32>
    %c1_225 = arith.constant 1 : index
    %c12_226 = arith.constant 12 : index
    %499 = memref.load %arg5[%c1_225, %c12_226] : memref<8x25xf32, #tpu.memory_space<smem>>
    %500 = vector.broadcast %499 : f32 to vector<4x256xf32>
    %501 = arith.mulf %500, %494 : vector<4x256xf32>
    %502 = arith.addf %467, %501 : vector<4x256xf32>
    %c2_227 = arith.constant 2 : index
    %c12_228 = arith.constant 12 : index
    %503 = memref.load %arg5[%c2_227, %c12_228] : memref<8x25xf32, #tpu.memory_space<smem>>
    %504 = vector.broadcast %503 : f32 to vector<4x256xf32>
    %505 = arith.mulf %504, %494 : vector<4x256xf32>
    %506 = arith.addf %471, %505 : vector<4x256xf32>
    %c3_229 = arith.constant 3 : index
    %c12_230 = arith.constant 12 : index
    %507 = memref.load %arg5[%c3_229, %c12_230] : memref<8x25xf32, #tpu.memory_space<smem>>
    %508 = vector.broadcast %507 : f32 to vector<4x256xf32>
    %509 = arith.mulf %508, %494 : vector<4x256xf32>
    %510 = arith.addf %475, %509 : vector<4x256xf32>
    %c4_231 = arith.constant 4 : index
    %c12_232 = arith.constant 12 : index
    %511 = memref.load %arg5[%c4_231, %c12_232] : memref<8x25xf32, #tpu.memory_space<smem>>
    %512 = vector.broadcast %511 : f32 to vector<4x256xf32>
    %513 = arith.mulf %512, %494 : vector<4x256xf32>
    %514 = arith.addf %479, %513 : vector<4x256xf32>
    %c5_233 = arith.constant 5 : index
    %c12_234 = arith.constant 12 : index
    %515 = memref.load %arg5[%c5_233, %c12_234] : memref<8x25xf32, #tpu.memory_space<smem>>
    %516 = vector.broadcast %515 : f32 to vector<4x256xf32>
    %517 = arith.mulf %516, %494 : vector<4x256xf32>
    %518 = arith.addf %483, %517 : vector<4x256xf32>
    %c6_235 = arith.constant 6 : index
    %c12_236 = arith.constant 12 : index
    %519 = memref.load %arg5[%c6_235, %c12_236] : memref<8x25xf32, #tpu.memory_space<smem>>
    %520 = vector.broadcast %519 : f32 to vector<4x256xf32>
    %521 = arith.mulf %520, %494 : vector<4x256xf32>
    %522 = arith.addf %487, %521 : vector<4x256xf32>
    %c7_237 = arith.constant 7 : index
    %c12_238 = arith.constant 12 : index
    %523 = memref.load %arg5[%c7_237, %c12_238] : memref<8x25xf32, #tpu.memory_space<smem>>
    %524 = vector.broadcast %523 : f32 to vector<4x256xf32>
    %525 = arith.mulf %524, %494 : vector<4x256xf32>
    %526 = arith.addf %491, %525 : vector<4x256xf32>
    %527 = vector.extract_strided_slice %9 {offsets = [0, 1], sizes = [4, 255], strides = [1, 1]} : vector<4x256xf32> to vector<4x255xf32>
    %528 = vector.extract_strided_slice %9 {offsets = [0, 0], sizes = [4, 1], strides = [1, 1]} : vector<4x256xf32> to vector<4x1xf32>
    %529 = tpu.concatenate %527, %528 in 1 : vector<4x255xf32>, vector<4x1xf32> -> vector<4x256xf32>
    %c13 = arith.constant 13 : index
    %c0_239 = arith.constant 0 : index
    %530 = vector.load %arg4[%c13, %c0_239] : memref<25x256xf32, #tpu.memory_space<vmem>>, vector<1x256xf32>
    %531 = vector.broadcast %530 : vector<1x256xf32> to vector<4x256xf32>
    %532 = arith.mulf %529, %531 : vector<4x256xf32>
    %c0_240 = arith.constant 0 : index
    %c13_241 = arith.constant 13 : index
    %533 = memref.load %arg5[%c0_240, %c13_241] : memref<8x25xf32, #tpu.memory_space<smem>>
    %534 = vector.broadcast %533 : f32 to vector<4x256xf32>
    %535 = arith.mulf %534, %532 : vector<4x256xf32>
    %536 = arith.addf %498, %535 : vector<4x256xf32>
    %c1_242 = arith.constant 1 : index
    %c13_243 = arith.constant 13 : index
    %537 = memref.load %arg5[%c1_242, %c13_243] : memref<8x25xf32, #tpu.memory_space<smem>>
    %538 = vector.broadcast %537 : f32 to vector<4x256xf32>
    %539 = arith.mulf %538, %532 : vector<4x256xf32>
    %540 = arith.addf %502, %539 : vector<4x256xf32>
    %c2_244 = arith.constant 2 : index
    %c13_245 = arith.constant 13 : index
    %541 = memref.load %arg5[%c2_244, %c13_245] : memref<8x25xf32, #tpu.memory_space<smem>>
    %542 = vector.broadcast %541 : f32 to vector<4x256xf32>
    %543 = arith.mulf %542, %532 : vector<4x256xf32>
    %544 = arith.addf %506, %543 : vector<4x256xf32>
    %c3_246 = arith.constant 3 : index
    %c13_247 = arith.constant 13 : index
    %545 = memref.load %arg5[%c3_246, %c13_247] : memref<8x25xf32, #tpu.memory_space<smem>>
    %546 = vector.broadcast %545 : f32 to vector<4x256xf32>
    %547 = arith.mulf %546, %532 : vector<4x256xf32>
    %548 = arith.addf %510, %547 : vector<4x256xf32>
    %c4_248 = arith.constant 4 : index
    %c13_249 = arith.constant 13 : index
    %549 = memref.load %arg5[%c4_248, %c13_249] : memref<8x25xf32, #tpu.memory_space<smem>>
    %550 = vector.broadcast %549 : f32 to vector<4x256xf32>
    %551 = arith.mulf %550, %532 : vector<4x256xf32>
    %552 = arith.addf %514, %551 : vector<4x256xf32>
    %c5_250 = arith.constant 5 : index
    %c13_251 = arith.constant 13 : index
    %553 = memref.load %arg5[%c5_250, %c13_251] : memref<8x25xf32, #tpu.memory_space<smem>>
    %554 = vector.broadcast %553 : f32 to vector<4x256xf32>
    %555 = arith.mulf %554, %532 : vector<4x256xf32>
    %556 = arith.addf %518, %555 : vector<4x256xf32>
    %c6_252 = arith.constant 6 : index
    %c13_253 = arith.constant 13 : index
    %557 = memref.load %arg5[%c6_252, %c13_253] : memref<8x25xf32, #tpu.memory_space<smem>>
    %558 = vector.broadcast %557 : f32 to vector<4x256xf32>
    %559 = arith.mulf %558, %532 : vector<4x256xf32>
    %560 = arith.addf %522, %559 : vector<4x256xf32>
    %c7_254 = arith.constant 7 : index
    %c13_255 = arith.constant 13 : index
    %561 = memref.load %arg5[%c7_254, %c13_255] : memref<8x25xf32, #tpu.memory_space<smem>>
    %562 = vector.broadcast %561 : f32 to vector<4x256xf32>
    %563 = arith.mulf %562, %532 : vector<4x256xf32>
    %564 = arith.addf %526, %563 : vector<4x256xf32>
    %565 = vector.extract_strided_slice %9 {offsets = [0, 2], sizes = [4, 254], strides = [1, 1]} : vector<4x256xf32> to vector<4x254xf32>
    %566 = vector.extract_strided_slice %9 {offsets = [0, 0], sizes = [4, 2], strides = [1, 1]} : vector<4x256xf32> to vector<4x2xf32>
    %567 = tpu.concatenate %565, %566 in 1 : vector<4x254xf32>, vector<4x2xf32> -> vector<4x256xf32>
    %c14 = arith.constant 14 : index
    %c0_256 = arith.constant 0 : index
    %568 = vector.load %arg4[%c14, %c0_256] : memref<25x256xf32, #tpu.memory_space<vmem>>, vector<1x256xf32>
    %569 = vector.broadcast %568 : vector<1x256xf32> to vector<4x256xf32>
    %570 = arith.mulf %567, %569 : vector<4x256xf32>
    %c0_257 = arith.constant 0 : index
    %c14_258 = arith.constant 14 : index
    %571 = memref.load %arg5[%c0_257, %c14_258] : memref<8x25xf32, #tpu.memory_space<smem>>
    %572 = vector.broadcast %571 : f32 to vector<4x256xf32>
    %573 = arith.mulf %572, %570 : vector<4x256xf32>
    %574 = arith.addf %536, %573 : vector<4x256xf32>
    %c1_259 = arith.constant 1 : index
    %c14_260 = arith.constant 14 : index
    %575 = memref.load %arg5[%c1_259, %c14_260] : memref<8x25xf32, #tpu.memory_space<smem>>
    %576 = vector.broadcast %575 : f32 to vector<4x256xf32>
    %577 = arith.mulf %576, %570 : vector<4x256xf32>
    %578 = arith.addf %540, %577 : vector<4x256xf32>
    %c2_261 = arith.constant 2 : index
    %c14_262 = arith.constant 14 : index
    %579 = memref.load %arg5[%c2_261, %c14_262] : memref<8x25xf32, #tpu.memory_space<smem>>
    %580 = vector.broadcast %579 : f32 to vector<4x256xf32>
    %581 = arith.mulf %580, %570 : vector<4x256xf32>
    %582 = arith.addf %544, %581 : vector<4x256xf32>
    %c3_263 = arith.constant 3 : index
    %c14_264 = arith.constant 14 : index
    %583 = memref.load %arg5[%c3_263, %c14_264] : memref<8x25xf32, #tpu.memory_space<smem>>
    %584 = vector.broadcast %583 : f32 to vector<4x256xf32>
    %585 = arith.mulf %584, %570 : vector<4x256xf32>
    %586 = arith.addf %548, %585 : vector<4x256xf32>
    %c4_265 = arith.constant 4 : index
    %c14_266 = arith.constant 14 : index
    %587 = memref.load %arg5[%c4_265, %c14_266] : memref<8x25xf32, #tpu.memory_space<smem>>
    %588 = vector.broadcast %587 : f32 to vector<4x256xf32>
    %589 = arith.mulf %588, %570 : vector<4x256xf32>
    %590 = arith.addf %552, %589 : vector<4x256xf32>
    %c5_267 = arith.constant 5 : index
    %c14_268 = arith.constant 14 : index
    %591 = memref.load %arg5[%c5_267, %c14_268] : memref<8x25xf32, #tpu.memory_space<smem>>
    %592 = vector.broadcast %591 : f32 to vector<4x256xf32>
    %593 = arith.mulf %592, %570 : vector<4x256xf32>
    %594 = arith.addf %556, %593 : vector<4x256xf32>
    %c6_269 = arith.constant 6 : index
    %c14_270 = arith.constant 14 : index
    %595 = memref.load %arg5[%c6_269, %c14_270] : memref<8x25xf32, #tpu.memory_space<smem>>
    %596 = vector.broadcast %595 : f32 to vector<4x256xf32>
    %597 = arith.mulf %596, %570 : vector<4x256xf32>
    %598 = arith.addf %560, %597 : vector<4x256xf32>
    %c7_271 = arith.constant 7 : index
    %c14_272 = arith.constant 14 : index
    %599 = memref.load %arg5[%c7_271, %c14_272] : memref<8x25xf32, #tpu.memory_space<smem>>
    %600 = vector.broadcast %599 : f32 to vector<4x256xf32>
    %601 = arith.mulf %600, %570 : vector<4x256xf32>
    %602 = arith.addf %564, %601 : vector<4x256xf32>
    %603 = vector.extract_strided_slice %9 {offsets = [0, 14], sizes = [4, 242], strides = [1, 1]} : vector<4x256xf32> to vector<4x242xf32>
    %604 = vector.extract_strided_slice %9 {offsets = [0, 0], sizes = [4, 14], strides = [1, 1]} : vector<4x256xf32> to vector<4x14xf32>
    %605 = tpu.concatenate %603, %604 in 1 : vector<4x242xf32>, vector<4x14xf32> -> vector<4x256xf32>
    %c15 = arith.constant 15 : index
    %c0_273 = arith.constant 0 : index
    %606 = vector.load %arg4[%c15, %c0_273] : memref<25x256xf32, #tpu.memory_space<vmem>>, vector<1x256xf32>
    %607 = vector.broadcast %606 : vector<1x256xf32> to vector<4x256xf32>
    %608 = arith.mulf %605, %607 : vector<4x256xf32>
    %c0_274 = arith.constant 0 : index
    %c15_275 = arith.constant 15 : index
    %609 = memref.load %arg5[%c0_274, %c15_275] : memref<8x25xf32, #tpu.memory_space<smem>>
    %610 = vector.broadcast %609 : f32 to vector<4x256xf32>
    %611 = arith.mulf %610, %608 : vector<4x256xf32>
    %612 = arith.addf %574, %611 : vector<4x256xf32>
    %c1_276 = arith.constant 1 : index
    %c15_277 = arith.constant 15 : index
    %613 = memref.load %arg5[%c1_276, %c15_277] : memref<8x25xf32, #tpu.memory_space<smem>>
    %614 = vector.broadcast %613 : f32 to vector<4x256xf32>
    %615 = arith.mulf %614, %608 : vector<4x256xf32>
    %616 = arith.addf %578, %615 : vector<4x256xf32>
    %c2_278 = arith.constant 2 : index
    %c15_279 = arith.constant 15 : index
    %617 = memref.load %arg5[%c2_278, %c15_279] : memref<8x25xf32, #tpu.memory_space<smem>>
    %618 = vector.broadcast %617 : f32 to vector<4x256xf32>
    %619 = arith.mulf %618, %608 : vector<4x256xf32>
    %620 = arith.addf %582, %619 : vector<4x256xf32>
    %c3_280 = arith.constant 3 : index
    %c15_281 = arith.constant 15 : index
    %621 = memref.load %arg5[%c3_280, %c15_281] : memref<8x25xf32, #tpu.memory_space<smem>>
    %622 = vector.broadcast %621 : f32 to vector<4x256xf32>
    %623 = arith.mulf %622, %608 : vector<4x256xf32>
    %624 = arith.addf %586, %623 : vector<4x256xf32>
    %c4_282 = arith.constant 4 : index
    %c15_283 = arith.constant 15 : index
    %625 = memref.load %arg5[%c4_282, %c15_283] : memref<8x25xf32, #tpu.memory_space<smem>>
    %626 = vector.broadcast %625 : f32 to vector<4x256xf32>
    %627 = arith.mulf %626, %608 : vector<4x256xf32>
    %628 = arith.addf %590, %627 : vector<4x256xf32>
    %c5_284 = arith.constant 5 : index
    %c15_285 = arith.constant 15 : index
    %629 = memref.load %arg5[%c5_284, %c15_285] : memref<8x25xf32, #tpu.memory_space<smem>>
    %630 = vector.broadcast %629 : f32 to vector<4x256xf32>
    %631 = arith.mulf %630, %608 : vector<4x256xf32>
    %632 = arith.addf %594, %631 : vector<4x256xf32>
    %c6_286 = arith.constant 6 : index
    %c15_287 = arith.constant 15 : index
    %633 = memref.load %arg5[%c6_286, %c15_287] : memref<8x25xf32, #tpu.memory_space<smem>>
    %634 = vector.broadcast %633 : f32 to vector<4x256xf32>
    %635 = arith.mulf %634, %608 : vector<4x256xf32>
    %636 = arith.addf %598, %635 : vector<4x256xf32>
    %c7_288 = arith.constant 7 : index
    %c15_289 = arith.constant 15 : index
    %637 = memref.load %arg5[%c7_288, %c15_289] : memref<8x25xf32, #tpu.memory_space<smem>>
    %638 = vector.broadcast %637 : f32 to vector<4x256xf32>
    %639 = arith.mulf %638, %608 : vector<4x256xf32>
    %640 = arith.addf %602, %639 : vector<4x256xf32>
    %641 = vector.extract_strided_slice %9 {offsets = [0, 15], sizes = [4, 241], strides = [1, 1]} : vector<4x256xf32> to vector<4x241xf32>
    %642 = vector.extract_strided_slice %9 {offsets = [0, 0], sizes = [4, 15], strides = [1, 1]} : vector<4x256xf32> to vector<4x15xf32>
    %643 = tpu.concatenate %641, %642 in 1 : vector<4x241xf32>, vector<4x15xf32> -> vector<4x256xf32>
    %c16 = arith.constant 16 : index
    %c0_290 = arith.constant 0 : index
    %644 = vector.load %arg4[%c16, %c0_290] : memref<25x256xf32, #tpu.memory_space<vmem>>, vector<1x256xf32>
    %645 = vector.broadcast %644 : vector<1x256xf32> to vector<4x256xf32>
    %646 = arith.mulf %643, %645 : vector<4x256xf32>
    %c0_291 = arith.constant 0 : index
    %c16_292 = arith.constant 16 : index
    %647 = memref.load %arg5[%c0_291, %c16_292] : memref<8x25xf32, #tpu.memory_space<smem>>
    %648 = vector.broadcast %647 : f32 to vector<4x256xf32>
    %649 = arith.mulf %648, %646 : vector<4x256xf32>
    %650 = arith.addf %612, %649 : vector<4x256xf32>
    %c1_293 = arith.constant 1 : index
    %c16_294 = arith.constant 16 : index
    %651 = memref.load %arg5[%c1_293, %c16_294] : memref<8x25xf32, #tpu.memory_space<smem>>
    %652 = vector.broadcast %651 : f32 to vector<4x256xf32>
    %653 = arith.mulf %652, %646 : vector<4x256xf32>
    %654 = arith.addf %616, %653 : vector<4x256xf32>
    %c2_295 = arith.constant 2 : index
    %c16_296 = arith.constant 16 : index
    %655 = memref.load %arg5[%c2_295, %c16_296] : memref<8x25xf32, #tpu.memory_space<smem>>
    %656 = vector.broadcast %655 : f32 to vector<4x256xf32>
    %657 = arith.mulf %656, %646 : vector<4x256xf32>
    %658 = arith.addf %620, %657 : vector<4x256xf32>
    %c3_297 = arith.constant 3 : index
    %c16_298 = arith.constant 16 : index
    %659 = memref.load %arg5[%c3_297, %c16_298] : memref<8x25xf32, #tpu.memory_space<smem>>
    %660 = vector.broadcast %659 : f32 to vector<4x256xf32>
    %661 = arith.mulf %660, %646 : vector<4x256xf32>
    %662 = arith.addf %624, %661 : vector<4x256xf32>
    %c4_299 = arith.constant 4 : index
    %c16_300 = arith.constant 16 : index
    %663 = memref.load %arg5[%c4_299, %c16_300] : memref<8x25xf32, #tpu.memory_space<smem>>
    %664 = vector.broadcast %663 : f32 to vector<4x256xf32>
    %665 = arith.mulf %664, %646 : vector<4x256xf32>
    %666 = arith.addf %628, %665 : vector<4x256xf32>
    %c5_301 = arith.constant 5 : index
    %c16_302 = arith.constant 16 : index
    %667 = memref.load %arg5[%c5_301, %c16_302] : memref<8x25xf32, #tpu.memory_space<smem>>
    %668 = vector.broadcast %667 : f32 to vector<4x256xf32>
    %669 = arith.mulf %668, %646 : vector<4x256xf32>
    %670 = arith.addf %632, %669 : vector<4x256xf32>
    %c6_303 = arith.constant 6 : index
    %c16_304 = arith.constant 16 : index
    %671 = memref.load %arg5[%c6_303, %c16_304] : memref<8x25xf32, #tpu.memory_space<smem>>
    %672 = vector.broadcast %671 : f32 to vector<4x256xf32>
    %673 = arith.mulf %672, %646 : vector<4x256xf32>
    %674 = arith.addf %636, %673 : vector<4x256xf32>
    %c7_305 = arith.constant 7 : index
    %c16_306 = arith.constant 16 : index
    %675 = memref.load %arg5[%c7_305, %c16_306] : memref<8x25xf32, #tpu.memory_space<smem>>
    %676 = vector.broadcast %675 : f32 to vector<4x256xf32>
    %677 = arith.mulf %676, %646 : vector<4x256xf32>
    %678 = arith.addf %640, %677 : vector<4x256xf32>
    %679 = vector.extract_strided_slice %9 {offsets = [0, 16], sizes = [4, 240], strides = [1, 1]} : vector<4x256xf32> to vector<4x240xf32>
    %680 = vector.extract_strided_slice %9 {offsets = [0, 0], sizes = [4, 16], strides = [1, 1]} : vector<4x256xf32> to vector<4x16xf32>
    %681 = tpu.concatenate %679, %680 in 1 : vector<4x240xf32>, vector<4x16xf32> -> vector<4x256xf32>
    %c17 = arith.constant 17 : index
    %c0_307 = arith.constant 0 : index
    %682 = vector.load %arg4[%c17, %c0_307] : memref<25x256xf32, #tpu.memory_space<vmem>>, vector<1x256xf32>
    %683 = vector.broadcast %682 : vector<1x256xf32> to vector<4x256xf32>
    %684 = arith.mulf %681, %683 : vector<4x256xf32>
    %c0_308 = arith.constant 0 : index
    %c17_309 = arith.constant 17 : index
    %685 = memref.load %arg5[%c0_308, %c17_309] : memref<8x25xf32, #tpu.memory_space<smem>>
    %686 = vector.broadcast %685 : f32 to vector<4x256xf32>
    %687 = arith.mulf %686, %684 : vector<4x256xf32>
    %688 = arith.addf %650, %687 : vector<4x256xf32>
    %c1_310 = arith.constant 1 : index
    %c17_311 = arith.constant 17 : index
    %689 = memref.load %arg5[%c1_310, %c17_311] : memref<8x25xf32, #tpu.memory_space<smem>>
    %690 = vector.broadcast %689 : f32 to vector<4x256xf32>
    %691 = arith.mulf %690, %684 : vector<4x256xf32>
    %692 = arith.addf %654, %691 : vector<4x256xf32>
    %c2_312 = arith.constant 2 : index
    %c17_313 = arith.constant 17 : index
    %693 = memref.load %arg5[%c2_312, %c17_313] : memref<8x25xf32, #tpu.memory_space<smem>>
    %694 = vector.broadcast %693 : f32 to vector<4x256xf32>
    %695 = arith.mulf %694, %684 : vector<4x256xf32>
    %696 = arith.addf %658, %695 : vector<4x256xf32>
    %c3_314 = arith.constant 3 : index
    %c17_315 = arith.constant 17 : index
    %697 = memref.load %arg5[%c3_314, %c17_315] : memref<8x25xf32, #tpu.memory_space<smem>>
    %698 = vector.broadcast %697 : f32 to vector<4x256xf32>
    %699 = arith.mulf %698, %684 : vector<4x256xf32>
    %700 = arith.addf %662, %699 : vector<4x256xf32>
    %c4_316 = arith.constant 4 : index
    %c17_317 = arith.constant 17 : index
    %701 = memref.load %arg5[%c4_316, %c17_317] : memref<8x25xf32, #tpu.memory_space<smem>>
    %702 = vector.broadcast %701 : f32 to vector<4x256xf32>
    %703 = arith.mulf %702, %684 : vector<4x256xf32>
    %704 = arith.addf %666, %703 : vector<4x256xf32>
    %c5_318 = arith.constant 5 : index
    %c17_319 = arith.constant 17 : index
    %705 = memref.load %arg5[%c5_318, %c17_319] : memref<8x25xf32, #tpu.memory_space<smem>>
    %706 = vector.broadcast %705 : f32 to vector<4x256xf32>
    %707 = arith.mulf %706, %684 : vector<4x256xf32>
    %708 = arith.addf %670, %707 : vector<4x256xf32>
    %c6_320 = arith.constant 6 : index
    %c17_321 = arith.constant 17 : index
    %709 = memref.load %arg5[%c6_320, %c17_321] : memref<8x25xf32, #tpu.memory_space<smem>>
    %710 = vector.broadcast %709 : f32 to vector<4x256xf32>
    %711 = arith.mulf %710, %684 : vector<4x256xf32>
    %712 = arith.addf %674, %711 : vector<4x256xf32>
    %c7_322 = arith.constant 7 : index
    %c17_323 = arith.constant 17 : index
    %713 = memref.load %arg5[%c7_322, %c17_323] : memref<8x25xf32, #tpu.memory_space<smem>>
    %714 = vector.broadcast %713 : f32 to vector<4x256xf32>
    %715 = arith.mulf %714, %684 : vector<4x256xf32>
    %716 = arith.addf %678, %715 : vector<4x256xf32>
    %717 = vector.extract_strided_slice %9 {offsets = [0, 17], sizes = [4, 239], strides = [1, 1]} : vector<4x256xf32> to vector<4x239xf32>
    %718 = vector.extract_strided_slice %9 {offsets = [0, 0], sizes = [4, 17], strides = [1, 1]} : vector<4x256xf32> to vector<4x17xf32>
    %719 = tpu.concatenate %717, %718 in 1 : vector<4x239xf32>, vector<4x17xf32> -> vector<4x256xf32>
    %c18 = arith.constant 18 : index
    %c0_324 = arith.constant 0 : index
    %720 = vector.load %arg4[%c18, %c0_324] : memref<25x256xf32, #tpu.memory_space<vmem>>, vector<1x256xf32>
    %721 = vector.broadcast %720 : vector<1x256xf32> to vector<4x256xf32>
    %722 = arith.mulf %719, %721 : vector<4x256xf32>
    %c0_325 = arith.constant 0 : index
    %c18_326 = arith.constant 18 : index
    %723 = memref.load %arg5[%c0_325, %c18_326] : memref<8x25xf32, #tpu.memory_space<smem>>
    %724 = vector.broadcast %723 : f32 to vector<4x256xf32>
    %725 = arith.mulf %724, %722 : vector<4x256xf32>
    %726 = arith.addf %688, %725 : vector<4x256xf32>
    %c1_327 = arith.constant 1 : index
    %c18_328 = arith.constant 18 : index
    %727 = memref.load %arg5[%c1_327, %c18_328] : memref<8x25xf32, #tpu.memory_space<smem>>
    %728 = vector.broadcast %727 : f32 to vector<4x256xf32>
    %729 = arith.mulf %728, %722 : vector<4x256xf32>
    %730 = arith.addf %692, %729 : vector<4x256xf32>
    %c2_329 = arith.constant 2 : index
    %c18_330 = arith.constant 18 : index
    %731 = memref.load %arg5[%c2_329, %c18_330] : memref<8x25xf32, #tpu.memory_space<smem>>
    %732 = vector.broadcast %731 : f32 to vector<4x256xf32>
    %733 = arith.mulf %732, %722 : vector<4x256xf32>
    %734 = arith.addf %696, %733 : vector<4x256xf32>
    %c3_331 = arith.constant 3 : index
    %c18_332 = arith.constant 18 : index
    %735 = memref.load %arg5[%c3_331, %c18_332] : memref<8x25xf32, #tpu.memory_space<smem>>
    %736 = vector.broadcast %735 : f32 to vector<4x256xf32>
    %737 = arith.mulf %736, %722 : vector<4x256xf32>
    %738 = arith.addf %700, %737 : vector<4x256xf32>
    %c4_333 = arith.constant 4 : index
    %c18_334 = arith.constant 18 : index
    %739 = memref.load %arg5[%c4_333, %c18_334] : memref<8x25xf32, #tpu.memory_space<smem>>
    %740 = vector.broadcast %739 : f32 to vector<4x256xf32>
    %741 = arith.mulf %740, %722 : vector<4x256xf32>
    %742 = arith.addf %704, %741 : vector<4x256xf32>
    %c5_335 = arith.constant 5 : index
    %c18_336 = arith.constant 18 : index
    %743 = memref.load %arg5[%c5_335, %c18_336] : memref<8x25xf32, #tpu.memory_space<smem>>
    %744 = vector.broadcast %743 : f32 to vector<4x256xf32>
    %745 = arith.mulf %744, %722 : vector<4x256xf32>
    %746 = arith.addf %708, %745 : vector<4x256xf32>
    %c6_337 = arith.constant 6 : index
    %c18_338 = arith.constant 18 : index
    %747 = memref.load %arg5[%c6_337, %c18_338] : memref<8x25xf32, #tpu.memory_space<smem>>
    %748 = vector.broadcast %747 : f32 to vector<4x256xf32>
    %749 = arith.mulf %748, %722 : vector<4x256xf32>
    %750 = arith.addf %712, %749 : vector<4x256xf32>
    %c7_339 = arith.constant 7 : index
    %c18_340 = arith.constant 18 : index
    %751 = memref.load %arg5[%c7_339, %c18_340] : memref<8x25xf32, #tpu.memory_space<smem>>
    %752 = vector.broadcast %751 : f32 to vector<4x256xf32>
    %753 = arith.mulf %752, %722 : vector<4x256xf32>
    %754 = arith.addf %716, %753 : vector<4x256xf32>
    %755 = vector.extract_strided_slice %9 {offsets = [0, 18], sizes = [4, 238], strides = [1, 1]} : vector<4x256xf32> to vector<4x238xf32>
    %756 = vector.extract_strided_slice %9 {offsets = [0, 0], sizes = [4, 18], strides = [1, 1]} : vector<4x256xf32> to vector<4x18xf32>
    %757 = tpu.concatenate %755, %756 in 1 : vector<4x238xf32>, vector<4x18xf32> -> vector<4x256xf32>
    %c19 = arith.constant 19 : index
    %c0_341 = arith.constant 0 : index
    %758 = vector.load %arg4[%c19, %c0_341] : memref<25x256xf32, #tpu.memory_space<vmem>>, vector<1x256xf32>
    %759 = vector.broadcast %758 : vector<1x256xf32> to vector<4x256xf32>
    %760 = arith.mulf %757, %759 : vector<4x256xf32>
    %c0_342 = arith.constant 0 : index
    %c19_343 = arith.constant 19 : index
    %761 = memref.load %arg5[%c0_342, %c19_343] : memref<8x25xf32, #tpu.memory_space<smem>>
    %762 = vector.broadcast %761 : f32 to vector<4x256xf32>
    %763 = arith.mulf %762, %760 : vector<4x256xf32>
    %764 = arith.addf %726, %763 : vector<4x256xf32>
    %c1_344 = arith.constant 1 : index
    %c19_345 = arith.constant 19 : index
    %765 = memref.load %arg5[%c1_344, %c19_345] : memref<8x25xf32, #tpu.memory_space<smem>>
    %766 = vector.broadcast %765 : f32 to vector<4x256xf32>
    %767 = arith.mulf %766, %760 : vector<4x256xf32>
    %768 = arith.addf %730, %767 : vector<4x256xf32>
    %c2_346 = arith.constant 2 : index
    %c19_347 = arith.constant 19 : index
    %769 = memref.load %arg5[%c2_346, %c19_347] : memref<8x25xf32, #tpu.memory_space<smem>>
    %770 = vector.broadcast %769 : f32 to vector<4x256xf32>
    %771 = arith.mulf %770, %760 : vector<4x256xf32>
    %772 = arith.addf %734, %771 : vector<4x256xf32>
    %c3_348 = arith.constant 3 : index
    %c19_349 = arith.constant 19 : index
    %773 = memref.load %arg5[%c3_348, %c19_349] : memref<8x25xf32, #tpu.memory_space<smem>>
    %774 = vector.broadcast %773 : f32 to vector<4x256xf32>
    %775 = arith.mulf %774, %760 : vector<4x256xf32>
    %776 = arith.addf %738, %775 : vector<4x256xf32>
    %c4_350 = arith.constant 4 : index
    %c19_351 = arith.constant 19 : index
    %777 = memref.load %arg5[%c4_350, %c19_351] : memref<8x25xf32, #tpu.memory_space<smem>>
    %778 = vector.broadcast %777 : f32 to vector<4x256xf32>
    %779 = arith.mulf %778, %760 : vector<4x256xf32>
    %780 = arith.addf %742, %779 : vector<4x256xf32>
    %c5_352 = arith.constant 5 : index
    %c19_353 = arith.constant 19 : index
    %781 = memref.load %arg5[%c5_352, %c19_353] : memref<8x25xf32, #tpu.memory_space<smem>>
    %782 = vector.broadcast %781 : f32 to vector<4x256xf32>
    %783 = arith.mulf %782, %760 : vector<4x256xf32>
    %784 = arith.addf %746, %783 : vector<4x256xf32>
    %c6_354 = arith.constant 6 : index
    %c19_355 = arith.constant 19 : index
    %785 = memref.load %arg5[%c6_354, %c19_355] : memref<8x25xf32, #tpu.memory_space<smem>>
    %786 = vector.broadcast %785 : f32 to vector<4x256xf32>
    %787 = arith.mulf %786, %760 : vector<4x256xf32>
    %788 = arith.addf %750, %787 : vector<4x256xf32>
    %c7_356 = arith.constant 7 : index
    %c19_357 = arith.constant 19 : index
    %789 = memref.load %arg5[%c7_356, %c19_357] : memref<8x25xf32, #tpu.memory_space<smem>>
    %790 = vector.broadcast %789 : f32 to vector<4x256xf32>
    %791 = arith.mulf %790, %760 : vector<4x256xf32>
    %792 = arith.addf %754, %791 : vector<4x256xf32>
    %793 = vector.extract_strided_slice %9 {offsets = [0, 30], sizes = [4, 226], strides = [1, 1]} : vector<4x256xf32> to vector<4x226xf32>
    %794 = vector.extract_strided_slice %9 {offsets = [0, 0], sizes = [4, 30], strides = [1, 1]} : vector<4x256xf32> to vector<4x30xf32>
    %795 = tpu.concatenate %793, %794 in 1 : vector<4x226xf32>, vector<4x30xf32> -> vector<4x256xf32>
    %c20 = arith.constant 20 : index
    %c0_358 = arith.constant 0 : index
    %796 = vector.load %arg4[%c20, %c0_358] : memref<25x256xf32, #tpu.memory_space<vmem>>, vector<1x256xf32>
    %797 = vector.broadcast %796 : vector<1x256xf32> to vector<4x256xf32>
    %798 = arith.mulf %795, %797 : vector<4x256xf32>
    %c0_359 = arith.constant 0 : index
    %c20_360 = arith.constant 20 : index
    %799 = memref.load %arg5[%c0_359, %c20_360] : memref<8x25xf32, #tpu.memory_space<smem>>
    %800 = vector.broadcast %799 : f32 to vector<4x256xf32>
    %801 = arith.mulf %800, %798 : vector<4x256xf32>
    %802 = arith.addf %764, %801 : vector<4x256xf32>
    %c1_361 = arith.constant 1 : index
    %c20_362 = arith.constant 20 : index
    %803 = memref.load %arg5[%c1_361, %c20_362] : memref<8x25xf32, #tpu.memory_space<smem>>
    %804 = vector.broadcast %803 : f32 to vector<4x256xf32>
    %805 = arith.mulf %804, %798 : vector<4x256xf32>
    %806 = arith.addf %768, %805 : vector<4x256xf32>
    %c2_363 = arith.constant 2 : index
    %c20_364 = arith.constant 20 : index
    %807 = memref.load %arg5[%c2_363, %c20_364] : memref<8x25xf32, #tpu.memory_space<smem>>
    %808 = vector.broadcast %807 : f32 to vector<4x256xf32>
    %809 = arith.mulf %808, %798 : vector<4x256xf32>
    %810 = arith.addf %772, %809 : vector<4x256xf32>
    %c3_365 = arith.constant 3 : index
    %c20_366 = arith.constant 20 : index
    %811 = memref.load %arg5[%c3_365, %c20_366] : memref<8x25xf32, #tpu.memory_space<smem>>
    %812 = vector.broadcast %811 : f32 to vector<4x256xf32>
    %813 = arith.mulf %812, %798 : vector<4x256xf32>
    %814 = arith.addf %776, %813 : vector<4x256xf32>
    %c4_367 = arith.constant 4 : index
    %c20_368 = arith.constant 20 : index
    %815 = memref.load %arg5[%c4_367, %c20_368] : memref<8x25xf32, #tpu.memory_space<smem>>
    %816 = vector.broadcast %815 : f32 to vector<4x256xf32>
    %817 = arith.mulf %816, %798 : vector<4x256xf32>
    %818 = arith.addf %780, %817 : vector<4x256xf32>
    %c5_369 = arith.constant 5 : index
    %c20_370 = arith.constant 20 : index
    %819 = memref.load %arg5[%c5_369, %c20_370] : memref<8x25xf32, #tpu.memory_space<smem>>
    %820 = vector.broadcast %819 : f32 to vector<4x256xf32>
    %821 = arith.mulf %820, %798 : vector<4x256xf32>
    %822 = arith.addf %784, %821 : vector<4x256xf32>
    %c6_371 = arith.constant 6 : index
    %c20_372 = arith.constant 20 : index
    %823 = memref.load %arg5[%c6_371, %c20_372] : memref<8x25xf32, #tpu.memory_space<smem>>
    %824 = vector.broadcast %823 : f32 to vector<4x256xf32>
    %825 = arith.mulf %824, %798 : vector<4x256xf32>
    %826 = arith.addf %788, %825 : vector<4x256xf32>
    %c7_373 = arith.constant 7 : index
    %c20_374 = arith.constant 20 : index
    %827 = memref.load %arg5[%c7_373, %c20_374] : memref<8x25xf32, #tpu.memory_space<smem>>
    %828 = vector.broadcast %827 : f32 to vector<4x256xf32>
    %829 = arith.mulf %828, %798 : vector<4x256xf32>
    %830 = arith.addf %792, %829 : vector<4x256xf32>
    %831 = vector.extract_strided_slice %9 {offsets = [0, 31], sizes = [4, 225], strides = [1, 1]} : vector<4x256xf32> to vector<4x225xf32>
    %832 = vector.extract_strided_slice %9 {offsets = [0, 0], sizes = [4, 31], strides = [1, 1]} : vector<4x256xf32> to vector<4x31xf32>
    %833 = tpu.concatenate %831, %832 in 1 : vector<4x225xf32>, vector<4x31xf32> -> vector<4x256xf32>
    %c21 = arith.constant 21 : index
    %c0_375 = arith.constant 0 : index
    %834 = vector.load %arg4[%c21, %c0_375] : memref<25x256xf32, #tpu.memory_space<vmem>>, vector<1x256xf32>
    %835 = vector.broadcast %834 : vector<1x256xf32> to vector<4x256xf32>
    %836 = arith.mulf %833, %835 : vector<4x256xf32>
    %c0_376 = arith.constant 0 : index
    %c21_377 = arith.constant 21 : index
    %837 = memref.load %arg5[%c0_376, %c21_377] : memref<8x25xf32, #tpu.memory_space<smem>>
    %838 = vector.broadcast %837 : f32 to vector<4x256xf32>
    %839 = arith.mulf %838, %836 : vector<4x256xf32>
    %840 = arith.addf %802, %839 : vector<4x256xf32>
    %c1_378 = arith.constant 1 : index
    %c21_379 = arith.constant 21 : index
    %841 = memref.load %arg5[%c1_378, %c21_379] : memref<8x25xf32, #tpu.memory_space<smem>>
    %842 = vector.broadcast %841 : f32 to vector<4x256xf32>
    %843 = arith.mulf %842, %836 : vector<4x256xf32>
    %844 = arith.addf %806, %843 : vector<4x256xf32>
    %c2_380 = arith.constant 2 : index
    %c21_381 = arith.constant 21 : index
    %845 = memref.load %arg5[%c2_380, %c21_381] : memref<8x25xf32, #tpu.memory_space<smem>>
    %846 = vector.broadcast %845 : f32 to vector<4x256xf32>
    %847 = arith.mulf %846, %836 : vector<4x256xf32>
    %848 = arith.addf %810, %847 : vector<4x256xf32>
    %c3_382 = arith.constant 3 : index
    %c21_383 = arith.constant 21 : index
    %849 = memref.load %arg5[%c3_382, %c21_383] : memref<8x25xf32, #tpu.memory_space<smem>>
    %850 = vector.broadcast %849 : f32 to vector<4x256xf32>
    %851 = arith.mulf %850, %836 : vector<4x256xf32>
    %852 = arith.addf %814, %851 : vector<4x256xf32>
    %c4_384 = arith.constant 4 : index
    %c21_385 = arith.constant 21 : index
    %853 = memref.load %arg5[%c4_384, %c21_385] : memref<8x25xf32, #tpu.memory_space<smem>>
    %854 = vector.broadcast %853 : f32 to vector<4x256xf32>
    %855 = arith.mulf %854, %836 : vector<4x256xf32>
    %856 = arith.addf %818, %855 : vector<4x256xf32>
    %c5_386 = arith.constant 5 : index
    %c21_387 = arith.constant 21 : index
    %857 = memref.load %arg5[%c5_386, %c21_387] : memref<8x25xf32, #tpu.memory_space<smem>>
    %858 = vector.broadcast %857 : f32 to vector<4x256xf32>
    %859 = arith.mulf %858, %836 : vector<4x256xf32>
    %860 = arith.addf %822, %859 : vector<4x256xf32>
    %c6_388 = arith.constant 6 : index
    %c21_389 = arith.constant 21 : index
    %861 = memref.load %arg5[%c6_388, %c21_389] : memref<8x25xf32, #tpu.memory_space<smem>>
    %862 = vector.broadcast %861 : f32 to vector<4x256xf32>
    %863 = arith.mulf %862, %836 : vector<4x256xf32>
    %864 = arith.addf %826, %863 : vector<4x256xf32>
    %c7_390 = arith.constant 7 : index
    %c21_391 = arith.constant 21 : index
    %865 = memref.load %arg5[%c7_390, %c21_391] : memref<8x25xf32, #tpu.memory_space<smem>>
    %866 = vector.broadcast %865 : f32 to vector<4x256xf32>
    %867 = arith.mulf %866, %836 : vector<4x256xf32>
    %868 = arith.addf %830, %867 : vector<4x256xf32>
    %869 = vector.extract_strided_slice %9 {offsets = [0, 32], sizes = [4, 224], strides = [1, 1]} : vector<4x256xf32> to vector<4x224xf32>
    %870 = vector.extract_strided_slice %9 {offsets = [0, 0], sizes = [4, 32], strides = [1, 1]} : vector<4x256xf32> to vector<4x32xf32>
    %871 = tpu.concatenate %869, %870 in 1 : vector<4x224xf32>, vector<4x32xf32> -> vector<4x256xf32>
    %c22 = arith.constant 22 : index
    %c0_392 = arith.constant 0 : index
    %872 = vector.load %arg4[%c22, %c0_392] : memref<25x256xf32, #tpu.memory_space<vmem>>, vector<1x256xf32>
    %873 = vector.broadcast %872 : vector<1x256xf32> to vector<4x256xf32>
    %874 = arith.mulf %871, %873 : vector<4x256xf32>
    %c0_393 = arith.constant 0 : index
    %c22_394 = arith.constant 22 : index
    %875 = memref.load %arg5[%c0_393, %c22_394] : memref<8x25xf32, #tpu.memory_space<smem>>
    %876 = vector.broadcast %875 : f32 to vector<4x256xf32>
    %877 = arith.mulf %876, %874 : vector<4x256xf32>
    %878 = arith.addf %840, %877 : vector<4x256xf32>
    %c1_395 = arith.constant 1 : index
    %c22_396 = arith.constant 22 : index
    %879 = memref.load %arg5[%c1_395, %c22_396] : memref<8x25xf32, #tpu.memory_space<smem>>
    %880 = vector.broadcast %879 : f32 to vector<4x256xf32>
    %881 = arith.mulf %880, %874 : vector<4x256xf32>
    %882 = arith.addf %844, %881 : vector<4x256xf32>
    %c2_397 = arith.constant 2 : index
    %c22_398 = arith.constant 22 : index
    %883 = memref.load %arg5[%c2_397, %c22_398] : memref<8x25xf32, #tpu.memory_space<smem>>
    %884 = vector.broadcast %883 : f32 to vector<4x256xf32>
    %885 = arith.mulf %884, %874 : vector<4x256xf32>
    %886 = arith.addf %848, %885 : vector<4x256xf32>
    %c3_399 = arith.constant 3 : index
    %c22_400 = arith.constant 22 : index
    %887 = memref.load %arg5[%c3_399, %c22_400] : memref<8x25xf32, #tpu.memory_space<smem>>
    %888 = vector.broadcast %887 : f32 to vector<4x256xf32>
    %889 = arith.mulf %888, %874 : vector<4x256xf32>
    %890 = arith.addf %852, %889 : vector<4x256xf32>
    %c4_401 = arith.constant 4 : index
    %c22_402 = arith.constant 22 : index
    %891 = memref.load %arg5[%c4_401, %c22_402] : memref<8x25xf32, #tpu.memory_space<smem>>
    %892 = vector.broadcast %891 : f32 to vector<4x256xf32>
    %893 = arith.mulf %892, %874 : vector<4x256xf32>
    %894 = arith.addf %856, %893 : vector<4x256xf32>
    %c5_403 = arith.constant 5 : index
    %c22_404 = arith.constant 22 : index
    %895 = memref.load %arg5[%c5_403, %c22_404] : memref<8x25xf32, #tpu.memory_space<smem>>
    %896 = vector.broadcast %895 : f32 to vector<4x256xf32>
    %897 = arith.mulf %896, %874 : vector<4x256xf32>
    %898 = arith.addf %860, %897 : vector<4x256xf32>
    %c6_405 = arith.constant 6 : index
    %c22_406 = arith.constant 22 : index
    %899 = memref.load %arg5[%c6_405, %c22_406] : memref<8x25xf32, #tpu.memory_space<smem>>
    %900 = vector.broadcast %899 : f32 to vector<4x256xf32>
    %901 = arith.mulf %900, %874 : vector<4x256xf32>
    %902 = arith.addf %864, %901 : vector<4x256xf32>
    %c7_407 = arith.constant 7 : index
    %c22_408 = arith.constant 22 : index
    %903 = memref.load %arg5[%c7_407, %c22_408] : memref<8x25xf32, #tpu.memory_space<smem>>
    %904 = vector.broadcast %903 : f32 to vector<4x256xf32>
    %905 = arith.mulf %904, %874 : vector<4x256xf32>
    %906 = arith.addf %868, %905 : vector<4x256xf32>
    %907 = vector.extract_strided_slice %9 {offsets = [0, 33], sizes = [4, 223], strides = [1, 1]} : vector<4x256xf32> to vector<4x223xf32>
    %908 = vector.extract_strided_slice %9 {offsets = [0, 0], sizes = [4, 33], strides = [1, 1]} : vector<4x256xf32> to vector<4x33xf32>
    %909 = tpu.concatenate %907, %908 in 1 : vector<4x223xf32>, vector<4x33xf32> -> vector<4x256xf32>
    %c23 = arith.constant 23 : index
    %c0_409 = arith.constant 0 : index
    %910 = vector.load %arg4[%c23, %c0_409] : memref<25x256xf32, #tpu.memory_space<vmem>>, vector<1x256xf32>
    %911 = vector.broadcast %910 : vector<1x256xf32> to vector<4x256xf32>
    %912 = arith.mulf %909, %911 : vector<4x256xf32>
    %c0_410 = arith.constant 0 : index
    %c23_411 = arith.constant 23 : index
    %913 = memref.load %arg5[%c0_410, %c23_411] : memref<8x25xf32, #tpu.memory_space<smem>>
    %914 = vector.broadcast %913 : f32 to vector<4x256xf32>
    %915 = arith.mulf %914, %912 : vector<4x256xf32>
    %916 = arith.addf %878, %915 : vector<4x256xf32>
    %c1_412 = arith.constant 1 : index
    %c23_413 = arith.constant 23 : index
    %917 = memref.load %arg5[%c1_412, %c23_413] : memref<8x25xf32, #tpu.memory_space<smem>>
    %918 = vector.broadcast %917 : f32 to vector<4x256xf32>
    %919 = arith.mulf %918, %912 : vector<4x256xf32>
    %920 = arith.addf %882, %919 : vector<4x256xf32>
    %c2_414 = arith.constant 2 : index
    %c23_415 = arith.constant 23 : index
    %921 = memref.load %arg5[%c2_414, %c23_415] : memref<8x25xf32, #tpu.memory_space<smem>>
    %922 = vector.broadcast %921 : f32 to vector<4x256xf32>
    %923 = arith.mulf %922, %912 : vector<4x256xf32>
    %924 = arith.addf %886, %923 : vector<4x256xf32>
    %c3_416 = arith.constant 3 : index
    %c23_417 = arith.constant 23 : index
    %925 = memref.load %arg5[%c3_416, %c23_417] : memref<8x25xf32, #tpu.memory_space<smem>>
    %926 = vector.broadcast %925 : f32 to vector<4x256xf32>
    %927 = arith.mulf %926, %912 : vector<4x256xf32>
    %928 = arith.addf %890, %927 : vector<4x256xf32>
    %c4_418 = arith.constant 4 : index
    %c23_419 = arith.constant 23 : index
    %929 = memref.load %arg5[%c4_418, %c23_419] : memref<8x25xf32, #tpu.memory_space<smem>>
    %930 = vector.broadcast %929 : f32 to vector<4x256xf32>
    %931 = arith.mulf %930, %912 : vector<4x256xf32>
    %932 = arith.addf %894, %931 : vector<4x256xf32>
    %c5_420 = arith.constant 5 : index
    %c23_421 = arith.constant 23 : index
    %933 = memref.load %arg5[%c5_420, %c23_421] : memref<8x25xf32, #tpu.memory_space<smem>>
    %934 = vector.broadcast %933 : f32 to vector<4x256xf32>
    %935 = arith.mulf %934, %912 : vector<4x256xf32>
    %936 = arith.addf %898, %935 : vector<4x256xf32>
    %c6_422 = arith.constant 6 : index
    %c23_423 = arith.constant 23 : index
    %937 = memref.load %arg5[%c6_422, %c23_423] : memref<8x25xf32, #tpu.memory_space<smem>>
    %938 = vector.broadcast %937 : f32 to vector<4x256xf32>
    %939 = arith.mulf %938, %912 : vector<4x256xf32>
    %940 = arith.addf %902, %939 : vector<4x256xf32>
    %c7_424 = arith.constant 7 : index
    %c23_425 = arith.constant 23 : index
    %941 = memref.load %arg5[%c7_424, %c23_425] : memref<8x25xf32, #tpu.memory_space<smem>>
    %942 = vector.broadcast %941 : f32 to vector<4x256xf32>
    %943 = arith.mulf %942, %912 : vector<4x256xf32>
    %944 = arith.addf %906, %943 : vector<4x256xf32>
    %945 = vector.extract_strided_slice %9 {offsets = [0, 34], sizes = [4, 222], strides = [1, 1]} : vector<4x256xf32> to vector<4x222xf32>
    %946 = vector.extract_strided_slice %9 {offsets = [0, 0], sizes = [4, 34], strides = [1, 1]} : vector<4x256xf32> to vector<4x34xf32>
    %947 = tpu.concatenate %945, %946 in 1 : vector<4x222xf32>, vector<4x34xf32> -> vector<4x256xf32>
    %c24 = arith.constant 24 : index
    %c0_426 = arith.constant 0 : index
    %948 = vector.load %arg4[%c24, %c0_426] : memref<25x256xf32, #tpu.memory_space<vmem>>, vector<1x256xf32>
    %949 = vector.broadcast %948 : vector<1x256xf32> to vector<4x256xf32>
    %950 = arith.mulf %947, %949 : vector<4x256xf32>
    %c0_427 = arith.constant 0 : index
    %c24_428 = arith.constant 24 : index
    %951 = memref.load %arg5[%c0_427, %c24_428] : memref<8x25xf32, #tpu.memory_space<smem>>
    %952 = vector.broadcast %951 : f32 to vector<4x256xf32>
    %953 = arith.mulf %952, %950 : vector<4x256xf32>
    %954 = arith.addf %916, %953 : vector<4x256xf32>
    %c1_429 = arith.constant 1 : index
    %c24_430 = arith.constant 24 : index
    %955 = memref.load %arg5[%c1_429, %c24_430] : memref<8x25xf32, #tpu.memory_space<smem>>
    %956 = vector.broadcast %955 : f32 to vector<4x256xf32>
    %957 = arith.mulf %956, %950 : vector<4x256xf32>
    %958 = arith.addf %920, %957 : vector<4x256xf32>
    %c2_431 = arith.constant 2 : index
    %c24_432 = arith.constant 24 : index
    %959 = memref.load %arg5[%c2_431, %c24_432] : memref<8x25xf32, #tpu.memory_space<smem>>
    %960 = vector.broadcast %959 : f32 to vector<4x256xf32>
    %961 = arith.mulf %960, %950 : vector<4x256xf32>
    %962 = arith.addf %924, %961 : vector<4x256xf32>
    %c3_433 = arith.constant 3 : index
    %c24_434 = arith.constant 24 : index
    %963 = memref.load %arg5[%c3_433, %c24_434] : memref<8x25xf32, #tpu.memory_space<smem>>
    %964 = vector.broadcast %963 : f32 to vector<4x256xf32>
    %965 = arith.mulf %964, %950 : vector<4x256xf32>
    %966 = arith.addf %928, %965 : vector<4x256xf32>
    %c4_435 = arith.constant 4 : index
    %c24_436 = arith.constant 24 : index
    %967 = memref.load %arg5[%c4_435, %c24_436] : memref<8x25xf32, #tpu.memory_space<smem>>
    %968 = vector.broadcast %967 : f32 to vector<4x256xf32>
    %969 = arith.mulf %968, %950 : vector<4x256xf32>
    %970 = arith.addf %932, %969 : vector<4x256xf32>
    %c5_437 = arith.constant 5 : index
    %c24_438 = arith.constant 24 : index
    %971 = memref.load %arg5[%c5_437, %c24_438] : memref<8x25xf32, #tpu.memory_space<smem>>
    %972 = vector.broadcast %971 : f32 to vector<4x256xf32>
    %973 = arith.mulf %972, %950 : vector<4x256xf32>
    %974 = arith.addf %936, %973 : vector<4x256xf32>
    %c6_439 = arith.constant 6 : index
    %c24_440 = arith.constant 24 : index
    %975 = memref.load %arg5[%c6_439, %c24_440] : memref<8x25xf32, #tpu.memory_space<smem>>
    %976 = vector.broadcast %975 : f32 to vector<4x256xf32>
    %977 = arith.mulf %976, %950 : vector<4x256xf32>
    %978 = arith.addf %940, %977 : vector<4x256xf32>
    %c7_441 = arith.constant 7 : index
    %c24_442 = arith.constant 24 : index
    %979 = memref.load %arg5[%c7_441, %c24_442] : memref<8x25xf32, #tpu.memory_space<smem>>
    %980 = vector.broadcast %979 : f32 to vector<4x256xf32>
    %981 = arith.mulf %980, %950 : vector<4x256xf32>
    %982 = arith.addf %944, %981 : vector<4x256xf32>
    %983 = vector.extract_strided_slice %7 {offsets = [0, 0], sizes = [8, 256], strides = [1, 1]} : vector<32x256xf32> to vector<8x256xf32>
    %cst_443 = arith.constant dense<0.000000e+00> : vector<4x256xf32>
    %984 = tpu.matmul %19, %983, %cst_443 {dimension_numbers = #tpu.dot_dimension_numbers<[1], [0], [0], [1], [0, 0, 1, 1], [], []>} : vector<4x8xf32>, vector<8x256xf32>, vector<4x256xf32> -> vector<4x256xf32>
    %985 = vector.extract_strided_slice %983 {offsets = [0, 0], sizes = [1, 256], strides = [1, 1]} : vector<8x256xf32> to vector<1x256xf32>
    %986 = vector.broadcast %985 : vector<1x256xf32> to vector<4x256xf32>
    %987 = arith.mulf %986, %954 : vector<4x256xf32>
    %988 = arith.addf %984, %987 : vector<4x256xf32>
    %989 = vector.extract_strided_slice %983 {offsets = [1, 0], sizes = [1, 256], strides = [1, 1]} : vector<8x256xf32> to vector<1x256xf32>
    %990 = vector.broadcast %989 : vector<1x256xf32> to vector<4x256xf32>
    %991 = arith.mulf %990, %958 : vector<4x256xf32>
    %992 = arith.addf %988, %991 : vector<4x256xf32>
    %993 = vector.extract_strided_slice %983 {offsets = [2, 0], sizes = [1, 256], strides = [1, 1]} : vector<8x256xf32> to vector<1x256xf32>
    %994 = vector.broadcast %993 : vector<1x256xf32> to vector<4x256xf32>
    %995 = arith.mulf %994, %962 : vector<4x256xf32>
    %996 = arith.addf %992, %995 : vector<4x256xf32>
    %997 = vector.extract_strided_slice %983 {offsets = [3, 0], sizes = [1, 256], strides = [1, 1]} : vector<8x256xf32> to vector<1x256xf32>
    %998 = vector.broadcast %997 : vector<1x256xf32> to vector<4x256xf32>
    %999 = arith.mulf %998, %966 : vector<4x256xf32>
    %1000 = arith.addf %996, %999 : vector<4x256xf32>
    %1001 = vector.extract_strided_slice %983 {offsets = [4, 0], sizes = [1, 256], strides = [1, 1]} : vector<8x256xf32> to vector<1x256xf32>
    %1002 = vector.broadcast %1001 : vector<1x256xf32> to vector<4x256xf32>
    %1003 = arith.mulf %1002, %970 : vector<4x256xf32>
    %1004 = arith.addf %1000, %1003 : vector<4x256xf32>
    %1005 = vector.extract_strided_slice %983 {offsets = [5, 0], sizes = [1, 256], strides = [1, 1]} : vector<8x256xf32> to vector<1x256xf32>
    %1006 = vector.broadcast %1005 : vector<1x256xf32> to vector<4x256xf32>
    %1007 = arith.mulf %1006, %974 : vector<4x256xf32>
    %1008 = arith.addf %1004, %1007 : vector<4x256xf32>
    %1009 = vector.extract_strided_slice %983 {offsets = [6, 0], sizes = [1, 256], strides = [1, 1]} : vector<8x256xf32> to vector<1x256xf32>
    %1010 = vector.broadcast %1009 : vector<1x256xf32> to vector<4x256xf32>
    %1011 = arith.mulf %1010, %978 : vector<4x256xf32>
    %1012 = arith.addf %1008, %1011 : vector<4x256xf32>
    %1013 = vector.extract_strided_slice %983 {offsets = [7, 0], sizes = [1, 256], strides = [1, 1]} : vector<8x256xf32> to vector<1x256xf32>
    %1014 = vector.broadcast %1013 : vector<1x256xf32> to vector<4x256xf32>
    %1015 = arith.mulf %1014, %982 : vector<4x256xf32>
    %1016 = arith.addf %1012, %1015 : vector<4x256xf32>
    %c0_444 = arith.constant 0 : index
    %c0_445 = arith.constant 0 : index
    %c0_446 = arith.constant 0 : index
    %1017 = vector.load %arg7[%c0_444, %c0_445, %c0_446] : memref<1x16x256xf32, #tpu.memory_space<vmem>>, vector<1x4x256xf32>
    %1018 = vector.shape_cast %1017 : vector<1x4x256xf32> to vector<4x256xf32>
    %1019 = vector.shape_cast %1016 : vector<4x256xf32> to vector<1x4x256xf32>
    tpu.vector_store %arg7[%c0_444, %c0_445, %c0_446], %1019 {strides = array<i32>} : memref<1x16x256xf32, #tpu.memory_space<vmem>>, vector<1x4x256xf32>,
    %1020 = vector.extract_strided_slice %7 {offsets = [8, 0], sizes = [8, 256], strides = [1, 1]} : vector<32x256xf32> to vector<8x256xf32>
    %cst_447 = arith.constant dense<0.000000e+00> : vector<4x256xf32>
    %1021 = tpu.matmul %19, %1020, %cst_447 {dimension_numbers = #tpu.dot_dimension_numbers<[1], [0], [0], [1], [0, 0, 1, 1], [], []>} : vector<4x8xf32>, vector<8x256xf32>, vector<4x256xf32> -> vector<4x256xf32>
    %1022 = vector.extract_strided_slice %1020 {offsets = [0, 0], sizes = [1, 256], strides = [1, 1]} : vector<8x256xf32> to vector<1x256xf32>
    %1023 = vector.broadcast %1022 : vector<1x256xf32> to vector<4x256xf32>
    %1024 = arith.mulf %1023, %954 : vector<4x256xf32>
    %1025 = arith.addf %1021, %1024 : vector<4x256xf32>
    %1026 = vector.extract_strided_slice %1020 {offsets = [1, 0], sizes = [1, 256], strides = [1, 1]} : vector<8x256xf32> to vector<1x256xf32>
    %1027 = vector.broadcast %1026 : vector<1x256xf32> to vector<4x256xf32>
    %1028 = arith.mulf %1027, %958 : vector<4x256xf32>
    %1029 = arith.addf %1025, %1028 : vector<4x256xf32>
    %1030 = vector.extract_strided_slice %1020 {offsets = [2, 0], sizes = [1, 256], strides = [1, 1]} : vector<8x256xf32> to vector<1x256xf32>
    %1031 = vector.broadcast %1030 : vector<1x256xf32> to vector<4x256xf32>
    %1032 = arith.mulf %1031, %962 : vector<4x256xf32>
    %1033 = arith.addf %1029, %1032 : vector<4x256xf32>
    %1034 = vector.extract_strided_slice %1020 {offsets = [3, 0], sizes = [1, 256], strides = [1, 1]} : vector<8x256xf32> to vector<1x256xf32>
    %1035 = vector.broadcast %1034 : vector<1x256xf32> to vector<4x256xf32>
    %1036 = arith.mulf %1035, %966 : vector<4x256xf32>
    %1037 = arith.addf %1033, %1036 : vector<4x256xf32>
    %1038 = vector.extract_strided_slice %1020 {offsets = [4, 0], sizes = [1, 256], strides = [1, 1]} : vector<8x256xf32> to vector<1x256xf32>
    %1039 = vector.broadcast %1038 : vector<1x256xf32> to vector<4x256xf32>
    %1040 = arith.mulf %1039, %970 : vector<4x256xf32>
    %1041 = arith.addf %1037, %1040 : vector<4x256xf32>
    %1042 = vector.extract_strided_slice %1020 {offsets = [5, 0], sizes = [1, 256], strides = [1, 1]} : vector<8x256xf32> to vector<1x256xf32>
    %1043 = vector.broadcast %1042 : vector<1x256xf32> to vector<4x256xf32>
    %1044 = arith.mulf %1043, %974 : vector<4x256xf32>
    %1045 = arith.addf %1041, %1044 : vector<4x256xf32>
    %1046 = vector.extract_strided_slice %1020 {offsets = [6, 0], sizes = [1, 256], strides = [1, 1]} : vector<8x256xf32> to vector<1x256xf32>
    %1047 = vector.broadcast %1046 : vector<1x256xf32> to vector<4x256xf32>
    %1048 = arith.mulf %1047, %978 : vector<4x256xf32>
    %1049 = arith.addf %1045, %1048 : vector<4x256xf32>
    %1050 = vector.extract_strided_slice %1020 {offsets = [7, 0], sizes = [1, 256], strides = [1, 1]} : vector<8x256xf32> to vector<1x256xf32>
    %1051 = vector.broadcast %1050 : vector<1x256xf32> to vector<4x256xf32>
    %1052 = arith.mulf %1051, %982 : vector<4x256xf32>
    %1053 = arith.addf %1049, %1052 : vector<4x256xf32>
    %c0_448 = arith.constant 0 : index
    %c4_449 = arith.constant 4 : index
    %c0_450 = arith.constant 0 : index
    %1054 = vector.load %arg7[%c0_448, %c4_449, %c0_450] : memref<1x16x256xf32, #tpu.memory_space<vmem>>, vector<1x4x256xf32>
    %1055 = vector.shape_cast %1054 : vector<1x4x256xf32> to vector<4x256xf32>
    %1056 = vector.shape_cast %1053 : vector<4x256xf32> to vector<1x4x256xf32>
    tpu.vector_store %arg7[%c0_448, %c4_449, %c0_450], %1056 {strides = array<i32>} : memref<1x16x256xf32, #tpu.memory_space<vmem>>, vector<1x4x256xf32>,
    %1057 = vector.extract_strided_slice %7 {offsets = [16, 0], sizes = [8, 256], strides = [1, 1]} : vector<32x256xf32> to vector<8x256xf32>
    %cst_451 = arith.constant dense<0.000000e+00> : vector<4x256xf32>
    %1058 = tpu.matmul %19, %1057, %cst_451 {dimension_numbers = #tpu.dot_dimension_numbers<[1], [0], [0], [1], [0, 0, 1, 1], [], []>} : vector<4x8xf32>, vector<8x256xf32>, vector<4x256xf32> -> vector<4x256xf32>
    %1059 = vector.extract_strided_slice %1057 {offsets = [0, 0], sizes = [1, 256], strides = [1, 1]} : vector<8x256xf32> to vector<1x256xf32>
    %1060 = vector.broadcast %1059 : vector<1x256xf32> to vector<4x256xf32>
    %1061 = arith.mulf %1060, %954 : vector<4x256xf32>
    %1062 = arith.addf %1058, %1061 : vector<4x256xf32>
    %1063 = vector.extract_strided_slice %1057 {offsets = [1, 0], sizes = [1, 256], strides = [1, 1]} : vector<8x256xf32> to vector<1x256xf32>
    %1064 = vector.broadcast %1063 : vector<1x256xf32> to vector<4x256xf32>
    %1065 = arith.mulf %1064, %958 : vector<4x256xf32>
    %1066 = arith.addf %1062, %1065 : vector<4x256xf32>
    %1067 = vector.extract_strided_slice %1057 {offsets = [2, 0], sizes = [1, 256], strides = [1, 1]} : vector<8x256xf32> to vector<1x256xf32>
    %1068 = vector.broadcast %1067 : vector<1x256xf32> to vector<4x256xf32>
    %1069 = arith.mulf %1068, %962 : vector<4x256xf32>
    %1070 = arith.addf %1066, %1069 : vector<4x256xf32>
    %1071 = vector.extract_strided_slice %1057 {offsets = [3, 0], sizes = [1, 256], strides = [1, 1]} : vector<8x256xf32> to vector<1x256xf32>
    %1072 = vector.broadcast %1071 : vector<1x256xf32> to vector<4x256xf32>
    %1073 = arith.mulf %1072, %966 : vector<4x256xf32>
    %1074 = arith.addf %1070, %1073 : vector<4x256xf32>
    %1075 = vector.extract_strided_slice %1057 {offsets = [4, 0], sizes = [1, 256], strides = [1, 1]} : vector<8x256xf32> to vector<1x256xf32>
    %1076 = vector.broadcast %1075 : vector<1x256xf32> to vector<4x256xf32>
    %1077 = arith.mulf %1076, %970 : vector<4x256xf32>
    %1078 = arith.addf %1074, %1077 : vector<4x256xf32>
    %1079 = vector.extract_strided_slice %1057 {offsets = [5, 0], sizes = [1, 256], strides = [1, 1]} : vector<8x256xf32> to vector<1x256xf32>
    %1080 = vector.broadcast %1079 : vector<1x256xf32> to vector<4x256xf32>
    %1081 = arith.mulf %1080, %974 : vector<4x256xf32>
    %1082 = arith.addf %1078, %1081 : vector<4x256xf32>
    %1083 = vector.extract_strided_slice %1057 {offsets = [6, 0], sizes = [1, 256], strides = [1, 1]} : vector<8x256xf32> to vector<1x256xf32>
    %1084 = vector.broadcast %1083 : vector<1x256xf32> to vector<4x256xf32>
    %1085 = arith.mulf %1084, %978 : vector<4x256xf32>
    %1086 = arith.addf %1082, %1085 : vector<4x256xf32>
    %1087 = vector.extract_strided_slice %1057 {offsets = [7, 0], sizes = [1, 256], strides = [1, 1]} : vector<8x256xf32> to vector<1x256xf32>
    %1088 = vector.broadcast %1087 : vector<1x256xf32> to vector<4x256xf32>
    %1089 = arith.mulf %1088, %982 : vector<4x256xf32>
    %1090 = arith.addf %1086, %1089 : vector<4x256xf32>
    %c0_452 = arith.constant 0 : index
    %c8_453 = arith.constant 8 : index
    %c0_454 = arith.constant 0 : index
    %1091 = vector.load %arg7[%c0_452, %c8_453, %c0_454] : memref<1x16x256xf32, #tpu.memory_space<vmem>>, vector<1x4x256xf32>
    %1092 = vector.shape_cast %1091 : vector<1x4x256xf32> to vector<4x256xf32>
    %1093 = vector.shape_cast %1090 : vector<4x256xf32> to vector<1x4x256xf32>
    tpu.vector_store %arg7[%c0_452, %c8_453, %c0_454], %1093 {strides = array<i32>} : memref<1x16x256xf32, #tpu.memory_space<vmem>>, vector<1x4x256xf32>,
    %1094 = vector.extract_strided_slice %7 {offsets = [24, 0], sizes = [8, 256], strides = [1, 1]} : vector<32x256xf32> to vector<8x256xf32>
    %cst_455 = arith.constant dense<0.000000e+00> : vector<4x256xf32>
    %1095 = tpu.matmul %19, %1094, %cst_455 {dimension_numbers = #tpu.dot_dimension_numbers<[1], [0], [0], [1], [0, 0, 1, 1], [], []>} : vector<4x8xf32>, vector<8x256xf32>, vector<4x256xf32> -> vector<4x256xf32>
    %1096 = vector.extract_strided_slice %1094 {offsets = [0, 0], sizes = [1, 256], strides = [1, 1]} : vector<8x256xf32> to vector<1x256xf32>
    %1097 = vector.broadcast %1096 : vector<1x256xf32> to vector<4x256xf32>
    %1098 = arith.mulf %1097, %954 : vector<4x256xf32>
    %1099 = arith.addf %1095, %1098 : vector<4x256xf32>
    %1100 = vector.extract_strided_slice %1094 {offsets = [1, 0], sizes = [1, 256], strides = [1, 1]} : vector<8x256xf32> to vector<1x256xf32>
    %1101 = vector.broadcast %1100 : vector<1x256xf32> to vector<4x256xf32>
    %1102 = arith.mulf %1101, %958 : vector<4x256xf32>
    %1103 = arith.addf %1099, %1102 : vector<4x256xf32>
    %1104 = vector.extract_strided_slice %1094 {offsets = [2, 0], sizes = [1, 256], strides = [1, 1]} : vector<8x256xf32> to vector<1x256xf32>
    %1105 = vector.broadcast %1104 : vector<1x256xf32> to vector<4x256xf32>
    %1106 = arith.mulf %1105, %962 : vector<4x256xf32>
    %1107 = arith.addf %1103, %1106 : vector<4x256xf32>
    %1108 = vector.extract_strided_slice %1094 {offsets = [3, 0], sizes = [1, 256], strides = [1, 1]} : vector<8x256xf32> to vector<1x256xf32>
    %1109 = vector.broadcast %1108 : vector<1x256xf32> to vector<4x256xf32>
    %1110 = arith.mulf %1109, %966 : vector<4x256xf32>
    %1111 = arith.addf %1107, %1110 : vector<4x256xf32>
    %1112 = vector.extract_strided_slice %1094 {offsets = [4, 0], sizes = [1, 256], strides = [1, 1]} : vector<8x256xf32> to vector<1x256xf32>
    %1113 = vector.broadcast %1112 : vector<1x256xf32> to vector<4x256xf32>
    %1114 = arith.mulf %1113, %970 : vector<4x256xf32>
    %1115 = arith.addf %1111, %1114 : vector<4x256xf32>
    %1116 = vector.extract_strided_slice %1094 {offsets = [5, 0], sizes = [1, 256], strides = [1, 1]} : vector<8x256xf32> to vector<1x256xf32>
    %1117 = vector.broadcast %1116 : vector<1x256xf32> to vector<4x256xf32>
    %1118 = arith.mulf %1117, %974 : vector<4x256xf32>
    %1119 = arith.addf %1115, %1118 : vector<4x256xf32>
    %1120 = vector.extract_strided_slice %1094 {offsets = [6, 0], sizes = [1, 256], strides = [1, 1]} : vector<8x256xf32> to vector<1x256xf32>
    %1121 = vector.broadcast %1120 : vector<1x256xf32> to vector<4x256xf32>
    %1122 = arith.mulf %1121, %978 : vector<4x256xf32>
    %1123 = arith.addf %1119, %1122 : vector<4x256xf32>
    %1124 = vector.extract_strided_slice %1094 {offsets = [7, 0], sizes = [1, 256], strides = [1, 1]} : vector<8x256xf32> to vector<1x256xf32>
    %1125 = vector.broadcast %1124 : vector<1x256xf32> to vector<4x256xf32>
    %1126 = arith.mulf %1125, %982 : vector<4x256xf32>
    %1127 = arith.addf %1123, %1126 : vector<4x256xf32>
    %c0_456 = arith.constant 0 : index
    %c12_457 = arith.constant 12 : index
    %c0_458 = arith.constant 0 : index
    %1128 = vector.load %arg7[%c0_456, %c12_457, %c0_458] : memref<1x16x256xf32, #tpu.memory_space<vmem>>, vector<1x4x256xf32>
    %1129 = vector.shape_cast %1128 : vector<1x4x256xf32> to vector<4x256xf32>
    %1130 = vector.shape_cast %1127 : vector<4x256xf32> to vector<1x4x256xf32>
    tpu.vector_store %arg7[%c0_456, %c12_457, %c0_458], %1130 {strides = array<i32>} : memref<1x16x256xf32, #tpu.memory_space<vmem>>, vector<1x4x256xf32>,
    return
  }
  func.func @transform_0(%arg0: i32) -> (i32, i32, i32) {
    %c0_i32 = arith.constant 0 : i32
    %c0_i32_0 = arith.constant 0 : i32
    %c0_i32_1 = arith.constant 0 : i32
    return %arg0, %c0_i32, %c0_i32_0 : i32, i32, i32
  }
  func.func @transform_1(%arg0: i32) -> (i32, i32) {
    %c0_i32 = arith.constant 0 : i32
    %c0_i32_0 = arith.constant 0 : i32
    %c0_i32_1 = arith.constant 0 : i32
    return %c0_i32, %c0_i32_0 : i32, i32
  }
  func.func @transform_2(%arg0: i32) -> (i32, i32) {
    %c0_i32 = arith.constant 0 : i32
    %c0_i32_0 = arith.constant 0 : i32
    %c0_i32_1 = arith.constant 0 : i32
    return %c0_i32, %c0_i32_0 : i32, i32
  }
  func.func @transform_3(%arg0: i32) -> (i32, i32) {
    %c0_i32 = arith.constant 0 : i32
    %c0_i32_0 = arith.constant 0 : i32
    %c0_i32_1 = arith.constant 0 : i32
    return %c0_i32, %c0_i32_0 : i32, i32
  }
  func.func @transform_4(%arg0: i32) -> (i32, i32) {
    %c0_i32 = arith.constant 0 : i32
    %c0_i32_0 = arith.constant 0 : i32
    %c0_i32_1 = arith.constant 0 : i32
    return %c0_i32, %c0_i32_0 : i32, i32
  }
  func.func @transform_5(%arg0: i32) -> i32 {
    %c0_i32 = arith.constant 0 : i32
    %c0_i32_0 = arith.constant 0 : i32
    return %c0_i32 : i32
  }
  func.func @transform_6(%arg0: i32) -> (i32, i32, i32) {
    %c0_i32 = arith.constant 0 : i32
    %c0_i32_0 = arith.constant 0 : i32
    %c0_i32_1 = arith.constant 0 : i32
    return %arg0, %c0_i32, %c0_i32_0 : i32, i32, i32
  }
}

</mosaic_0001>

<llo_original>
// kernel: tpu_custom_call.1
$region0: #{tpu_custom_call.1}
  #allocation0 [shape = 'u32[]', space=smem, size = 0x4, offset = 0x4, fixed_abs, tag = 'smem constant byte address 0x4 - core index']
  #allocation1 [shape = 'u32[144,128]{1,0:T(1,128)}', space=vmem, size = 0x12000, scoped, tag = 'internal scratch']
  %s0 = inlined_call_operand.vmem [shape: f32[2,16,256], index: 0, kind: input, shape index: {}]
  %s1 = inlined_call_operand.vmem [shape: f32[44,16], index: 1, kind: input, shape index: {}]
  %s2 = inlined_call_operand.vmem [shape: f32[44,1], index: 2, kind: input, shape index: {}]
  %s3 = inlined_call_operand.hbm [shape: f32[25,256], index: 3, kind: input, shape index: {}]
  %s4 = inlined_call_operand.vmem [shape: f32[8,25], index: 4, kind: input, shape index: {}]
  %s5 = inlined_call_operand.vmem [shape: f32[8], index: 5, kind: input, shape index: {}]
  %s6 = inlined_call_operand.hbm [shape: f32[2,16,256], index: 6, kind: output, shape index: {}]
  %s7 = sld [smem:[#allocation0]]
  $region69: #{tpu_custom_call.1} parent=0
    _
  %s9 = ssub.s32 1, %s7
  %s10 = scalar_select 0, %s9, %s7
  $region1: #{tpu_custom_call.1} parent=0
    #allocation2 [shape = 'u8[32768]{0}', space=vmem, size = 0x8000, scoped, tag = 'input window, operand 3, single buffered']
    #allocation3 [shape = 's32[2]{0}', space=sflag, size = 0x8, scoped, tag = 'scoped memory for tpu_custom_call.1']
    #allocation4 [shape = 's32[2]{0}', space=sflag, size = 0x8, scoped, tag = 'scoped memory for tpu_custom_call.1']
    #allocation5 [shape = 's32[2]{0}', space=sflag, size = 0x8, scoped, tag = 'scoped memory for tpu_custom_call.1']
    #allocation6 [shape = 'u8[4096]{0}', space=smem, size = 0x1000, scoped, tag = 'input window, operand 4, single buffered']
    #allocation7 [shape = 'u8[512]{0}', space=smem, size = 0x200, scoped, tag = 'input window, operand 5, single buffered']
    #allocation8 [shape = 's32[1]{0}', space=sflag, size = 0x4, scoped, tag = 'scoped memory for tpu_custom_call.1']
    #allocation9 [shape = 'u8[32768]{0}', space=vmem, size = 0x8000, scoped, tag = 'output window, operand 0']
    %11 = vsyncpa [#allocation3], 0
    %12 = vsyncpa [#allocation5], 0
    %13 = vsyncpa [#allocation8], 0
    %14 = vsyncpa [#allocation4], 0
    %s15 = scalar_lea.sflag [#allocation4], 1
    %16 = vsyncpa %s15, 0
    loop: start=0, step=1, limit=4
    $region2: #{tpu_custom_call.1} parent=1 // loop_pre_header
      _
    $region3: #{tpu_custom_call.1} parent=1 // loop_header
      %s18 = sphi 0, %s22
      %p19 = scmp.ge.s32.totalorder %s18, 4
      %s28 = sphi 0, %s30
      %s31 = sphi 0, %s28
      %s32 = sphi 0, %s31
      %s48 = sphi 0, %s32
      %s52 = sphi 0, %s52
      %s54 = sphi 0, %s52
      %s55 = sphi 0, %s54
      %s69 = sphi 0, %s55
      %s73 = sphi 0, %s73
      %s75 = sphi 0, %s73
      %s76 = sphi 0, %s75
      %s90 = sphi 0, %s76
      %s94 = sphi 0, %s94
      %s96 = sphi 0, %s94
      %s97 = sphi 0, %s96
      %s111 = sphi 0, %s97
      %s115 = sphi 0, %s115
      %s117 = sphi 0, %s115
      %s118 = sphi 0, %s117
      %s132 = sphi 0, %s118
      %s136 = sphi 0, %s136
      %s138 = sphi 0, %s136
      %s139 = sphi 0, %s138
      %s153 = sphi 0, %s139
      %s159 = sphi 0, %s161
      %s162 = sphi 0, %s159
      %s163 = sphi 0, %s162
      %s179 = sphi 0, %s163
    $region4: #{tpu_custom_call.1} parent=1 // loop_header_branch
      %21 = sbr.rel (%p19) target = $region8
    $region5: #{tpu_custom_call.1} parent=1 // loop_body
      %s23 = ssub.s32 %s18, 1
      %s24 = ssub.s32 %s18, 2
      %s25 = sadd.s32 %s18, 1
      %s26 = ssub.s32 %s18, %s25
      %p27 = scmp.eq.s32.totalorder %s26, 0
      %s29 = sadd.s32 %s28, 1
      %s30 = scalar_select %p27, %s28, %s29
      %p33 = pneg %p27
      %p34 = scmp.eq.s32.totalorder %s18, 1
      %p35 = por %p33, %p34
      %p36 = scmp.ne.s32.totalorder %s28, %s31
      %p37 = scmp.eq.s32.totalorder %s18, 0
      %p38 = por %p36, %p37
      %p39 = scmp.ne.s32.totalorder %s28, %s31
      %p40 = scmp.eq.s32.totalorder %s23, 1
      %p41 = por %p39, %p40
      %p42 = scmp.ne.s32.totalorder %s31, %s32
      %p43 = scmp.eq.s32.totalorder %s23, 0
      %p44 = por %p42, %p43
      %p45 = scmp.ne.s32.totalorder %s31, %s32
      %p46 = scmp.eq.s32.totalorder %s24, 1
      %p47 = por %p45, %p46
      %p49 = scmp.ne.s32.totalorder %s32, %s48
      %p50 = scmp.eq.s32.totalorder %s24, 0
      %p51 = por %p49, %p50
      %s53 = sadd.s32 %s52, 1
      %p56 = scmp.eq.s32.totalorder %s18, 1
      %p57 = scmp.ne.s32.totalorder %s52, %s54
      %p58 = scmp.eq.s32.totalorder %s18, 0
      %p59 = por %p57, %p58
      %p60 = scmp.ne.s32.totalorder %s52, %s54
      %p61 = scmp.eq.s32.totalorder %s23, 1
      %p62 = por %p60, %p61
      %p63 = scmp.ne.s32.totalorder %s54, %s55
      %p64 = scmp.eq.s32.totalorder %s23, 0
      %p65 = por %p63, %p64
      %p66 = scmp.ne.s32.totalorder %s54, %s55
      %p67 = scmp.eq.s32.totalorder %s24, 1
      %p68 = por %p66, %p67
      %p70 = scmp.ne.s32.totalorder %s55, %s69
      %p71 = scmp.eq.s32.totalorder %s24, 0
      %p72 = por %p70, %p71
      %s74 = sadd.s32 %s73, 1
      %p77 = scmp.eq.s32.totalorder %s18, 1
      %p78 = scmp.ne.s32.totalorder %s73, %s75
      %p79 = scmp.eq.s32.totalorder %s18, 0
      %p80 = por %p78, %p79
      %p81 = scmp.ne.s32.totalorder %s73, %s75
      %p82 = scmp.eq.s32.totalorder %s23, 1
      %p83 = por %p81, %p82
      %p84 = scmp.ne.s32.totalorder %s75, %s76
      %p85 = scmp.eq.s32.totalorder %s23, 0
      %p86 = por %p84, %p85
      %p87 = scmp.ne.s32.totalorder %s75, %s76
      %p88 = scmp.eq.s32.totalorder %s24, 1
      %p89 = por %p87, %p88
      %p91 = scmp.ne.s32.totalorder %s76, %s90
      %p92 = scmp.eq.s32.totalorder %s24, 0
      %p93 = por %p91, %p92
      %s95 = sadd.s32 %s94, 1
      %p98 = scmp.eq.s32.totalorder %s18, 1
      %p99 = scmp.ne.s32.totalorder %s94, %s96
      %p100 = scmp.eq.s32.totalorder %s18, 0
      %p101 = por %p99, %p100
      %p102 = scmp.ne.s32.totalorder %s94, %s96
      %p103 = scmp.eq.s32.totalorder %s23, 1
      %p104 = por %p102, %p103
      %p105 = scmp.ne.s32.totalorder %s96, %s97
      %p106 = scmp.eq.s32.totalorder %s23, 0
      %p107 = por %p105, %p106
      %p108 = scmp.ne.s32.totalorder %s96, %s97
      %p109 = scmp.eq.s32.totalorder %s24, 1
      %p110 = por %p108, %p109
      %p112 = scmp.ne.s32.totalorder %s97, %s111
      %p113 = scmp.eq.s32.totalorder %s24, 0
      %p114 = por %p112, %p113
      %s116 = sadd.s32 %s115, 1
      %p119 = scmp.eq.s32.totalorder %s18, 1
      %p120 = scmp.ne.s32.totalorder %s115, %s117
      %p121 = scmp.eq.s32.totalorder %s18, 0
      %p122 = por %p120, %p121
      %p123 = scmp.ne.s32.totalorder %s115, %s117
      %p124 = scmp.eq.s32.totalorder %s23, 1
      %p125 = por %p123, %p124
      %p126 = scmp.ne.s32.totalorder %s117, %s118
      %p127 = scmp.eq.s32.totalorder %s23, 0
      %p128 = por %p126, %p127
      %p129 = scmp.ne.s32.totalorder %s117, %s118
      %p130 = scmp.eq.s32.totalorder %s24, 1
      %p131 = por %p129, %p130
      %p133 = scmp.ne.s32.totalorder %s118, %s132
      %p134 = scmp.eq.s32.totalorder %s24, 0
      %p135 = por %p133, %p134
      %s137 = sadd.s32 %s136, 1
      %p140 = scmp.eq.s32.totalorder %s18, 1
      %p141 = scmp.ne.s32.totalorder %s136, %s138
      %p142 = scmp.eq.s32.totalorder %s18, 0
      %p143 = por %p141, %p142
      %p144 = scmp.ne.s32.totalorder %s136, %s138
      %p145 = scmp.eq.s32.totalorder %s23, 1
      %p146 = por %p144, %p145
      %p147 = scmp.ne.s32.totalorder %s138, %s139
      %p148 = scmp.eq.s32.totalorder %s23, 0
      %p149 = por %p147, %p148
      %p150 = scmp.ne.s32.totalorder %s138, %s139
      %p151 = scmp.eq.s32.totalorder %s24, 1
      %p152 = por %p150, %p151
      %p154 = scmp.ne.s32.totalorder %s139, %s153
      %p155 = scmp.eq.s32.totalorder %s24, 0
      %p156 = por %p154, %p155
      %s157 = ssub.s32 %s18, %s25
      %p158 = scmp.eq.s32.totalorder %s157, 0
      %s160 = sadd.s32 %s159, 1
      %s161 = scalar_select %p158, %s159, %s160
      %p164 = pneg %p158
      %p165 = scmp.eq.s32.totalorder %s18, 1
      %p166 = por %p164, %p165
      %p167 = scmp.ne.s32.totalorder %s159, %s162
      %p168 = scmp.eq.s32.totalorder %s18, 0
      %p169 = por %p167, %p168
      %p170 = scmp.ne.s32.totalorder %s159, %s162
      %p171 = scmp.eq.s32.totalorder %s23, 1
      %p172 = por %p170, %p171
      %p173 = scmp.ne.s32.totalorder %s162, %s163
      %p174 = scmp.eq.s32.totalorder %s23, 0
      %p175 = por %p173, %p174
      %p176 = scmp.ne.s32.totalorder %s162, %s163
      %p177 = scmp.eq.s32.totalorder %s24, 1
      %p178 = por %p176, %p177
      %p180 = scmp.ne.s32.totalorder %s163, %s179
      %p181 = scmp.eq.s32.totalorder %s24, 0
      %p182 = por %p180, %p181
      %p183 = scmp.le.s32.totalorder 1, %s18
      %p184 = scmp.lt.s32.totalorder %s18, 3
      %p185 = pnand %p183, %p184
      %p186 = pneg %p185
      // Predicated region
      $region9: #{tpu_custom_call.1} parent=5 // pred_check
        _
      $region10: #{tpu_custom_call.1} parent=5 // pred_check_branch
        %188 = sbr.rel (%p185) target = $region12
      $region11: #{tpu_custom_call.1} parent=5 // pred_region
        %s189 = ssub.s32 %s18, 1
        // Predicated region
        $region13: #{tpu_custom_call.1} parent=11 // pred_check
          %p190 = pneg %p65
        $region14: #{tpu_custom_call.1} parent=11 // pred_check_branch
          %192 = sbr.rel (%p190) target = $region16
        $region15: #{tpu_custom_call.1} parent=11 // pred_region
          _
        $region16: #{tpu_custom_call.1} parent=11 // pred_fallthru
          _
        // Predicated region
        $region17: #{tpu_custom_call.1} parent=11 // pred_check
          %p193 = pneg %p86
        $region18: #{tpu_custom_call.1} parent=11 // pred_check_branch
          %195 = sbr.rel (%p193) target = $region20
        $region19: #{tpu_custom_call.1} parent=11 // pred_region
          _
        $region20: #{tpu_custom_call.1} parent=11 // pred_fallthru
          _
        // Predicated region
        $region21: #{tpu_custom_call.1} parent=11 // pred_check
          %p196 = pneg %p107
        $region22: #{tpu_custom_call.1} parent=11 // pred_check_branch
          %198 = sbr.rel (%p196) target = $region24
        $region23: #{tpu_custom_call.1} parent=11 // pred_region
          %s200 = ssub.s32 1024, 1024
          %201 = vsyncadd [#allocation3], %s200
          %s202 = sshll.u32 [#allocation2], 4
          %s203 = int_to_ptr.vmem [resolvable:$true] %s202
          %208 = dma.hbm_to_vmem [thread:$0]  %s3, 1024, %s203, [#allocation3], 256, 256, 16
        $region24: #{tpu_custom_call.1} parent=11 // pred_fallthru
          _
        // Predicated region
        $region25: #{tpu_custom_call.1} parent=11 // pred_check
          %p209 = pneg %p128
        $region26: #{tpu_custom_call.1} parent=11 // pred_check_branch
          %211 = sbr.rel (%p209) target = $region28
        $region27: #{tpu_custom_call.1} parent=11 // pred_region
          %s213 = ssub.s32 128, 128
          %214 = vsyncadd [#allocation5], %s213
          %s216 = sshll.u32 %s4, 4
          %s217 = int_to_ptr.vmem [resolvable:$true] %s216
          %219 = dma.vmem_to_smem %s217, 128, [#allocation6], [#allocation5]
        $region28: #{tpu_custom_call.1} parent=11 // pred_fallthru
          _
        // Predicated region
        $region29: #{tpu_custom_call.1} parent=11 // pred_check
          %p220 = pneg %p149
        $region30: #{tpu_custom_call.1} parent=11 // pred_check_branch
          %222 = sbr.rel (%p220) target = $region32
        $region31: #{tpu_custom_call.1} parent=11 // pred_region
          %s224 = ssub.s32 16, 16
          %225 = vsyncadd [#allocation8], %s224
          %s227 = sshll.u32 %s5, 4
          %s228 = int_to_ptr.vmem [resolvable:$true] %s227
          %230 = dma.vmem_to_smem %s228, 16, [#allocation7], [#allocation8]
        $region32: #{tpu_custom_call.1} parent=11 // pred_fallthru
          _
      $region12: #{tpu_custom_call.1} parent=5 // pred_fallthru
        _
      %p231 = scmp.lt.s32.totalorder %s18, 2
      // Predicated region
      $region33: #{tpu_custom_call.1} parent=5 // pred_check
        %p232 = pneg %p231
      $region34: #{tpu_custom_call.1} parent=5 // pred_check_branch
        %234 = sbr.rel (%p232) target = $region36
      $region35: #{tpu_custom_call.1} parent=5 // pred_region
        // Predicated region
        $region37: #{tpu_custom_call.1} parent=35 // pred_check
          %p235 = pneg %p38
        $region38: #{tpu_custom_call.1} parent=35 // pred_check_branch
          %237 = sbr.rel (%p235) target = $region40
        $region39: #{tpu_custom_call.1} parent=35 // pred_region
          %p238 = scmp.lt.s32.totalorder %s18, 1
          %s239 = scalar_select %p238, %s18, 1
          %s240 = smul.addr %s239, 4
          %s241 = smul.addr %s240, 8
          %s242 = scalar_lea.vmem %s0, %s241
        $region40: #{tpu_custom_call.1} parent=35 // pred_fallthru
          _
      $region36: #{tpu_custom_call.1} parent=5 // pred_fallthru
        _
      %p243 = scmp.le.s32.totalorder 1, %s18
      %p244 = scmp.lt.s32.totalorder %s18, 3
      %p245 = pnand %p243, %p244
      %p246 = pneg %p245
      // Predicated region
      $region41: #{tpu_custom_call.1} parent=5 // pred_check
        _
      $region42: #{tpu_custom_call.1} parent=5 // pred_check_branch
        %248 = sbr.rel (%p245) target = $region44
      $region43: #{tpu_custom_call.1} parent=5 // pred_region
        %s249 = ssub.s32 %s18, 1
        // Predicated region
        $region45: #{tpu_custom_call.1} parent=43 // pred_check
          %p250 = pneg %p107
        $region46: #{tpu_custom_call.1} parent=43 // pred_check_branch
          %252 = sbr.rel (%p250) target = $region48
        $region47: #{tpu_custom_call.1} parent=43 // pred_region
          %253 = dma.done [#allocation3], 1024
        $region48: #{tpu_custom_call.1} parent=43 // pred_fallthru
          _
        // Predicated region
        $region49: #{tpu_custom_call.1} parent=43 // pred_check
          %p254 = pneg %p128
        $region50: #{tpu_custom_call.1} parent=43 // pred_check_branch
          %256 = sbr.rel (%p254) target = $region52
        $region51: #{tpu_custom_call.1} parent=43 // pred_region
          %257 = dma.done [#allocation5], 128
        $region52: #{tpu_custom_call.1} parent=43 // pred_fallthru
          _
        // Predicated region
        $region53: #{tpu_custom_call.1} parent=43 // pred_check
          %p258 = pneg %p149
        $region54: #{tpu_custom_call.1} parent=43 // pred_check_branch
          %260 = sbr.rel (%p258) target = $region56
        $region55: #{tpu_custom_call.1} parent=43 // pred_region
          %261 = dma.done [#allocation8], 16
        $region56: #{tpu_custom_call.1} parent=43 // pred_fallthru
          _
        %262 = sfence
        %p263 = scmp.lt.s32.totalorder %s23, 1
        %s264 = scalar_select %p263, %s23, 1
        %s265 = smul.addr %s264, 4
        %s266 = smul.addr %s265, 8
        %s267 = scalar_lea.vmem %s0, %s266
        %p268 = pneg %p44
        %p269 = pneg %p41
        %p270 = pneg %p65
        %p271 = pneg %p62
        %p272 = pneg %p86
        %p273 = pneg %p83
        %p274 = pneg %p107
        %p275 = pneg %p104
        %p276 = pneg %p128
        %p277 = pneg %p125
        %p278 = pneg %p149
        %p279 = pneg %p146
        %p280 = pneg %p175
        %p281 = pneg %p172
        %s282 = sand.u32 %s162, 1
        %s283 = scalar_lea.sflag [#allocation4], %s282
        %s284 = sand.u32 %s162, 1
        %s285 = smul.addr %s284, 32
        %s286 = scalar_lea.vmem [#allocation9], %s285
        %p287 = scmp.lt.s32.totalorder %s23, 1
        %s288 = scalar_select %p287, %s23, 1
        %s289 = smul.addr %s288, 4
        %s290 = smul.addr %s289, 8
        %s291 = scalar_lea.vmem %s0, %s290
        %v292 = vld [vmem:[%s291] sm:$0xff]
        %v293 = vld [vmem:[%s291 + $0x8] sm:$0xff]
        %v294 = vld [vmem:[%s291 + $0x10] sm:$0xff]
        %v295 = vld [vmem:[%s291 + $0x18] sm:$0xff]
        %v296 = vld [vmem:[%s1] sm:$0xff]
        %v297 = vld [vmem:[%s1 + $0x8] sm:$0xff]
        %v298 = vld [vmem:[%s1 + $0x10] sm:$0xff]
        %v299 = vld [vmem:[%s1 + $0x18] sm:$0xff]
        %v300 = vld [vmem:[%s1 + $0x20] sm:$0xff]
        %v301 = vld [vmem:[%s1 + $0x28] sm:$0xf]
        %v302 = vld [vmem:[%s2] sm:$0xff]
        %v303 = vld [vmem:[%s2 + $0x8] sm:$0xff]
        %v304 = vld [vmem:[%s2 + $0x10] sm:$0xff]
        %v305 = vld [vmem:[%s2 + $0x18] sm:$0xff]
        %v306 = vld [vmem:[%s2 + $0x20] sm:$0xff]
        %v307 = vld [vmem:[%s2 + $0x28] sm:$0xf]
        %309 = vset.pattern.permute.xlu0 0
        %310 = vperm.xlu0 %309, %v302
        %v311 = vpop.permute.xlu0 %310
        %314 = vset.pattern.permute.xlu0 0
        %315 = vperm.xlu0 %314, %v303
        %v316 = vpop.permute.xlu0 %315
        %319 = vset.pattern.permute.xlu0 0
        %320 = vperm.xlu0 %319, %v304
        %v321 = vpop.permute.xlu0 %320
        %324 = vset.pattern.permute.xlu0 0
        %325 = vperm.xlu0 %324, %v305
        %v326 = vpop.permute.xlu0 %325
        %329 = vset.pattern.permute.xlu0 0
        %330 = vperm.xlu0 %329, %v306
        %v331 = vpop.permute.xlu0 %330
        %334 = vset.pattern.permute.xlu0 0
        %335 = vperm.xlu0 %334, %v307
        %v336 = vpop.permute.xlu0 %335
        %vm338 = vcmask 130048
        %v340 = vsel %vm338, %v296, 0
        %v343 = vsel %vm338, %v297, 0
        %v346 = vsel %vm338, %v298, 0
        %v349 = vsel %vm338, %v299, 0
        %v352 = vsel %vm338, %v300, 0
        %v355 = vsel %vm338, %v301, 0
        %357 = vmatprep.subr.mxu0 %v293
        %358 = vmatpush1.msra.mxu0 %v292
        %359 = vmatprep.subr.mxu0 %v295
        %360 = vmatpush1.msra.mxu0 %v294
        %361 = vmatprep.subr.mxu0 0.0
        %362 = vmatpush1.msra.mxu0 0.0
        %363 = vmatprep.subr.mxu0 0.0
        %364 = vmatpush1.msra.mxu0 0.0
        %365 = vmatprep.subr.mxu0 0.0
        %366 = vmatpush1.msra.mxu0 0.0
        %367 = vmatprep.subr.mxu0 0.0
        %368 = vmatpush1.msra.mxu0 0.0
        %369 = vmatprep.subr.mxu0 0.0
        %370 = vmatpush1.msra.mxu0 0.0
        %371 = vmatprep.subr.mxu0 0.0
        %372 = vmatpush1.msra.mxu0 0.0
        %373 = vmatprep.subr.mxu0 0.0
        %374 = vmatpush1.msra.mxu0 0.0
        %375 = vmatprep.subr.mxu0 0.0
        %376 = vmatpush1.msra.mxu0 0.0
        %377 = vmatprep.subr.mxu0 0.0
        %378 = vmatpush1.msra.mxu0 0.0
        %379 = vmatprep.subr.mxu0 0.0
        %380 = vmatpush1.msra.mxu0 0.0
        %381 = vmatprep.subr.mxu0 0.0
        %382 = vmatpush1.msra.mxu0 0.0
        %383 = vmatprep.subr.mxu0 0.0
        %384 = vmatpush1.msra.mxu0 0.0
        %385 = vmatprep.subr.mxu0 0.0
        %386 = vmatpush1.msra.mxu0 0.0
        %387 = vmatprep.subr.mxu0 0.0
        %388 = vmatpush1.msra.mxu0 0.0
        %389 = vmatprep.subr.mxu0 0.0
        %390 = vmatpush1.msra.mxu0 0.0
        %391 = vmatprep.subr.mxu0 0.0
        %392 = vmatpush1.msra.mxu0 0.0
        %393 = vmatprep.subr.mxu0 0.0
        %394 = vmatpush1.msra.mxu0 0.0
        %395 = vmatprep.subr.mxu0 0.0
        %396 = vmatpush1.msra.mxu0 0.0
        %397 = vmatprep.subr.mxu0 0.0
        %398 = vmatpush1.msra.mxu0 0.0
        %399 = vmatprep.subr.mxu0 0.0
        %400 = vmatpush1.msra.mxu0 0.0
        %401 = vmatprep.subr.mxu0 0.0
        %402 = vmatpush1.msra.mxu0 0.0
        %403 = vmatprep.subr.mxu0 0.0
        %404 = vmatpush1.msra.mxu0 0.0
        %405 = vmatprep.subr.mxu0 0.0
        %406 = vmatpush1.msra.mxu0 0.0
        %407 = vmatprep.subr.mxu0 0.0
        %408 = vmatpush1.msra.mxu0 0.0
        %409 = vmatprep.subr.mxu0 0.0
        %410 = vmatpush1.msra.mxu0 0.0
        %411 = vmatprep.subr.mxu0 0.0
        %412 = vmatpush1.msra.mxu0 0.0
        %413 = vmatprep.subr.mxu0 0.0
        %414 = vmatpush1.msra.mxu0 0.0
        %415 = vmatprep.subr.mxu0 0.0
        %416 = vmatpush1.msra.mxu0 0.0
        %417 = vmatprep.subr.mxu0 0.0
        %418 = vmatpush1.msra.mxu0 0.0
        %419 = vmatprep.subr.mxu0 0.0
        %420 = vmatpush1.msra.mxu0 0.0
        %421 = vmatprep.mubr.f32.mxu0 0.0
        %422 = vmatmul.mubr.f32.gmra.mrb[0].mxu0 %v340
        %v423 = vpop.f32.mrb[0].mxu0
        %v424 = vadd.f32 %v311, %v423
        %v425 = vpop.f32.mrb[0].mxu0
        %v426 = vadd.f32 %v311, %v425
        %427 = vmatprep.mubr.f32.mxu0 0.0
        %428 = vmatmul.mubr.f32.gmra.mrb[0].mxu0 %v343
        %v429 = vpop.f32.mrb[0].mxu0
        %v430 = vadd.f32 %v316, %v429
        %v431 = vpop.f32.mrb[0].mxu0
        %v432 = vadd.f32 %v316, %v431
        %433 = vmatprep.mubr.f32.mxu0 0.0
        %434 = vmatmul.mubr.f32.gmra.mrb[0].mxu0 %v346
        %v435 = vpop.f32.mrb[0].mxu0
        %v436 = vadd.f32 %v321, %v435
        %v437 = vpop.f32.mrb[0].mxu0
        %v438 = vadd.f32 %v321, %v437
        %439 = vmatprep.mubr.f32.mxu0 0.0
        %440 = vmatmul.mubr.f32.gmra.mrb[0].mxu0 %v349
        %v441 = vpop.f32.mrb[0].mxu0
        %v442 = vadd.f32 %v326, %v441
        %v443 = vpop.f32.mrb[0].mxu0
        %v444 = vadd.f32 %v326, %v443
        %445 = vmatprep.mubr.f32.mxu0 0.0
        %446 = vmatmul.mubr.f32.gmra.mrb[0].mxu0 %v352
        %v447 = vpop.f32.mrb[0].mxu0
        %v448 = vadd.f32 %v331, %v447
        %v449 = vpop.f32.mrb[0].mxu0
        %v450 = vadd.f32 %v331, %v449
        %451 = vmatprep.mubr.f32.mxu0 0.0
        %452 = vmatmul.mubr.f32.gmra.mrb[0].mxu0 %v355
        %v453 = vpop.f32.mrb[0].mxu0
        %v454 = vadd.f32 %v336, %v453
        %v455 = vpop.f32.mrb[0].mxu0
        %v456 = vadd.f32 %v336, %v455
        %457 = vdwg.mxu0
        %v458 = vmax.f32 %v448, %v450
        %459 = vmax.xlane.f32.xlu0 %v458
        %v460 = vpop.xlane.xlu0 %459
        %v461 = vsub.f32 %v448, %v460
        %v462 = vsub.f32 %v450, %v460
        %v463 = vmul.f32 %v461, 1.442695
        %v464 = vpow.pop %v463
        %v465 = vmul.f32 %v462, 1.442695
        %v466 = vpow.pop %v465
        %v467 = vadd.f32 %v464, %v466
        %468 = vadd.xlane.f32.xlu0 %v467
        %v469 = vpop.xlane.xlu0 %468
        %v470 = vrcp.pop %v469
        %v471 = vmul.f32 %v464, %v470
        %v472 = vmul.f32 %v466, %v470
        %473 = vmatprep.subr.mxu0 %v472
        %474 = vmatpush1.xpose.msra.mxu0 %v471
        %475 = vmatprep.subr.mxu0 0.0
        %476 = vmatpush1.xpose.msra.mxu0 0.0
        %477 = vmatprep.subr.mxu0 0.0
        %478 = vmatpush1.xpose.msra.mxu0 0.0
        %479 = vmatprep.subr.mxu0 0.0
        %480 = vmatpush1.xpose.msra.mxu0 0.0
        %481 = vmatprep.subr.mxu0 0.0
        %482 = vmatpush1.xpose.msra.mxu0 0.0
        %483 = vmatprep.subr.mxu0 0.0
        %484 = vmatpush1.xpose.msra.mxu0 0.0
        %485 = vmatprep.subr.mxu0 0.0
        %486 = vmatpush1.xpose.msra.mxu0 0.0
        %487 = vmatprep.subr.mxu0 0.0
        %488 = vmatpush1.xpose.msra.mxu0 0.0
        %489 = vmatprep.subr.mxu0 0.0
        %490 = vmatpush1.xpose.msra.mxu0 0.0
        %491 = vmatprep.subr.mxu0 0.0
        %492 = vmatpush1.xpose.msra.mxu0 0.0
        %493 = vmatprep.subr.mxu0 0.0
        %494 = vmatpush1.xpose.msra.mxu0 0.0
        %495 = vmatprep.subr.mxu0 0.0
        %496 = vmatpush1.xpose.msra.mxu0 0.0
        %497 = vmatprep.subr.mxu0 0.0
        %498 = vmatpush1.xpose.msra.mxu0 0.0
        %499 = vmatprep.subr.mxu0 0.0
        %500 = vmatpush1.xpose.msra.mxu0 0.0
        %501 = vmatprep.subr.mxu0 0.0
        %502 = vmatpush1.xpose.msra.mxu0 0.0
        %503 = vmatprep.subr.mxu0 0.0
        %504 = vmatpush1.xpose.msra.mxu0 0.0
        %505 = vmatprep.subr.mxu0 0.0
        %506 = vmatpush1.xpose.msra.mxu0 0.0
        %507 = vmatprep.subr.mxu0 0.0
        %508 = vmatpush1.xpose.msra.mxu0 0.0
        %509 = vmatprep.subr.mxu0 0.0
        %510 = vmatpush1.xpose.msra.mxu0 0.0
        %511 = vmatprep.subr.mxu0 0.0
        %512 = vmatpush1.xpose.msra.mxu0 0.0
        %513 = vmatprep.subr.mxu0 0.0
        %514 = vmatpush1.xpose.msra.mxu0 0.0
        %515 = vmatprep.subr.mxu0 0.0
        %516 = vmatpush1.xpose.msra.mxu0 0.0
        %517 = vmatprep.subr.mxu0 0.0
        %518 = vmatpush1.xpose.msra.mxu0 0.0
        %519 = vmatprep.subr.mxu0 0.0
        %520 = vmatpush1.xpose.msra.mxu0 0.0
        %521 = vmatprep.subr.mxu0 0.0
        %522 = vmatpush1.xpose.msra.mxu0 0.0
        %523 = vmatprep.subr.mxu0 0.0
        %524 = vmatpush1.xpose.msra.mxu0 0.0
        %525 = vmatprep.subr.mxu0 0.0
        %526 = vmatpush1.xpose.msra.mxu0 0.0
        %527 = vmatprep.subr.mxu0 0.0
        %528 = vmatpush1.xpose.msra.mxu0 0.0
        %529 = vmatprep.subr.mxu0 0.0
        %530 = vmatpush1.xpose.msra.mxu0 0.0
        %531 = vmatprep.subr.mxu0 0.0
        %532 = vmatpush1.xpose.msra.mxu0 0.0
        %533 = vmatprep.subr.mxu0 0.0
        %534 = vmatpush1.xpose.msra.mxu0 0.0
        %535 = vmatprep.subr.mxu0 0.0
        %536 = vmatpush1.xpose.msra.mxu0 0.0
        %537 = vmatprep.mubr.f32.mxu0 %v456
        %538 = vmatmul.mubr.f32.gmra.mrb[0].mxu0 %v454
        %v539 = vpop.f32.mrb[0].mxu0
        %v540 = vadd.f32 0.0, %v539
        %v541 = vpop.f32.mrb[0].mxu0
        %542 = vdwg.mxu0
        %s543 = sld [smem:[#allocation7]]
        %v544 = vstv %s543
        %s545 = sld [smem:[#allocation7 + $0x1]]
        %v546 = vstv %s545
        %s547 = sld [smem:[#allocation7 + $0x2]]
        %v548 = vstv %s547
        %s549 = sld [smem:[#allocation7 + $0x3]]
        %v550 = vstv %s549
        %s551 = sld [smem:[#allocation7 + $0x4]]
        %v552 = vstv %s551
        %s553 = sld [smem:[#allocation7 + $0x5]]
        %v554 = vstv %s553
        %s555 = sld [smem:[#allocation7 + $0x6]]
        %v556 = vstv %s555
        %s557 = sld [smem:[#allocation7 + $0x7]]
        %v558 = vstv %s557
        %560 = vrot.lane.b32.xlu0 %v456, 34
        %v561 = vpop.permute.xlu0 %560
        %564 = vrot.lane.b32.xlu0 %v454, 34
        %v565 = vpop.permute.xlu0 %564
        %vm566 = vcmask 277504
        %v567 = vsel %vm566, %v565, %v561
        %v570 = vsel %vm566, %v561, %v565
        %v571 = vld [vmem:[#allocation2] ss:$8 sm:$0x3]
        %v573 = vlaneseq
        %v574 = vshrl.u32 %v573, 7
        %v575 = vsub.s32 0, %v574
        %v576 = vrot.slane %v571, %v575
        %v577 = vlaneseq
        %v578 = vshrl.u32 %v577, 7
        %v579 = vsub.s32 1, %v578
        %v580 = vrot.slane %v571, %v579
        %v583 = vmul.f32 %v570, %v576
        %v584 = vmul.f32 %v567, %v580
        %s585 = sld [smem:[#allocation6]]
        %v586 = vstv %s585
        %v587 = vmul.f32 %v586, %v583
        %v588 = vmul.f32 %v586, %v584
        %v589 = vadd.f32 %v544, %v587
        %v590 = vadd.f32 %v544, %v588
        %s591 = sld [smem:[#allocation6 + $0x80]]
        %v592 = vstv %s591
        %v593 = vmul.f32 %v592, %v583
        %v594 = vmul.f32 %v592, %v584
        %v595 = vadd.f32 %v546, %v593
        %v596 = vadd.f32 %v546, %v594
        %s597 = sld [smem:[#allocation6 + $0x100]]
        %v598 = vstv %s597
        %v599 = vmul.f32 %v598, %v583
        %v600 = vmul.f32 %v598, %v584
        %v601 = vadd.f32 %v548, %v599
        %v602 = vadd.f32 %v548, %v600
        %s603 = sld [smem:[#allocation6 + $0x180]]
        %v604 = vstv %s603
        %v605 = vmul.f32 %v604, %v583
        %v606 = vmul.f32 %v604, %v584
        %v607 = vadd.f32 %v550, %v605
        %v608 = vadd.f32 %v550, %v606
        %s609 = sld [smem:[#allocation6 + $0x200]]
        %v610 = vstv %s609
        %v611 = vmul.f32 %v610, %v583
        %v612 = vmul.f32 %v610, %v584
        %v613 = vadd.f32 %v552, %v611
        %v614 = vadd.f32 %v552, %v612
        %s615 = sld [smem:[#allocation6 + $0x280]]
        %v616 = vstv %s615
        %v617 = vmul.f32 %v616, %v583
        %v618 = vmul.f32 %v616, %v584
        %v619 = vadd.f32 %v554, %v617
        %v620 = vadd.f32 %v554, %v618
        %s621 = sld [smem:[#allocation6 + $0x300]]
        %v622 = vstv %s621
        %v623 = vmul.f32 %v622, %v583
        %v624 = vmul.f32 %v622, %v584
        %v625 = vadd.f32 %v556, %v623
        %v626 = vadd.f32 %v556, %v624
        %s627 = sld [smem:[#allocation6 + $0x380]]
        %v628 = vstv %s627
        %v629 = vmul.f32 %v628, %v583
        %v630 = vmul.f32 %v628, %v584
        %v631 = vadd.f32 %v558, %v629
        %v632 = vadd.f32 %v558, %v630
        %633 = vrot.lane.b32.xlu0 %v456, 33
        %v634 = vpop.permute.xlu0 %633
        %636 = vrot.lane.b32.xlu0 %v454, 33
        %v637 = vpop.permute.xlu0 %636
        %vm638 = vcmask 269312
        %v639 = vsel %vm638, %v637, %v634
        %v642 = vsel %vm638, %v634, %v637
        %s643 = scalar_lea.vmem [#allocation2], 1
        %v644 = vld [vmem:[%s643] ss:$8 sm:$0x3]
        %v646 = vlaneseq
        %v647 = vshrl.u32 %v646, 7
        %v648 = vsub.s32 0, %v647
        %v649 = vrot.slane %v644, %v648
        %v650 = vlaneseq
        %v651 = vshrl.u32 %v650, 7
        %v652 = vsub.s32 1, %v651
        %v653 = vrot.slane %v644, %v652
        %v656 = vmul.f32 %v642, %v649
        %v657 = vmul.f32 %v639, %v653
        %s658 = sld [smem:[#allocation6 + $0x1]]
        %v659 = vstv %s658
        %v660 = vmul.f32 %v659, %v656
        %v661 = vmul.f32 %v659, %v657
        %v662 = vadd.f32 %v589, %v660
        %v663 = vadd.f32 %v590, %v661
        %s664 = sld [smem:[#allocation6 + $0x81]]
        %v665 = vstv %s664
        %v666 = vmul.f32 %v665, %v656
        %v667 = vmul.f32 %v665, %v657
        %v668 = vadd.f32 %v595, %v666
        %v669 = vadd.f32 %v596, %v667
        %s670 = sld [smem:[#allocation6 + $0x101]]
        %v671 = vstv %s670
        %v672 = vmul.f32 %v671, %v656
        %v673 = vmul.f32 %v671, %v657
        %v674 = vadd.f32 %v601, %v672
        %v675 = vadd.f32 %v602, %v673
        %s676 = sld [smem:[#allocation6 + $0x181]]
        %v677 = vstv %s676
        %v678 = vmul.f32 %v677, %v656
        %v679 = vmul.f32 %v677, %v657
        %v680 = vadd.f32 %v607, %v678
        %v681 = vadd.f32 %v608, %v679
        %s682 = sld [smem:[#allocation6 + $0x201]]
        %v683 = vstv %s682
        %v684 = vmul.f32 %v683, %v656
        %v685 = vmul.f32 %v683, %v657
        %v686 = vadd.f32 %v613, %v684
        %v687 = vadd.f32 %v614, %v685
        %s688 = sld [smem:[#allocation6 + $0x281]]
        %v689 = vstv %s688
        %v690 = vmul.f32 %v689, %v656
        %v691 = vmul.f32 %v689, %v657
        %v692 = vadd.f32 %v619, %v690
        %v693 = vadd.f32 %v620, %v691
        %s694 = sld [smem:[#allocation6 + $0x301]]
        %v695 = vstv %s694
        %v696 = vmul.f32 %v695, %v656
        %v697 = vmul.f32 %v695, %v657
        %v698 = vadd.f32 %v625, %v696
        %v699 = vadd.f32 %v626, %v697
        %s700 = sld [smem:[#allocation6 + $0x381]]
        %v701 = vstv %s700
        %v702 = vmul.f32 %v701, %v656
        %v703 = vmul.f32 %v701, %v657
        %v704 = vadd.f32 %v631, %v702
        %v705 = vadd.f32 %v632, %v703
        %706 = vrot.lane.b32.xlu0 %v456, 32
        %v707 = vpop.permute.xlu0 %706
        %709 = vrot.lane.b32.xlu0 %v454, 32
        %v710 = vpop.permute.xlu0 %709
        %vm711 = vcmask 261120
        %v712 = vsel %vm711, %v710, %v707
        %v715 = vsel %vm711, %v707, %v710
        %s716 = scalar_lea.vmem [#allocation2], 2
        %v717 = vld [vmem:[%s716] ss:$8 sm:$0x3]
        %v719 = vlaneseq
        %v720 = vshrl.u32 %v719, 7
        %v721 = vsub.s32 0, %v720
        %v722 = vrot.slane %v717, %v721
        %v723 = vlaneseq
        %v724 = vshrl.u32 %v723, 7
        %v725 = vsub.s32 1, %v724
        %v726 = vrot.slane %v717, %v725
        %v729 = vmul.f32 %v715, %v722
        %v730 = vmul.f32 %v712, %v726
        %s731 = sld [smem:[#allocation6 + $0x2]]
        %v732 = vstv %s731
        %v733 = vmul.f32 %v732, %v729
        %v734 = vmul.f32 %v732, %v730
        %v735 = vadd.f32 %v662, %v733
        %v736 = vadd.f32 %v663, %v734
        %s737 = sld [smem:[#allocation6 + $0x82]]
        %v738 = vstv %s737
        %v739 = vmul.f32 %v738, %v729
        %v740 = vmul.f32 %v738, %v730
        %v741 = vadd.f32 %v668, %v739
        %v742 = vadd.f32 %v669, %v740
        %s743 = sld [smem:[#allocation6 + $0x102]]
        %v744 = vstv %s743
        %v745 = vmul.f32 %v744, %v729
        %v746 = vmul.f32 %v744, %v730
        %v747 = vadd.f32 %v674, %v745
        %v748 = vadd.f32 %v675, %v746
        %s749 = sld [smem:[#allocation6 + $0x182]]
        %v750 = vstv %s749
        %v751 = vmul.f32 %v750, %v729
        %v752 = vmul.f32 %v750, %v730
        %v753 = vadd.f32 %v680, %v751
        %v754 = vadd.f32 %v681, %v752
        %s755 = sld [smem:[#allocation6 + $0x202]]
        %v756 = vstv %s755
        %v757 = vmul.f32 %v756, %v729
        %v758 = vmul.f32 %v756, %v730
        %v759 = vadd.f32 %v686, %v757
        %v760 = vadd.f32 %v687, %v758
        %s761 = sld [smem:[#allocation6 + $0x282]]
        %v762 = vstv %s761
        %v763 = vmul.f32 %v762, %v729
        %v764 = vmul.f32 %v762, %v730
        %v765 = vadd.f32 %v692, %v763
        %v766 = vadd.f32 %v693, %v764
        %s767 = sld [smem:[#allocation6 + $0x302]]
        %v768 = vstv %s767
        %v769 = vmul.f32 %v768, %v729
        %v770 = vmul.f32 %v768, %v730
        %v771 = vadd.f32 %v698, %v769
        %v772 = vadd.f32 %v699, %v770
        %s773 = sld [smem:[#allocation6 + $0x382]]
        %v774 = vstv %s773
        %v775 = vmul.f32 %v774, %v729
        %v776 = vmul.f32 %v774, %v730
        %v777 = vadd.f32 %v704, %v775
        %v778 = vadd.f32 %v705, %v776
        %779 = vrot.lane.b32.xlu0 %v456, 31
        %v780 = vpop.permute.xlu0 %779
        %782 = vrot.lane.b32.xlu0 %v454, 31
        %v783 = vpop.permute.xlu0 %782
        %vm784 = vcmask 252928
        %v785 = vsel %vm784, %v783, %v780
        %v788 = vsel %vm784, %v780, %v783
        %s789 = scalar_lea.vmem [#allocation2], 3
        %v790 = vld [vmem:[%s789] ss:$8 sm:$0x3]
        %v792 = vlaneseq
        %v793 = vshrl.u32 %v792, 7
        %v794 = vsub.s32 0, %v793
        %v795 = vrot.slane %v790, %v794
        %v796 = vlaneseq
        %v797 = vshrl.u32 %v796, 7
        %v798 = vsub.s32 1, %v797
        %v799 = vrot.slane %v790, %v798
        %v802 = vmul.f32 %v788, %v795
        %v803 = vmul.f32 %v785, %v799
        %s804 = sld [smem:[#allocation6 + $0x3]]
        %v805 = vstv %s804
        %v806 = vmul.f32 %v805, %v802
        %v807 = vmul.f32 %v805, %v803
        %v808 = vadd.f32 %v735, %v806
        %v809 = vadd.f32 %v736, %v807
        %s810 = sld [smem:[#allocation6 + $0x83]]
        %v811 = vstv %s810
        %v812 = vmul.f32 %v811, %v802
        %v813 = vmul.f32 %v811, %v803
        %v814 = vadd.f32 %v741, %v812
        %v815 = vadd.f32 %v742, %v813
        %s816 = sld [smem:[#allocation6 + $0x103]]
        %v817 = vstv %s816
        %v818 = vmul.f32 %v817, %v802
        %v819 = vmul.f32 %v817, %v803
        %v820 = vadd.f32 %v747, %v818
        %v821 = vadd.f32 %v748, %v819
        %s822 = sld [smem:[#allocation6 + $0x183]]
        %v823 = vstv %s822
        %v824 = vmul.f32 %v823, %v802
        %v825 = vmul.f32 %v823, %v803
        %v826 = vadd.f32 %v753, %v824
        %v827 = vadd.f32 %v754, %v825
        %s828 = sld [smem:[#allocation6 + $0x203]]
        %v829 = vstv %s828
        %v830 = vmul.f32 %v829, %v802
        %v831 = vmul.f32 %v829, %v803
        %v832 = vadd.f32 %v759, %v830
        %v833 = vadd.f32 %v760, %v831
        %s834 = sld [smem:[#allocation6 + $0x283]]
        %v835 = vstv %s834
        %v836 = vmul.f32 %v835, %v802
        %v837 = vmul.f32 %v835, %v803
        %v838 = vadd.f32 %v765, %v836
        %v839 = vadd.f32 %v766, %v837
        %s840 = sld [smem:[#allocation6 + $0x303]]
        %v841 = vstv %s840
        %v842 = vmul.f32 %v841, %v802
        %v843 = vmul.f32 %v841, %v803
        %v844 = vadd.f32 %v771, %v842
        %v845 = vadd.f32 %v772, %v843
        %s846 = sld [smem:[#allocation6 + $0x383]]
        %v847 = vstv %s846
        %v848 = vmul.f32 %v847, %v802
        %v849 = vmul.f32 %v847, %v803
        %v850 = vadd.f32 %v777, %v848
        %v851 = vadd.f32 %v778, %v849
        %852 = vrot.lane.b32.xlu0 %v456, 30
        %v853 = vpop.permute.xlu0 %852
        %855 = vrot.lane.b32.xlu0 %v454, 30
        %v856 = vpop.permute.xlu0 %855
        %vm857 = vcmask 244736
        %v858 = vsel %vm857, %v856, %v853
        %v861 = vsel %vm857, %v853, %v856
        %s862 = scalar_lea.vmem [#allocation2], 4
        %v863 = vld [vmem:[%s862] ss:$8 sm:$0x3]
        %v865 = vlaneseq
        %v866 = vshrl.u32 %v865, 7
        %v867 = vsub.s32 0, %v866
        %v868 = vrot.slane %v863, %v867
        %v869 = vlaneseq
        %v870 = vshrl.u32 %v869, 7
        %v871 = vsub.s32 1, %v870
        %v872 = vrot.slane %v863, %v871
        %v875 = vmul.f32 %v861, %v868
        %v876 = vmul.f32 %v858, %v872
        %s877 = sld [smem:[#allocation6 + $0x4]]
        %v878 = vstv %s877
        %v879 = vmul.f32 %v878, %v875
        %v880 = vmul.f32 %v878, %v876
        %v881 = vadd.f32 %v808, %v879
        %v882 = vadd.f32 %v809, %v880
        %s883 = sld [smem:[#allocation6 + $0x84]]
        %v884 = vstv %s883
        %v885 = vmul.f32 %v884, %v875
        %v886 = vmul.f32 %v884, %v876
        %v887 = vadd.f32 %v814, %v885
        %v888 = vadd.f32 %v815, %v886
        %s889 = sld [smem:[#allocation6 + $0x104]]
        %v890 = vstv %s889
        %v891 = vmul.f32 %v890, %v875
        %v892 = vmul.f32 %v890, %v876
        %v893 = vadd.f32 %v820, %v891
        %v894 = vadd.f32 %v821, %v892
        %s895 = sld [smem:[#allocation6 + $0x184]]
        %v896 = vstv %s895
        %v897 = vmul.f32 %v896, %v875
        %v898 = vmul.f32 %v896, %v876
        %v899 = vadd.f32 %v826, %v897
        %v900 = vadd.f32 %v827, %v898
        %s901 = sld [smem:[#allocation6 + $0x204]]
        %v902 = vstv %s901
        %v903 = vmul.f32 %v902, %v875
        %v904 = vmul.f32 %v902, %v876
        %v905 = vadd.f32 %v832, %v903
        %v906 = vadd.f32 %v833, %v904
        %s907 = sld [smem:[#allocation6 + $0x284]]
        %v908 = vstv %s907
        %v909 = vmul.f32 %v908, %v875
        %v910 = vmul.f32 %v908, %v876
        %v911 = vadd.f32 %v838, %v909
        %v912 = vadd.f32 %v839, %v910
        %s913 = sld [smem:[#allocation6 + $0x304]]
        %v914 = vstv %s913
        %v915 = vmul.f32 %v914, %v875
        %v916 = vmul.f32 %v914, %v876
        %v917 = vadd.f32 %v844, %v915
        %v918 = vadd.f32 %v845, %v916
        %s919 = sld [smem:[#allocation6 + $0x384]]
        %v920 = vstv %s919
        %v921 = vmul.f32 %v920, %v875
        %v922 = vmul.f32 %v920, %v876
        %v923 = vadd.f32 %v850, %v921
        %v924 = vadd.f32 %v851, %v922
        %925 = vrot.lane.b32.xlu0 %v456, 18
        %v926 = vpop.permute.xlu0 %925
        %928 = vrot.lane.b32.xlu0 %v454, 18
        %v929 = vpop.permute.xlu0 %928
        %vm930 = vcmask 146432
        %v931 = vsel %vm930, %v929, %v926
        %v934 = vsel %vm930, %v926, %v929
        %s935 = scalar_lea.vmem [#allocation2], 5
        %v936 = vld [vmem:[%s935] ss:$8 sm:$0x3]
        %v938 = vlaneseq
        %v939 = vshrl.u32 %v938, 7
        %v940 = vsub.s32 0, %v939
        %v941 = vrot.slane %v936, %v940
        %v942 = vlaneseq
        %v943 = vshrl.u32 %v942, 7
        %v944 = vsub.s32 1, %v943
        %v945 = vrot.slane %v936, %v944
        %v948 = vmul.f32 %v934, %v941
        %v949 = vmul.f32 %v931, %v945
        %s950 = sld [smem:[#allocation6 + $0x5]]
        %v951 = vstv %s950
        %v952 = vmul.f32 %v951, %v948
        %v953 = vmul.f32 %v951, %v949
        %v954 = vadd.f32 %v881, %v952
        %v955 = vadd.f32 %v882, %v953
        %s956 = sld [smem:[#allocation6 + $0x85]]
        %v957 = vstv %s956
        %v958 = vmul.f32 %v957, %v948
        %v959 = vmul.f32 %v957, %v949
        %v960 = vadd.f32 %v887, %v958
        %v961 = vadd.f32 %v888, %v959
        %s962 = sld [smem:[#allocation6 + $0x105]]
        %v963 = vstv %s962
        %v964 = vmul.f32 %v963, %v948
        %v965 = vmul.f32 %v963, %v949
        %v966 = vadd.f32 %v893, %v964
        %v967 = vadd.f32 %v894, %v965
        %s968 = sld [smem:[#allocation6 + $0x185]]
        %v969 = vstv %s968
        %v970 = vmul.f32 %v969, %v948
        %v971 = vmul.f32 %v969, %v949
        %v972 = vadd.f32 %v899, %v970
        %v973 = vadd.f32 %v900, %v971
        %s974 = sld [smem:[#allocation6 + $0x205]]
        %v975 = vstv %s974
        %v976 = vmul.f32 %v975, %v948
        %v977 = vmul.f32 %v975, %v949
        %v978 = vadd.f32 %v905, %v976
        %v979 = vadd.f32 %v906, %v977
        %s980 = sld [smem:[#allocation6 + $0x285]]
        %v981 = vstv %s980
        %v982 = vmul.f32 %v981, %v948
        %v983 = vmul.f32 %v981, %v949
        %v984 = vadd.f32 %v911, %v982
        %v985 = vadd.f32 %v912, %v983
        %s986 = sld [smem:[#allocation6 + $0x305]]
        %v987 = vstv %s986
        %v988 = vmul.f32 %v987, %v948
        %v989 = vmul.f32 %v987, %v949
        %v990 = vadd.f32 %v917, %v988
        %v991 = vadd.f32 %v918, %v989
        %s992 = sld [smem:[#allocation6 + $0x385]]
        %v993 = vstv %s992
        %v994 = vmul.f32 %v993, %v948
        %v995 = vmul.f32 %v993, %v949
        %v996 = vadd.f32 %v923, %v994
        %v997 = vadd.f32 %v924, %v995
        %998 = vrot.lane.b32.xlu0 %v456, 17
        %v999 = vpop.permute.xlu0 %998
        %1001 = vrot.lane.b32.xlu0 %v454, 17
        %v1002 = vpop.permute.xlu0 %1001
        %vm1003 = vcmask 138240
        %v1004 = vsel %vm1003, %v1002, %v999
        %v1007 = vsel %vm1003, %v999, %v1002
        %s1008 = scalar_lea.vmem [#allocation2], 6
        %v1009 = vld [vmem:[%s1008] ss:$8 sm:$0x3]
        %v1011 = vlaneseq
        %v1012 = vshrl.u32 %v1011, 7
        %v1013 = vsub.s32 0, %v1012
        %v1014 = vrot.slane %v1009, %v1013
        %v1015 = vlaneseq
        %v1016 = vshrl.u32 %v1015, 7
        %v1017 = vsub.s32 1, %v1016
        %v1018 = vrot.slane %v1009, %v1017
        %v1021 = vmul.f32 %v1007, %v1014
        %v1022 = vmul.f32 %v1004, %v1018
        %s1023 = sld [smem:[#allocation6 + $0x6]]
        %v1024 = vstv %s1023
        %v1025 = vmul.f32 %v1024, %v1021
        %v1026 = vmul.f32 %v1024, %v1022
        %v1027 = vadd.f32 %v954, %v1025
        %v1028 = vadd.f32 %v955, %v1026
        %s1029 = sld [smem:[#allocation6 + $0x86]]
        %v1030 = vstv %s1029
        %v1031 = vmul.f32 %v1030, %v1021
        %v1032 = vmul.f32 %v1030, %v1022
        %v1033 = vadd.f32 %v960, %v1031
        %v1034 = vadd.f32 %v961, %v1032
        %s1035 = sld [smem:[#allocation6 + $0x106]]
        %v1036 = vstv %s1035
        %v1037 = vmul.f32 %v1036, %v1021
        %v1038 = vmul.f32 %v1036, %v1022
        %v1039 = vadd.f32 %v966, %v1037
        %v1040 = vadd.f32 %v967, %v1038
        %s1041 = sld [smem:[#allocation6 + $0x186]]
        %v1042 = vstv %s1041
        %v1043 = vmul.f32 %v1042, %v1021
        %v1044 = vmul.f32 %v1042, %v1022
        %v1045 = vadd.f32 %v972, %v1043
        %v1046 = vadd.f32 %v973, %v1044
        %s1047 = sld [smem:[#allocation6 + $0x206]]
        %v1048 = vstv %s1047
        %v1049 = vmul.f32 %v1048, %v1021
        %v1050 = vmul.f32 %v1048, %v1022
        %v1051 = vadd.f32 %v978, %v1049
        %v1052 = vadd.f32 %v979, %v1050
        %s1053 = sld [smem:[#allocation6 + $0x286]]
        %v1054 = vstv %s1053
        %v1055 = vmul.f32 %v1054, %v1021
        %v1056 = vmul.f32 %v1054, %v1022
        %v1057 = vadd.f32 %v984, %v1055
        %v1058 = vadd.f32 %v985, %v1056
        %s1059 = sld [smem:[#allocation6 + $0x306]]
        %v1060 = vstv %s1059
        %v1061 = vmul.f32 %v1060, %v1021
        %v1062 = vmul.f32 %v1060, %v1022
        %v1063 = vadd.f32 %v990, %v1061
        %v1064 = vadd.f32 %v991, %v1062
        %s1065 = sld [smem:[#allocation6 + $0x386]]
        %v1066 = vstv %s1065
        %v1067 = vmul.f32 %v1066, %v1021
        %v1068 = vmul.f32 %v1066, %v1022
        %v1069 = vadd.f32 %v996, %v1067
        %v1070 = vadd.f32 %v997, %v1068
        %1071 = vrot.lane.b32.xlu0 %v456, 16
        %v1072 = vpop.permute.xlu0 %1071
        %1074 = vrot.lane.b32.xlu0 %v454, 16
        %v1075 = vpop.permute.xlu0 %1074
        %v1076 = vsel %vm338, %v1075, %v1072
        %v1079 = vsel %vm338, %v1072, %v1075
        %s1080 = scalar_lea.vmem [#allocation2], 7
        %v1081 = vld [vmem:[%s1080] ss:$8 sm:$0x3]
        %v1083 = vlaneseq
        %v1084 = vshrl.u32 %v1083, 7
        %v1085 = vsub.s32 0, %v1084
        %v1086 = vrot.slane %v1081, %v1085
        %v1087 = vlaneseq
        %v1088 = vshrl.u32 %v1087, 7
        %v1089 = vsub.s32 1, %v1088
        %v1090 = vrot.slane %v1081, %v1089
        %v1093 = vmul.f32 %v1079, %v1086
        %v1094 = vmul.f32 %v1076, %v1090
        %s1095 = sld [smem:[#allocation6 + $0x7]]
        %v1096 = vstv %s1095
        %v1097 = vmul.f32 %v1096, %v1093
        %v1098 = vmul.f32 %v1096, %v1094
        %v1099 = vadd.f32 %v1027, %v1097
        %v1100 = vadd.f32 %v1028, %v1098
        %s1101 = sld [smem:[#allocation6 + $0x87]]
        %v1102 = vstv %s1101
        %v1103 = vmul.f32 %v1102, %v1093
        %v1104 = vmul.f32 %v1102, %v1094
        %v1105 = vadd.f32 %v1033, %v1103
        %v1106 = vadd.f32 %v1034, %v1104
        %s1107 = sld [smem:[#allocation6 + $0x107]]
        %v1108 = vstv %s1107
        %v1109 = vmul.f32 %v1108, %v1093
        %v1110 = vmul.f32 %v1108, %v1094
        %v1111 = vadd.f32 %v1039, %v1109
        %v1112 = vadd.f32 %v1040, %v1110
        %s1113 = sld [smem:[#allocation6 + $0x187]]
        %v1114 = vstv %s1113
        %v1115 = vmul.f32 %v1114, %v1093
        %v1116 = vmul.f32 %v1114, %v1094
        %v1117 = vadd.f32 %v1045, %v1115
        %v1118 = vadd.f32 %v1046, %v1116
        %s1119 = sld [smem:[#allocation6 + $0x207]]
        %v1120 = vstv %s1119
        %v1121 = vmul.f32 %v1120, %v1093
        %v1122 = vmul.f32 %v1120, %v1094
        %v1123 = vadd.f32 %v1051, %v1121
        %v1124 = vadd.f32 %v1052, %v1122
        %s1125 = sld [smem:[#allocation6 + $0x287]]
        %v1126 = vstv %s1125
        %v1127 = vmul.f32 %v1126, %v1093
        %v1128 = vmul.f32 %v1126, %v1094
        %v1129 = vadd.f32 %v1057, %v1127
        %v1130 = vadd.f32 %v1058, %v1128
        %s1131 = sld [smem:[#allocation6 + $0x307]]
        %v1132 = vstv %s1131
        %v1133 = vmul.f32 %v1132, %v1093
        %v1134 = vmul.f32 %v1132, %v1094
        %v1135 = vadd.f32 %v1063, %v1133
        %v1136 = vadd.f32 %v1064, %v1134
        %s1137 = sld [smem:[#allocation6 + $0x387]]
        %v1138 = vstv %s1137
        %v1139 = vmul.f32 %v1138, %v1093
        %v1140 = vmul.f32 %v1138, %v1094
        %v1141 = vadd.f32 %v1069, %v1139
        %v1142 = vadd.f32 %v1070, %v1140
        %1143 = vrot.lane.b32.xlu0 %v456, 15
        %v1144 = vpop.permute.xlu0 %1143
        %1146 = vrot.lane.b32.xlu0 %v454, 15
        %v1147 = vpop.permute.xlu0 %1146
        %vm1148 = vcmask 121856
        %v1149 = vsel %vm1148, %v1147, %v1144
        %v1152 = vsel %vm1148, %v1144, %v1147
        %s1153 = scalar_lea.vmem [#allocation2], 16
        %v1154 = vld [vmem:[%s1153] ss:$8 sm:$0x3]
        %v1156 = vlaneseq
        %v1157 = vshrl.u32 %v1156, 7
        %v1158 = vsub.s32 0, %v1157
        %v1159 = vrot.slane %v1154, %v1158
        %v1160 = vlaneseq
        %v1161 = vshrl.u32 %v1160, 7
        %v1162 = vsub.s32 1, %v1161
        %v1163 = vrot.slane %v1154, %v1162
        %v1166 = vmul.f32 %v1152, %v1159
        %v1167 = vmul.f32 %v1149, %v1163
        %s1168 = sld [smem:[#allocation6 + $0x8]]
        %v1169 = vstv %s1168
        %v1170 = vmul.f32 %v1169, %v1166
        %v1171 = vmul.f32 %v1169, %v1167
        %v1172 = vadd.f32 %v1099, %v1170
        %v1173 = vadd.f32 %v1100, %v1171
        %s1174 = sld [smem:[#allocation6 + $0x88]]
        %v1175 = vstv %s1174
        %v1176 = vmul.f32 %v1175, %v1166
        %v1177 = vmul.f32 %v1175, %v1167
        %v1178 = vadd.f32 %v1105, %v1176
        %v1179 = vadd.f32 %v1106, %v1177
        %s1180 = sld [smem:[#allocation6 + $0x108]]
        %v1181 = vstv %s1180
        %v1182 = vmul.f32 %v1181, %v1166
        %v1183 = vmul.f32 %v1181, %v1167
        %v1184 = vadd.f32 %v1111, %v1182
        %v1185 = vadd.f32 %v1112, %v1183
        %s1186 = sld [smem:[#allocation6 + $0x188]]
        %v1187 = vstv %s1186
        %v1188 = vmul.f32 %v1187, %v1166
        %v1189 = vmul.f32 %v1187, %v1167
        %v1190 = vadd.f32 %v1117, %v1188
        %v1191 = vadd.f32 %v1118, %v1189
        %s1192 = sld [smem:[#allocation6 + $0x208]]
        %v1193 = vstv %s1192
        %v1194 = vmul.f32 %v1193, %v1166
        %v1195 = vmul.f32 %v1193, %v1167
        %v1196 = vadd.f32 %v1123, %v1194
        %v1197 = vadd.f32 %v1124, %v1195
        %s1198 = sld [smem:[#allocation6 + $0x288]]
        %v1199 = vstv %s1198
        %v1200 = vmul.f32 %v1199, %v1166
        %v1201 = vmul.f32 %v1199, %v1167
        %v1202 = vadd.f32 %v1129, %v1200
        %v1203 = vadd.f32 %v1130, %v1201
        %s1204 = sld [smem:[#allocation6 + $0x308]]
        %v1205 = vstv %s1204
        %v1206 = vmul.f32 %v1205, %v1166
        %v1207 = vmul.f32 %v1205, %v1167
        %v1208 = vadd.f32 %v1135, %v1206
        %v1209 = vadd.f32 %v1136, %v1207
        %s1210 = sld [smem:[#allocation6 + $0x388]]
        %v1211 = vstv %s1210
        %v1212 = vmul.f32 %v1211, %v1166
        %v1213 = vmul.f32 %v1211, %v1167
        %v1214 = vadd.f32 %v1141, %v1212
        %v1215 = vadd.f32 %v1142, %v1213
        %1216 = vrot.lane.b32.xlu0 %v456, 14
        %v1217 = vpop.permute.xlu0 %1216
        %1219 = vrot.lane.b32.xlu0 %v454, 14
        %v1220 = vpop.permute.xlu0 %1219
        %vm1221 = vcmask 113664
        %v1222 = vsel %vm1221, %v1220, %v1217
        %v1225 = vsel %vm1221, %v1217, %v1220
        %s1226 = scalar_lea.vmem [#allocation2], 17
        %v1227 = vld [vmem:[%s1226] ss:$8 sm:$0x3]
        %v1229 = vlaneseq
        %v1230 = vshrl.u32 %v1229, 7
        %v1231 = vsub.s32 0, %v1230
        %v1232 = vrot.slane %v1227, %v1231
        %v1233 = vlaneseq
        %v1234 = vshrl.u32 %v1233, 7
        %v1235 = vsub.s32 1, %v1234
        %v1236 = vrot.slane %v1227, %v1235
        %v1239 = vmul.f32 %v1225, %v1232
        %v1240 = vmul.f32 %v1222, %v1236
        %s1241 = sld [smem:[#allocation6 + $0x9]]
        %v1242 = vstv %s1241
        %v1243 = vmul.f32 %v1242, %v1239
        %v1244 = vmul.f32 %v1242, %v1240
        %v1245 = vadd.f32 %v1172, %v1243
        %v1246 = vadd.f32 %v1173, %v1244
        %s1247 = sld [smem:[#allocation6 + $0x89]]
        %v1248 = vstv %s1247
        %v1249 = vmul.f32 %v1248, %v1239
        %v1250 = vmul.f32 %v1248, %v1240
        %v1251 = vadd.f32 %v1178, %v1249
        %v1252 = vadd.f32 %v1179, %v1250
        %s1253 = sld [smem:[#allocation6 + $0x109]]
        %v1254 = vstv %s1253
        %v1255 = vmul.f32 %v1254, %v1239
        %v1256 = vmul.f32 %v1254, %v1240
        %v1257 = vadd.f32 %v1184, %v1255
        %v1258 = vadd.f32 %v1185, %v1256
        %s1259 = sld [smem:[#allocation6 + $0x189]]
        %v1260 = vstv %s1259
        %v1261 = vmul.f32 %v1260, %v1239
        %v1262 = vmul.f32 %v1260, %v1240
        %v1263 = vadd.f32 %v1190, %v1261
        %v1264 = vadd.f32 %v1191, %v1262
        %s1265 = sld [smem:[#allocation6 + $0x209]]
        %v1266 = vstv %s1265
        %v1267 = vmul.f32 %v1266, %v1239
        %v1268 = vmul.f32 %v1266, %v1240
        %v1269 = vadd.f32 %v1196, %v1267
        %v1270 = vadd.f32 %v1197, %v1268
        %s1271 = sld [smem:[#allocation6 + $0x289]]
        %v1272 = vstv %s1271
        %v1273 = vmul.f32 %v1272, %v1239
        %v1274 = vmul.f32 %v1272, %v1240
        %v1275 = vadd.f32 %v1202, %v1273
        %v1276 = vadd.f32 %v1203, %v1274
        %s1277 = sld [smem:[#allocation6 + $0x309]]
        %v1278 = vstv %s1277
        %v1279 = vmul.f32 %v1278, %v1239
        %v1280 = vmul.f32 %v1278, %v1240
        %v1281 = vadd.f32 %v1208, %v1279
        %v1282 = vadd.f32 %v1209, %v1280
        %s1283 = sld [smem:[#allocation6 + $0x389]]
        %v1284 = vstv %s1283
        %v1285 = vmul.f32 %v1284, %v1239
        %v1286 = vmul.f32 %v1284, %v1240
        %v1287 = vadd.f32 %v1214, %v1285
        %v1288 = vadd.f32 %v1215, %v1286
        %1289 = vrot.lane.b32.xlu0 %v456, 2
        %v1290 = vpop.permute.xlu0 %1289
        %1292 = vrot.lane.b32.xlu0 %v454, 2
        %v1293 = vpop.permute.xlu0 %1292
        %vm1294 = vcmask 15360
        %v1295 = vsel %vm1294, %v1293, %v1290
        %v1298 = vsel %vm1294, %v1290, %v1293
        %s1299 = scalar_lea.vmem [#allocation2], 18
        %v1300 = vld [vmem:[%s1299] ss:$8 sm:$0x3]
        %v1302 = vlaneseq
        %v1303 = vshrl.u32 %v1302, 7
        %v1304 = vsub.s32 0, %v1303
        %v1305 = vrot.slane %v1300, %v1304
        %v1306 = vlaneseq
        %v1307 = vshrl.u32 %v1306, 7
        %v1308 = vsub.s32 1, %v1307
        %v1309 = vrot.slane %v1300, %v1308
        %v1312 = vmul.f32 %v1298, %v1305
        %v1313 = vmul.f32 %v1295, %v1309
        %s1314 = sld [smem:[#allocation6 + $0xa]]
        %v1315 = vstv %s1314
        %v1316 = vmul.f32 %v1315, %v1312
        %v1317 = vmul.f32 %v1315, %v1313
        %v1318 = vadd.f32 %v1245, %v1316
        %v1319 = vadd.f32 %v1246, %v1317
        %s1320 = sld [smem:[#allocation6 + $0x8a]]
        %v1321 = vstv %s1320
        %v1322 = vmul.f32 %v1321, %v1312
        %v1323 = vmul.f32 %v1321, %v1313
        %v1324 = vadd.f32 %v1251, %v1322
        %v1325 = vadd.f32 %v1252, %v1323
        %s1326 = sld [smem:[#allocation6 + $0x10a]]
        %v1327 = vstv %s1326
        %v1328 = vmul.f32 %v1327, %v1312
        %v1329 = vmul.f32 %v1327, %v1313
        %v1330 = vadd.f32 %v1257, %v1328
        %v1331 = vadd.f32 %v1258, %v1329
        %s1332 = sld [smem:[#allocation6 + $0x18a]]
        %v1333 = vstv %s1332
        %v1334 = vmul.f32 %v1333, %v1312
        %v1335 = vmul.f32 %v1333, %v1313
        %v1336 = vadd.f32 %v1263, %v1334
        %v1337 = vadd.f32 %v1264, %v1335
        %s1338 = sld [smem:[#allocation6 + $0x20a]]
        %v1339 = vstv %s1338
        %v1340 = vmul.f32 %v1339, %v1312
        %v1341 = vmul.f32 %v1339, %v1313
        %v1342 = vadd.f32 %v1269, %v1340
        %v1343 = vadd.f32 %v1270, %v1341
        %s1344 = sld [smem:[#allocation6 + $0x28a]]
        %v1345 = vstv %s1344
        %v1346 = vmul.f32 %v1345, %v1312
        %v1347 = vmul.f32 %v1345, %v1313
        %v1348 = vadd.f32 %v1275, %v1346
        %v1349 = vadd.f32 %v1276, %v1347
        %s1350 = sld [smem:[#allocation6 + $0x30a]]
        %v1351 = vstv %s1350
        %v1352 = vmul.f32 %v1351, %v1312
        %v1353 = vmul.f32 %v1351, %v1313
        %v1354 = vadd.f32 %v1281, %v1352
        %v1355 = vadd.f32 %v1282, %v1353
        %s1356 = sld [smem:[#allocation6 + $0x38a]]
        %v1357 = vstv %s1356
        %v1358 = vmul.f32 %v1357, %v1312
        %v1359 = vmul.f32 %v1357, %v1313
        %v1360 = vadd.f32 %v1287, %v1358
        %v1361 = vadd.f32 %v1288, %v1359
        %1362 = vrot.lane.b32.xlu0 %v456, 1
        %v1363 = vpop.permute.xlu0 %1362
        %1365 = vrot.lane.b32.xlu0 %v454, 1
        %v1366 = vpop.permute.xlu0 %1365
        %vm1367 = vcmask 7168
        %v1368 = vsel %vm1367, %v1366, %v1363
        %v1371 = vsel %vm1367, %v1363, %v1366
        %s1372 = scalar_lea.vmem [#allocation2], 19
        %v1373 = vld [vmem:[%s1372] ss:$8 sm:$0x3]
        %v1375 = vlaneseq
        %v1376 = vshrl.u32 %v1375, 7
        %v1377 = vsub.s32 0, %v1376
        %v1378 = vrot.slane %v1373, %v1377
        %v1379 = vlaneseq
        %v1380 = vshrl.u32 %v1379, 7
        %v1381 = vsub.s32 1, %v1380
        %v1382 = vrot.slane %v1373, %v1381
        %v1385 = vmul.f32 %v1371, %v1378
        %v1386 = vmul.f32 %v1368, %v1382
        %s1387 = sld [smem:[#allocation6 + $0xb]]
        %v1388 = vstv %s1387
        %v1389 = vmul.f32 %v1388, %v1385
        %v1390 = vmul.f32 %v1388, %v1386
        %v1391 = vadd.f32 %v1318, %v1389
        %v1392 = vadd.f32 %v1319, %v1390
        %s1393 = sld [smem:[#allocation6 + $0x8b]]
        %v1394 = vstv %s1393
        %v1395 = vmul.f32 %v1394, %v1385
        %v1396 = vmul.f32 %v1394, %v1386
        %v1397 = vadd.f32 %v1324, %v1395
        %v1398 = vadd.f32 %v1325, %v1396
        %s1399 = sld [smem:[#allocation6 + $0x10b]]
        %v1400 = vstv %s1399
        %v1401 = vmul.f32 %v1400, %v1385
        %v1402 = vmul.f32 %v1400, %v1386
        %v1403 = vadd.f32 %v1330, %v1401
        %v1404 = vadd.f32 %v1331, %v1402
        %s1405 = sld [smem:[#allocation6 + $0x18b]]
        %v1406 = vstv %s1405
        %v1407 = vmul.f32 %v1406, %v1385
        %v1408 = vmul.f32 %v1406, %v1386
        %v1409 = vadd.f32 %v1336, %v1407
        %v1410 = vadd.f32 %v1337, %v1408
        %s1411 = sld [smem:[#allocation6 + $0x20b]]
        %v1412 = vstv %s1411
        %v1413 = vmul.f32 %v1412, %v1385
        %v1414 = vmul.f32 %v1412, %v1386
        %v1415 = vadd.f32 %v1342, %v1413
        %v1416 = vadd.f32 %v1343, %v1414
        %s1417 = sld [smem:[#allocation6 + $0x28b]]
        %v1418 = vstv %s1417
        %v1419 = vmul.f32 %v1418, %v1385
        %v1420 = vmul.f32 %v1418, %v1386
        %v1421 = vadd.f32 %v1348, %v1419
        %v1422 = vadd.f32 %v1349, %v1420
        %s1423 = sld [smem:[#allocation6 + $0x30b]]
        %v1424 = vstv %s1423
        %v1425 = vmul.f32 %v1424, %v1385
        %v1426 = vmul.f32 %v1424, %v1386
        %v1427 = vadd.f32 %v1354, %v1425
        %v1428 = vadd.f32 %v1355, %v1426
        %s1429 = sld [smem:[#allocation6 + $0x38b]]
        %v1430 = vstv %s1429
        %v1431 = vmul.f32 %v1430, %v1385
        %v1432 = vmul.f32 %v1430, %v1386
        %v1433 = vadd.f32 %v1360, %v1431
        %v1434 = vadd.f32 %v1361, %v1432
        %s1435 = scalar_lea.vmem [#allocation2], 20
        %v1436 = vld [vmem:[%s1435] ss:$8 sm:$0x3]
        %v1438 = vlaneseq
        %v1439 = vshrl.u32 %v1438, 7
        %v1440 = vsub.s32 0, %v1439
        %v1441 = vrot.slane %v1436, %v1440
        %v1442 = vlaneseq
        %v1443 = vshrl.u32 %v1442, 7
        %v1444 = vsub.s32 1, %v1443
        %v1445 = vrot.slane %v1436, %v1444
        %v1448 = vmul.f32 %v454, %v1441
        %v1449 = vmul.f32 %v456, %v1445
        %s1450 = sld [smem:[#allocation6 + $0xc]]
        %v1451 = vstv %s1450
        %v1452 = vmul.f32 %v1451, %v1448
        %v1453 = vmul.f32 %v1451, %v1449
        %v1454 = vadd.f32 %v1391, %v1452
        %v1455 = vadd.f32 %v1392, %v1453
        %s1456 = sld [smem:[#allocation6 + $0x8c]]
        %v1457 = vstv %s1456
        %v1458 = vmul.f32 %v1457, %v1448
        %v1459 = vmul.f32 %v1457, %v1449
        %v1460 = vadd.f32 %v1397, %v1458
        %v1461 = vadd.f32 %v1398, %v1459
        %s1462 = sld [smem:[#allocation6 + $0x10c]]
        %v1463 = vstv %s1462
        %v1464 = vmul.f32 %v1463, %v1448
        %v1465 = vmul.f32 %v1463, %v1449
        %v1466 = vadd.f32 %v1403, %v1464
        %v1467 = vadd.f32 %v1404, %v1465
        %s1468 = sld [smem:[#allocation6 + $0x18c]]
        %v1469 = vstv %s1468
        %v1470 = vmul.f32 %v1469, %v1448
        %v1471 = vmul.f32 %v1469, %v1449
        %v1472 = vadd.f32 %v1409, %v1470
        %v1473 = vadd.f32 %v1410, %v1471
        %s1474 = sld [smem:[#allocation6 + $0x20c]]
        %v1475 = vstv %s1474
        %v1476 = vmul.f32 %v1475, %v1448
        %v1477 = vmul.f32 %v1475, %v1449
        %v1478 = vadd.f32 %v1415, %v1476
        %v1479 = vadd.f32 %v1416, %v1477
        %s1480 = sld [smem:[#allocation6 + $0x28c]]
        %v1481 = vstv %s1480
        %v1482 = vmul.f32 %v1481, %v1448
        %v1483 = vmul.f32 %v1481, %v1449
        %v1484 = vadd.f32 %v1421, %v1482
        %v1485 = vadd.f32 %v1422, %v1483
        %s1486 = sld [smem:[#allocation6 + $0x30c]]
        %v1487 = vstv %s1486
        %v1488 = vmul.f32 %v1487, %v1448
        %v1489 = vmul.f32 %v1487, %v1449
        %v1490 = vadd.f32 %v1427, %v1488
        %v1491 = vadd.f32 %v1428, %v1489
        %s1492 = sld [smem:[#allocation6 + $0x38c]]
        %v1493 = vstv %s1492
        %v1494 = vmul.f32 %v1493, %v1448
        %v1495 = vmul.f32 %v1493, %v1449
        %v1496 = vadd.f32 %v1433, %v1494
        %v1497 = vadd.f32 %v1434, %v1495
        %1498 = vrot.lane.b32.xlu0 %v454, 127
        %v1499 = vpop.permute.xlu0 %1498
        %1500 = vrot.lane.b32.xlu0 %v456, 127
        %v1501 = vpop.permute.xlu0 %1500
        %vm1502 = vcmask 1039360
        %v1503 = vsel %vm1502, %v1499, %v1501
        %v1507 = vsel %vm1502, %v1501, %v1499
        %s1508 = scalar_lea.vmem [#allocation2], 21
        %v1509 = vld [vmem:[%s1508] ss:$8 sm:$0x3]
        %v1511 = vlaneseq
        %v1512 = vshrl.u32 %v1511, 7
        %v1513 = vsub.s32 0, %v1512
        %v1514 = vrot.slane %v1509, %v1513
        %v1515 = vlaneseq
        %v1516 = vshrl.u32 %v1515, 7
        %v1517 = vsub.s32 1, %v1516
        %v1518 = vrot.slane %v1509, %v1517
        %v1521 = vmul.f32 %v1503, %v1514
        %v1522 = vmul.f32 %v1507, %v1518
        %s1523 = sld [smem:[#allocation6 + $0xd]]
        %v1524 = vstv %s1523
        %v1525 = vmul.f32 %v1524, %v1521
        %v1526 = vmul.f32 %v1524, %v1522
        %v1527 = vadd.f32 %v1454, %v1525
        %v1528 = vadd.f32 %v1455, %v1526
        %s1529 = sld [smem:[#allocation6 + $0x8d]]
        %v1530 = vstv %s1529
        %v1531 = vmul.f32 %v1530, %v1521
        %v1532 = vmul.f32 %v1530, %v1522
        %v1533 = vadd.f32 %v1460, %v1531
        %v1534 = vadd.f32 %v1461, %v1532
        %s1535 = sld [smem:[#allocation6 + $0x10d]]
        %v1536 = vstv %s1535
        %v1537 = vmul.f32 %v1536, %v1521
        %v1538 = vmul.f32 %v1536, %v1522
        %v1539 = vadd.f32 %v1466, %v1537
        %v1540 = vadd.f32 %v1467, %v1538
        %s1541 = sld [smem:[#allocation6 + $0x18d]]
        %v1542 = vstv %s1541
        %v1543 = vmul.f32 %v1542, %v1521
        %v1544 = vmul.f32 %v1542, %v1522
        %v1545 = vadd.f32 %v1472, %v1543
        %v1546 = vadd.f32 %v1473, %v1544
        %s1547 = sld [smem:[#allocation6 + $0x20d]]
        %v1548 = vstv %s1547
        %v1549 = vmul.f32 %v1548, %v1521
        %v1550 = vmul.f32 %v1548, %v1522
        %v1551 = vadd.f32 %v1478, %v1549
        %v1552 = vadd.f32 %v1479, %v1550
        %s1553 = sld [smem:[#allocation6 + $0x28d]]
        %v1554 = vstv %s1553
        %v1555 = vmul.f32 %v1554, %v1521
        %v1556 = vmul.f32 %v1554, %v1522
        %v1557 = vadd.f32 %v1484, %v1555
        %v1558 = vadd.f32 %v1485, %v1556
        %s1559 = sld [smem:[#allocation6 + $0x30d]]
        %v1560 = vstv %s1559
        %v1561 = vmul.f32 %v1560, %v1521
        %v1562 = vmul.f32 %v1560, %v1522
        %v1563 = vadd.f32 %v1490, %v1561
        %v1564 = vadd.f32 %v1491, %v1562
        %s1565 = sld [smem:[#allocation6 + $0x38d]]
        %v1566 = vstv %s1565
        %v1567 = vmul.f32 %v1566, %v1521
        %v1568 = vmul.f32 %v1566, %v1522
        %v1569 = vadd.f32 %v1496, %v1567
        %v1570 = vadd.f32 %v1497, %v1568
        %1571 = vrot.lane.b32.xlu0 %v454, 126
        %v1572 = vpop.permute.xlu0 %1571
        %1573 = vrot.lane.b32.xlu0 %v456, 126
        %v1574 = vpop.permute.xlu0 %1573
        %vm1575 = vcmask 1031168
        %v1576 = vsel %vm1575, %v1572, %v1574
        %v1580 = vsel %vm1575, %v1574, %v1572
        %s1581 = scalar_lea.vmem [#allocation2], 22
        %v1582 = vld [vmem:[%s1581] ss:$8 sm:$0x3]
        %v1584 = vlaneseq
        %v1585 = vshrl.u32 %v1584, 7
        %v1586 = vsub.s32 0, %v1585
        %v1587 = vrot.slane %v1582, %v1586
        %v1588 = vlaneseq
        %v1589 = vshrl.u32 %v1588, 7
        %v1590 = vsub.s32 1, %v1589
        %v1591 = vrot.slane %v1582, %v1590
        %v1594 = vmul.f32 %v1576, %v1587
        %v1595 = vmul.f32 %v1580, %v1591
        %s1596 = sld [smem:[#allocation6 + $0xe]]
        %v1597 = vstv %s1596
        %v1598 = vmul.f32 %v1597, %v1594
        %v1599 = vmul.f32 %v1597, %v1595
        %v1600 = vadd.f32 %v1527, %v1598
        %v1601 = vadd.f32 %v1528, %v1599
        %s1602 = sld [smem:[#allocation6 + $0x8e]]
        %v1603 = vstv %s1602
        %v1604 = vmul.f32 %v1603, %v1594
        %v1605 = vmul.f32 %v1603, %v1595
        %v1606 = vadd.f32 %v1533, %v1604
        %v1607 = vadd.f32 %v1534, %v1605
        %s1608 = sld [smem:[#allocation6 + $0x10e]]
        %v1609 = vstv %s1608
        %v1610 = vmul.f32 %v1609, %v1594
        %v1611 = vmul.f32 %v1609, %v1595
        %v1612 = vadd.f32 %v1539, %v1610
        %v1613 = vadd.f32 %v1540, %v1611
        %s1614 = sld [smem:[#allocation6 + $0x18e]]
        %v1615 = vstv %s1614
        %v1616 = vmul.f32 %v1615, %v1594
        %v1617 = vmul.f32 %v1615, %v1595
        %v1618 = vadd.f32 %v1545, %v1616
        %v1619 = vadd.f32 %v1546, %v1617
        %s1620 = sld [smem:[#allocation6 + $0x20e]]
        %v1621 = vstv %s1620
        %v1622 = vmul.f32 %v1621, %v1594
        %v1623 = vmul.f32 %v1621, %v1595
        %v1624 = vadd.f32 %v1551, %v1622
        %v1625 = vadd.f32 %v1552, %v1623
        %s1626 = sld [smem:[#allocation6 + $0x28e]]
        %v1627 = vstv %s1626
        %v1628 = vmul.f32 %v1627, %v1594
        %v1629 = vmul.f32 %v1627, %v1595
        %v1630 = vadd.f32 %v1557, %v1628
        %v1631 = vadd.f32 %v1558, %v1629
        %s1632 = sld [smem:[#allocation6 + $0x30e]]
        %v1633 = vstv %s1632
        %v1634 = vmul.f32 %v1633, %v1594
        %v1635 = vmul.f32 %v1633, %v1595
        %v1636 = vadd.f32 %v1563, %v1634
        %v1637 = vadd.f32 %v1564, %v1635
        %s1638 = sld [smem:[#allocation6 + $0x38e]]
        %v1639 = vstv %s1638
        %v1640 = vmul.f32 %v1639, %v1594
        %v1641 = vmul.f32 %v1639, %v1595
        %v1642 = vadd.f32 %v1569, %v1640
        %v1643 = vadd.f32 %v1570, %v1641
        %1644 = vrot.lane.b32.xlu0 %v454, 114
        %v1645 = vpop.permute.xlu0 %1644
        %1646 = vrot.lane.b32.xlu0 %v456, 114
        %v1647 = vpop.permute.xlu0 %1646
        %vm1648 = vcmask 932864
        %v1649 = vsel %vm1648, %v1645, %v1647
        %v1653 = vsel %vm1648, %v1647, %v1645
        %s1654 = scalar_lea.vmem [#allocation2], 23
        %v1655 = vld [vmem:[%s1654] ss:$8 sm:$0x3]
        %v1657 = vlaneseq
        %v1658 = vshrl.u32 %v1657, 7
        %v1659 = vsub.s32 0, %v1658
        %v1660 = vrot.slane %v1655, %v1659
        %v1661 = vlaneseq
        %v1662 = vshrl.u32 %v1661, 7
        %v1663 = vsub.s32 1, %v1662
        %v1664 = vrot.slane %v1655, %v1663
        %v1667 = vmul.f32 %v1649, %v1660
        %v1668 = vmul.f32 %v1653, %v1664
        %s1669 = sld [smem:[#allocation6 + $0xf]]
        %v1670 = vstv %s1669
        %v1671 = vmul.f32 %v1670, %v1667
        %v1672 = vmul.f32 %v1670, %v1668
        %v1673 = vadd.f32 %v1600, %v1671
        %v1674 = vadd.f32 %v1601, %v1672
        %s1675 = sld [smem:[#allocation6 + $0x8f]]
        %v1676 = vstv %s1675
        %v1677 = vmul.f32 %v1676, %v1667
        %v1678 = vmul.f32 %v1676, %v1668
        %v1679 = vadd.f32 %v1606, %v1677
        %v1680 = vadd.f32 %v1607, %v1678
        %s1681 = sld [smem:[#allocation6 + $0x10f]]
        %v1682 = vstv %s1681
        %v1683 = vmul.f32 %v1682, %v1667
        %v1684 = vmul.f32 %v1682, %v1668
        %v1685 = vadd.f32 %v1612, %v1683
        %v1686 = vadd.f32 %v1613, %v1684
        %s1687 = sld [smem:[#allocation6 + $0x18f]]
        %v1688 = vstv %s1687
        %v1689 = vmul.f32 %v1688, %v1667
        %v1690 = vmul.f32 %v1688, %v1668
        %v1691 = vadd.f32 %v1618, %v1689
        %v1692 = vadd.f32 %v1619, %v1690
        %s1693 = sld [smem:[#allocation6 + $0x20f]]
        %v1694 = vstv %s1693
        %v1695 = vmul.f32 %v1694, %v1667
        %v1696 = vmul.f32 %v1694, %v1668
        %v1697 = vadd.f32 %v1624, %v1695
        %v1698 = vadd.f32 %v1625, %v1696
        %s1699 = sld [smem:[#allocation6 + $0x28f]]
        %v1700 = vstv %s1699
        %v1701 = vmul.f32 %v1700, %v1667
        %v1702 = vmul.f32 %v1700, %v1668
        %v1703 = vadd.f32 %v1630, %v1701
        %v1704 = vadd.f32 %v1631, %v1702
        %s1705 = sld [smem:[#allocation6 + $0x30f]]
        %v1706 = vstv %s1705
        %v1707 = vmul.f32 %v1706, %v1667
        %v1708 = vmul.f32 %v1706, %v1668
        %v1709 = vadd.f32 %v1636, %v1707
        %v1710 = vadd.f32 %v1637, %v1708
        %s1711 = sld [smem:[#allocation6 + $0x38f]]
        %v1712 = vstv %s1711
        %v1713 = vmul.f32 %v1712, %v1667
        %v1714 = vmul.f32 %v1712, %v1668
        %v1715 = vadd.f32 %v1642, %v1713
        %v1716 = vadd.f32 %v1643, %v1714
        %1717 = vrot.lane.b32.xlu0 %v454, 113
        %v1718 = vpop.permute.xlu0 %1717
        %1719 = vrot.lane.b32.xlu0 %v456, 113
        %v1720 = vpop.permute.xlu0 %1719
        %vm1721 = vcmask 924672
        %v1722 = vsel %vm1721, %v1718, %v1720
        %v1726 = vsel %vm1721, %v1720, %v1718
        %s1727 = scalar_lea.vmem [#allocation2], 32
        %v1728 = vld [vmem:[%s1727] ss:$8 sm:$0x3]
        %v1730 = vlaneseq
        %v1731 = vshrl.u32 %v1730, 7
        %v1732 = vsub.s32 0, %v1731
        %v1733 = vrot.slane %v1728, %v1732
        %v1734 = vlaneseq
        %v1735 = vshrl.u32 %v1734, 7
        %v1736 = vsub.s32 1, %v1735
        %v1737 = vrot.slane %v1728, %v1736
        %v1740 = vmul.f32 %v1722, %v1733
        %v1741 = vmul.f32 %v1726, %v1737
        %s1742 = sld [smem:[#allocation6 + $0x10]]
        %v1743 = vstv %s1742
        %v1744 = vmul.f32 %v1743, %v1740
        %v1745 = vmul.f32 %v1743, %v1741
        %v1746 = vadd.f32 %v1673, %v1744
        %v1747 = vadd.f32 %v1674, %v1745
        %s1748 = sld [smem:[#allocation6 + $0x90]]
        %v1749 = vstv %s1748
        %v1750 = vmul.f32 %v1749, %v1740
        %v1751 = vmul.f32 %v1749, %v1741
        %v1752 = vadd.f32 %v1679, %v1750
        %v1753 = vadd.f32 %v1680, %v1751
        %s1754 = sld [smem:[#allocation6 + $0x110]]
        %v1755 = vstv %s1754
        %v1756 = vmul.f32 %v1755, %v1740
        %v1757 = vmul.f32 %v1755, %v1741
        %v1758 = vadd.f32 %v1685, %v1756
        %v1759 = vadd.f32 %v1686, %v1757
        %s1760 = sld [smem:[#allocation6 + $0x190]]
        %v1761 = vstv %s1760
        %v1762 = vmul.f32 %v1761, %v1740
        %v1763 = vmul.f32 %v1761, %v1741
        %v1764 = vadd.f32 %v1691, %v1762
        %v1765 = vadd.f32 %v1692, %v1763
        %s1766 = sld [smem:[#allocation6 + $0x210]]
        %v1767 = vstv %s1766
        %v1768 = vmul.f32 %v1767, %v1740
        %v1769 = vmul.f32 %v1767, %v1741
        %v1770 = vadd.f32 %v1697, %v1768
        %v1771 = vadd.f32 %v1698, %v1769
        %s1772 = sld [smem:[#allocation6 + $0x290]]
        %v1773 = vstv %s1772
        %v1774 = vmul.f32 %v1773, %v1740
        %v1775 = vmul.f32 %v1773, %v1741
        %v1776 = vadd.f32 %v1703, %v1774
        %v1777 = vadd.f32 %v1704, %v1775
        %s1778 = sld [smem:[#allocation6 + $0x310]]
        %v1779 = vstv %s1778
        %v1780 = vmul.f32 %v1779, %v1740
        %v1781 = vmul.f32 %v1779, %v1741
        %v1782 = vadd.f32 %v1709, %v1780
        %v1783 = vadd.f32 %v1710, %v1781
        %s1784 = sld [smem:[#allocation6 + $0x390]]
        %v1785 = vstv %s1784
        %v1786 = vmul.f32 %v1785, %v1740
        %v1787 = vmul.f32 %v1785, %v1741
        %v1788 = vadd.f32 %v1715, %v1786
        %v1789 = vadd.f32 %v1716, %v1787
        %1790 = vrot.lane.b32.xlu0 %v454, 112
        %v1791 = vpop.permute.xlu0 %1790
        %1792 = vrot.lane.b32.xlu0 %v456, 112
        %v1793 = vpop.permute.xlu0 %1792
        %vm1794 = vcmask 916480
        %v1795 = vsel %vm1794, %v1791, %v1793
        %v1799 = vsel %vm1794, %v1793, %v1791
        %s1800 = scalar_lea.vmem [#allocation2], 33
        %v1801 = vld [vmem:[%s1800] ss:$8 sm:$0x3]
        %v1803 = vlaneseq
        %v1804 = vshrl.u32 %v1803, 7
        %v1805 = vsub.s32 0, %v1804
        %v1806 = vrot.slane %v1801, %v1805
        %v1807 = vlaneseq
        %v1808 = vshrl.u32 %v1807, 7
        %v1809 = vsub.s32 1, %v1808
        %v1810 = vrot.slane %v1801, %v1809
        %v1813 = vmul.f32 %v1795, %v1806
        %v1814 = vmul.f32 %v1799, %v1810
        %s1815 = sld [smem:[#allocation6 + $0x11]]
        %v1816 = vstv %s1815
        %v1817 = vmul.f32 %v1816, %v1813
        %v1818 = vmul.f32 %v1816, %v1814
        %v1819 = vadd.f32 %v1746, %v1817
        %v1820 = vadd.f32 %v1747, %v1818
        %s1821 = sld [smem:[#allocation6 + $0x91]]
        %v1822 = vstv %s1821
        %v1823 = vmul.f32 %v1822, %v1813
        %v1824 = vmul.f32 %v1822, %v1814
        %v1825 = vadd.f32 %v1752, %v1823
        %v1826 = vadd.f32 %v1753, %v1824
        %s1827 = sld [smem:[#allocation6 + $0x111]]
        %v1828 = vstv %s1827
        %v1829 = vmul.f32 %v1828, %v1813
        %v1830 = vmul.f32 %v1828, %v1814
        %v1831 = vadd.f32 %v1758, %v1829
        %v1832 = vadd.f32 %v1759, %v1830
        %s1833 = sld [smem:[#allocation6 + $0x191]]
        %v1834 = vstv %s1833
        %v1835 = vmul.f32 %v1834, %v1813
        %v1836 = vmul.f32 %v1834, %v1814
        %v1837 = vadd.f32 %v1764, %v1835
        %v1838 = vadd.f32 %v1765, %v1836
        %s1839 = sld [smem:[#allocation6 + $0x211]]
        %v1840 = vstv %s1839
        %v1841 = vmul.f32 %v1840, %v1813
        %v1842 = vmul.f32 %v1840, %v1814
        %v1843 = vadd.f32 %v1770, %v1841
        %v1844 = vadd.f32 %v1771, %v1842
        %s1845 = sld [smem:[#allocation6 + $0x291]]
        %v1846 = vstv %s1845
        %v1847 = vmul.f32 %v1846, %v1813
        %v1848 = vmul.f32 %v1846, %v1814
        %v1849 = vadd.f32 %v1776, %v1847
        %v1850 = vadd.f32 %v1777, %v1848
        %s1851 = sld [smem:[#allocation6 + $0x311]]
        %v1852 = vstv %s1851
        %v1853 = vmul.f32 %v1852, %v1813
        %v1854 = vmul.f32 %v1852, %v1814
        %v1855 = vadd.f32 %v1782, %v1853
        %v1856 = vadd.f32 %v1783, %v1854
        %s1857 = sld [smem:[#allocation6 + $0x391]]
        %v1858 = vstv %s1857
        %v1859 = vmul.f32 %v1858, %v1813
        %v1860 = vmul.f32 %v1858, %v1814
        %v1861 = vadd.f32 %v1788, %v1859
        %v1862 = vadd.f32 %v1789, %v1860
        %1863 = vrot.lane.b32.xlu0 %v454, 111
        %v1864 = vpop.permute.xlu0 %1863
        %1865 = vrot.lane.b32.xlu0 %v456, 111
        %v1866 = vpop.permute.xlu0 %1865
        %vm1867 = vcmask 908288
        %v1868 = vsel %vm1867, %v1864, %v1866
        %v1872 = vsel %vm1867, %v1866, %v1864
        %s1873 = scalar_lea.vmem [#allocation2], 34
        %v1874 = vld [vmem:[%s1873] ss:$8 sm:$0x3]
        %v1876 = vlaneseq
        %v1877 = vshrl.u32 %v1876, 7
        %v1878 = vsub.s32 0, %v1877
        %v1879 = vrot.slane %v1874, %v1878
        %v1880 = vlaneseq
        %v1881 = vshrl.u32 %v1880, 7
        %v1882 = vsub.s32 1, %v1881
        %v1883 = vrot.slane %v1874, %v1882
        %v1886 = vmul.f32 %v1868, %v1879
        %v1887 = vmul.f32 %v1872, %v1883
        %s1888 = sld [smem:[#allocation6 + $0x12]]
        %v1889 = vstv %s1888
        %v1890 = vmul.f32 %v1889, %v1886
        %v1891 = vmul.f32 %v1889, %v1887
        %v1892 = vadd.f32 %v1819, %v1890
        %v1893 = vadd.f32 %v1820, %v1891
        %s1894 = sld [smem:[#allocation6 + $0x92]]
        %v1895 = vstv %s1894
        %v1896 = vmul.f32 %v1895, %v1886
        %v1897 = vmul.f32 %v1895, %v1887
        %v1898 = vadd.f32 %v1825, %v1896
        %v1899 = vadd.f32 %v1826, %v1897
        %s1900 = sld [smem:[#allocation6 + $0x112]]
        %v1901 = vstv %s1900
        %v1902 = vmul.f32 %v1901, %v1886
        %v1903 = vmul.f32 %v1901, %v1887
        %v1904 = vadd.f32 %v1831, %v1902
        %v1905 = vadd.f32 %v1832, %v1903
        %s1906 = sld [smem:[#allocation6 + $0x192]]
        %v1907 = vstv %s1906
        %v1908 = vmul.f32 %v1907, %v1886
        %v1909 = vmul.f32 %v1907, %v1887
        %v1910 = vadd.f32 %v1837, %v1908
        %v1911 = vadd.f32 %v1838, %v1909
        %s1912 = sld [smem:[#allocation6 + $0x212]]
        %v1913 = vstv %s1912
        %v1914 = vmul.f32 %v1913, %v1886
        %v1915 = vmul.f32 %v1913, %v1887
        %v1916 = vadd.f32 %v1843, %v1914
        %v1917 = vadd.f32 %v1844, %v1915
        %s1918 = sld [smem:[#allocation6 + $0x292]]
        %v1919 = vstv %s1918
        %v1920 = vmul.f32 %v1919, %v1886
        %v1921 = vmul.f32 %v1919, %v1887
        %v1922 = vadd.f32 %v1849, %v1920
        %v1923 = vadd.f32 %v1850, %v1921
        %s1924 = sld [smem:[#allocation6 + $0x312]]
        %v1925 = vstv %s1924
        %v1926 = vmul.f32 %v1925, %v1886
        %v1927 = vmul.f32 %v1925, %v1887
        %v1928 = vadd.f32 %v1855, %v1926
        %v1929 = vadd.f32 %v1856, %v1927
        %s1930 = sld [smem:[#allocation6 + $0x392]]
        %v1931 = vstv %s1930
        %v1932 = vmul.f32 %v1931, %v1886
        %v1933 = vmul.f32 %v1931, %v1887
        %v1934 = vadd.f32 %v1861, %v1932
        %v1935 = vadd.f32 %v1862, %v1933
        %1936 = vrot.lane.b32.xlu0 %v454, 110
        %v1937 = vpop.permute.xlu0 %1936
        %1938 = vrot.lane.b32.xlu0 %v456, 110
        %v1939 = vpop.permute.xlu0 %1938
        %vm1940 = vcmask 900096
        %v1941 = vsel %vm1940, %v1937, %v1939
        %v1945 = vsel %vm1940, %v1939, %v1937
        %s1946 = scalar_lea.vmem [#allocation2], 35
        %v1947 = vld [vmem:[%s1946] ss:$8 sm:$0x3]
        %v1949 = vlaneseq
        %v1950 = vshrl.u32 %v1949, 7
        %v1951 = vsub.s32 0, %v1950
        %v1952 = vrot.slane %v1947, %v1951
        %v1953 = vlaneseq
        %v1954 = vshrl.u32 %v1953, 7
        %v1955 = vsub.s32 1, %v1954
        %v1956 = vrot.slane %v1947, %v1955
        %v1959 = vmul.f32 %v1941, %v1952
        %v1960 = vmul.f32 %v1945, %v1956
        %s1961 = sld [smem:[#allocation6 + $0x13]]
        %v1962 = vstv %s1961
        %v1963 = vmul.f32 %v1962, %v1959
        %v1964 = vmul.f32 %v1962, %v1960
        %v1965 = vadd.f32 %v1892, %v1963
        %v1966 = vadd.f32 %v1893, %v1964
        %s1967 = sld [smem:[#allocation6 + $0x93]]
        %v1968 = vstv %s1967
        %v1969 = vmul.f32 %v1968, %v1959
        %v1970 = vmul.f32 %v1968, %v1960
        %v1971 = vadd.f32 %v1898, %v1969
        %v1972 = vadd.f32 %v1899, %v1970
        %s1973 = sld [smem:[#allocation6 + $0x113]]
        %v1974 = vstv %s1973
        %v1975 = vmul.f32 %v1974, %v1959
        %v1976 = vmul.f32 %v1974, %v1960
        %v1977 = vadd.f32 %v1904, %v1975
        %v1978 = vadd.f32 %v1905, %v1976
        %s1979 = sld [smem:[#allocation6 + $0x193]]
        %v1980 = vstv %s1979
        %v1981 = vmul.f32 %v1980, %v1959
        %v1982 = vmul.f32 %v1980, %v1960
        %v1983 = vadd.f32 %v1910, %v1981
        %v1984 = vadd.f32 %v1911, %v1982
        %s1985 = sld [smem:[#allocation6 + $0x213]]
        %v1986 = vstv %s1985
        %v1987 = vmul.f32 %v1986, %v1959
        %v1988 = vmul.f32 %v1986, %v1960
        %v1989 = vadd.f32 %v1916, %v1987
        %v1990 = vadd.f32 %v1917, %v1988
        %s1991 = sld [smem:[#allocation6 + $0x293]]
        %v1992 = vstv %s1991
        %v1993 = vmul.f32 %v1992, %v1959
        %v1994 = vmul.f32 %v1992, %v1960
        %v1995 = vadd.f32 %v1922, %v1993
        %v1996 = vadd.f32 %v1923, %v1994
        %s1997 = sld [smem:[#allocation6 + $0x313]]
        %v1998 = vstv %s1997
        %v1999 = vmul.f32 %v1998, %v1959
        %v2000 = vmul.f32 %v1998, %v1960
        %v2001 = vadd.f32 %v1928, %v1999
        %v2002 = vadd.f32 %v1929, %v2000
        %s2003 = sld [smem:[#allocation6 + $0x393]]
        %v2004 = vstv %s2003
        %v2005 = vmul.f32 %v2004, %v1959
        %v2006 = vmul.f32 %v2004, %v1960
        %v2007 = vadd.f32 %v1934, %v2005
        %v2008 = vadd.f32 %v1935, %v2006
        %2009 = vrot.lane.b32.xlu0 %v454, 98
        %v2010 = vpop.permute.xlu0 %2009
        %2011 = vrot.lane.b32.xlu0 %v456, 98
        %v2012 = vpop.permute.xlu0 %2011
        %vm2013 = vcmask 801792
        %v2014 = vsel %vm2013, %v2010, %v2012
        %v2018 = vsel %vm2013, %v2012, %v2010
        %s2019 = scalar_lea.vmem [#allocation2], 36
        %v2020 = vld [vmem:[%s2019] ss:$8 sm:$0x3]
        %v2022 = vlaneseq
        %v2023 = vshrl.u32 %v2022, 7
        %v2024 = vsub.s32 0, %v2023
        %v2025 = vrot.slane %v2020, %v2024
        %v2026 = vlaneseq
        %v2027 = vshrl.u32 %v2026, 7
        %v2028 = vsub.s32 1, %v2027
        %v2029 = vrot.slane %v2020, %v2028
        %v2032 = vmul.f32 %v2014, %v2025
        %v2033 = vmul.f32 %v2018, %v2029
        %s2034 = sld [smem:[#allocation6 + $0x14]]
        %v2035 = vstv %s2034
        %v2036 = vmul.f32 %v2035, %v2032
        %v2037 = vmul.f32 %v2035, %v2033
        %v2038 = vadd.f32 %v1965, %v2036
        %v2039 = vadd.f32 %v1966, %v2037
        %s2040 = sld [smem:[#allocation6 + $0x94]]
        %v2041 = vstv %s2040
        %v2042 = vmul.f32 %v2041, %v2032
        %v2043 = vmul.f32 %v2041, %v2033
        %v2044 = vadd.f32 %v1971, %v2042
        %v2045 = vadd.f32 %v1972, %v2043
        %s2046 = sld [smem:[#allocation6 + $0x114]]
        %v2047 = vstv %s2046
        %v2048 = vmul.f32 %v2047, %v2032
        %v2049 = vmul.f32 %v2047, %v2033
        %v2050 = vadd.f32 %v1977, %v2048
        %v2051 = vadd.f32 %v1978, %v2049
        %s2052 = sld [smem:[#allocation6 + $0x194]]
        %v2053 = vstv %s2052
        %v2054 = vmul.f32 %v2053, %v2032
        %v2055 = vmul.f32 %v2053, %v2033
        %v2056 = vadd.f32 %v1983, %v2054
        %v2057 = vadd.f32 %v1984, %v2055
        %s2058 = sld [smem:[#allocation6 + $0x214]]
        %v2059 = vstv %s2058
        %v2060 = vmul.f32 %v2059, %v2032
        %v2061 = vmul.f32 %v2059, %v2033
        %v2062 = vadd.f32 %v1989, %v2060
        %v2063 = vadd.f32 %v1990, %v2061
        %s2064 = sld [smem:[#allocation6 + $0x294]]
        %v2065 = vstv %s2064
        %v2066 = vmul.f32 %v2065, %v2032
        %v2067 = vmul.f32 %v2065, %v2033
        %v2068 = vadd.f32 %v1995, %v2066
        %v2069 = vadd.f32 %v1996, %v2067
        %s2070 = sld [smem:[#allocation6 + $0x314]]
        %v2071 = vstv %s2070
        %v2072 = vmul.f32 %v2071, %v2032
        %v2073 = vmul.f32 %v2071, %v2033
        %v2074 = vadd.f32 %v2001, %v2072
        %v2075 = vadd.f32 %v2002, %v2073
        %s2076 = sld [smem:[#allocation6 + $0x394]]
        %v2077 = vstv %s2076
        %v2078 = vmul.f32 %v2077, %v2032
        %v2079 = vmul.f32 %v2077, %v2033
        %v2080 = vadd.f32 %v2007, %v2078
        %v2081 = vadd.f32 %v2008, %v2079
        %2082 = vrot.lane.b32.xlu0 %v454, 97
        %v2083 = vpop.permute.xlu0 %2082
        %2084 = vrot.lane.b32.xlu0 %v456, 97
        %v2085 = vpop.permute.xlu0 %2084
        %vm2086 = vcmask 793600
        %v2087 = vsel %vm2086, %v2083, %v2085
        %v2091 = vsel %vm2086, %v2085, %v2083
        %s2092 = scalar_lea.vmem [#allocation2], 37
        %v2093 = vld [vmem:[%s2092] ss:$8 sm:$0x3]
        %v2095 = vlaneseq
        %v2096 = vshrl.u32 %v2095, 7
        %v2097 = vsub.s32 0, %v2096
        %v2098 = vrot.slane %v2093, %v2097
        %v2099 = vlaneseq
        %v2100 = vshrl.u32 %v2099, 7
        %v2101 = vsub.s32 1, %v2100
        %v2102 = vrot.slane %v2093, %v2101
        %v2105 = vmul.f32 %v2087, %v2098
        %v2106 = vmul.f32 %v2091, %v2102
        %s2107 = sld [smem:[#allocation6 + $0x15]]
        %v2108 = vstv %s2107
        %v2109 = vmul.f32 %v2108, %v2105
        %v2110 = vmul.f32 %v2108, %v2106
        %v2111 = vadd.f32 %v2038, %v2109
        %v2112 = vadd.f32 %v2039, %v2110
        %s2113 = sld [smem:[#allocation6 + $0x95]]
        %v2114 = vstv %s2113
        %v2115 = vmul.f32 %v2114, %v2105
        %v2116 = vmul.f32 %v2114, %v2106
        %v2117 = vadd.f32 %v2044, %v2115
        %v2118 = vadd.f32 %v2045, %v2116
        %s2119 = sld [smem:[#allocation6 + $0x115]]
        %v2120 = vstv %s2119
        %v2121 = vmul.f32 %v2120, %v2105
        %v2122 = vmul.f32 %v2120, %v2106
        %v2123 = vadd.f32 %v2050, %v2121
        %v2124 = vadd.f32 %v2051, %v2122
        %s2125 = sld [smem:[#allocation6 + $0x195]]
        %v2126 = vstv %s2125
        %v2127 = vmul.f32 %v2126, %v2105
        %v2128 = vmul.f32 %v2126, %v2106
        %v2129 = vadd.f32 %v2056, %v2127
        %v2130 = vadd.f32 %v2057, %v2128
        %s2131 = sld [smem:[#allocation6 + $0x215]]
        %v2132 = vstv %s2131
        %v2133 = vmul.f32 %v2132, %v2105
        %v2134 = vmul.f32 %v2132, %v2106
        %v2135 = vadd.f32 %v2062, %v2133
        %v2136 = vadd.f32 %v2063, %v2134
        %s2137 = sld [smem:[#allocation6 + $0x295]]
        %v2138 = vstv %s2137
        %v2139 = vmul.f32 %v2138, %v2105
        %v2140 = vmul.f32 %v2138, %v2106
        %v2141 = vadd.f32 %v2068, %v2139
        %v2142 = vadd.f32 %v2069, %v2140
        %s2143 = sld [smem:[#allocation6 + $0x315]]
        %v2144 = vstv %s2143
        %v2145 = vmul.f32 %v2144, %v2105
        %v2146 = vmul.f32 %v2144, %v2106
        %v2147 = vadd.f32 %v2074, %v2145
        %v2148 = vadd.f32 %v2075, %v2146
        %s2149 = sld [smem:[#allocation6 + $0x395]]
        %v2150 = vstv %s2149
        %v2151 = vmul.f32 %v2150, %v2105
        %v2152 = vmul.f32 %v2150, %v2106
        %v2153 = vadd.f32 %v2080, %v2151
        %v2154 = vadd.f32 %v2081, %v2152
        %2155 = vrot.lane.b32.xlu0 %v454, 96
        %v2156 = vpop.permute.xlu0 %2155
        %2157 = vrot.lane.b32.xlu0 %v456, 96
        %v2158 = vpop.permute.xlu0 %2157
        %vm2159 = vcmask 785408
        %v2160 = vsel %vm2159, %v2156, %v2158
        %v2164 = vsel %vm2159, %v2158, %v2156
        %s2165 = scalar_lea.vmem [#allocation2], 38
        %v2166 = vld [vmem:[%s2165] ss:$8 sm:$0x3]
        %v2168 = vlaneseq
        %v2169 = vshrl.u32 %v2168, 7
        %v2170 = vsub.s32 0, %v2169
        %v2171 = vrot.slane %v2166, %v2170
        %v2172 = vlaneseq
        %v2173 = vshrl.u32 %v2172, 7
        %v2174 = vsub.s32 1, %v2173
        %v2175 = vrot.slane %v2166, %v2174
        %v2178 = vmul.f32 %v2160, %v2171
        %v2179 = vmul.f32 %v2164, %v2175
        %s2180 = sld [smem:[#allocation6 + $0x16]]
        %v2181 = vstv %s2180
        %v2182 = vmul.f32 %v2181, %v2178
        %v2183 = vmul.f32 %v2181, %v2179
        %v2184 = vadd.f32 %v2111, %v2182
        %v2185 = vadd.f32 %v2112, %v2183
        %s2186 = sld [smem:[#allocation6 + $0x96]]
        %v2187 = vstv %s2186
        %v2188 = vmul.f32 %v2187, %v2178
        %v2189 = vmul.f32 %v2187, %v2179
        %v2190 = vadd.f32 %v2117, %v2188
        %v2191 = vadd.f32 %v2118, %v2189
        %s2192 = sld [smem:[#allocation6 + $0x116]]
        %v2193 = vstv %s2192
        %v2194 = vmul.f32 %v2193, %v2178
        %v2195 = vmul.f32 %v2193, %v2179
        %v2196 = vadd.f32 %v2123, %v2194
        %v2197 = vadd.f32 %v2124, %v2195
        %s2198 = sld [smem:[#allocation6 + $0x196]]
        %v2199 = vstv %s2198
        %v2200 = vmul.f32 %v2199, %v2178
        %v2201 = vmul.f32 %v2199, %v2179
        %v2202 = vadd.f32 %v2129, %v2200
        %v2203 = vadd.f32 %v2130, %v2201
        %s2204 = sld [smem:[#allocation6 + $0x216]]
        %v2205 = vstv %s2204
        %v2206 = vmul.f32 %v2205, %v2178
        %v2207 = vmul.f32 %v2205, %v2179
        %v2208 = vadd.f32 %v2135, %v2206
        %v2209 = vadd.f32 %v2136, %v2207
        %s2210 = sld [smem:[#allocation6 + $0x296]]
        %v2211 = vstv %s2210
        %v2212 = vmul.f32 %v2211, %v2178
        %v2213 = vmul.f32 %v2211, %v2179
        %v2214 = vadd.f32 %v2141, %v2212
        %v2215 = vadd.f32 %v2142, %v2213
        %s2216 = sld [smem:[#allocation6 + $0x316]]
        %v2217 = vstv %s2216
        %v2218 = vmul.f32 %v2217, %v2178
        %v2219 = vmul.f32 %v2217, %v2179
        %v2220 = vadd.f32 %v2147, %v2218
        %v2221 = vadd.f32 %v2148, %v2219
        %s2222 = sld [smem:[#allocation6 + $0x396]]
        %v2223 = vstv %s2222
        %v2224 = vmul.f32 %v2223, %v2178
        %v2225 = vmul.f32 %v2223, %v2179
        %v2226 = vadd.f32 %v2153, %v2224
        %v2227 = vadd.f32 %v2154, %v2225
        %2228 = vrot.lane.b32.xlu0 %v454, 95
        %v2229 = vpop.permute.xlu0 %2228
        %2230 = vrot.lane.b32.xlu0 %v456, 95
        %v2231 = vpop.permute.xlu0 %2230
        %vm2232 = vcmask 777216
        %v2233 = vsel %vm2232, %v2229, %v2231
        %v2237 = vsel %vm2232, %v2231, %v2229
        %s2238 = scalar_lea.vmem [#allocation2], 39
        %v2239 = vld [vmem:[%s2238] ss:$8 sm:$0x3]
        %v2241 = vlaneseq
        %v2242 = vshrl.u32 %v2241, 7
        %v2243 = vsub.s32 0, %v2242
        %v2244 = vrot.slane %v2239, %v2243
        %v2245 = vlaneseq
        %v2246 = vshrl.u32 %v2245, 7
        %v2247 = vsub.s32 1, %v2246
        %v2248 = vrot.slane %v2239, %v2247
        %v2251 = vmul.f32 %v2233, %v2244
        %v2252 = vmul.f32 %v2237, %v2248
        %s2253 = sld [smem:[#allocation6 + $0x17]]
        %v2254 = vstv %s2253
        %v2255 = vmul.f32 %v2254, %v2251
        %v2256 = vmul.f32 %v2254, %v2252
        %v2257 = vadd.f32 %v2184, %v2255
        %v2258 = vadd.f32 %v2185, %v2256
        %s2259 = sld [smem:[#allocation6 + $0x97]]
        %v2260 = vstv %s2259
        %v2261 = vmul.f32 %v2260, %v2251
        %v2262 = vmul.f32 %v2260, %v2252
        %v2263 = vadd.f32 %v2190, %v2261
        %v2264 = vadd.f32 %v2191, %v2262
        %s2265 = sld [smem:[#allocation6 + $0x117]]
        %v2266 = vstv %s2265
        %v2267 = vmul.f32 %v2266, %v2251
        %v2268 = vmul.f32 %v2266, %v2252
        %v2269 = vadd.f32 %v2196, %v2267
        %v2270 = vadd.f32 %v2197, %v2268
        %s2271 = sld [smem:[#allocation6 + $0x197]]
        %v2272 = vstv %s2271
        %v2273 = vmul.f32 %v2272, %v2251
        %v2274 = vmul.f32 %v2272, %v2252
        %v2275 = vadd.f32 %v2202, %v2273
        %v2276 = vadd.f32 %v2203, %v2274
        %s2277 = sld [smem:[#allocation6 + $0x217]]
        %v2278 = vstv %s2277
        %v2279 = vmul.f32 %v2278, %v2251
        %v2280 = vmul.f32 %v2278, %v2252
        %v2281 = vadd.f32 %v2208, %v2279
        %v2282 = vadd.f32 %v2209, %v2280
        %s2283 = sld [smem:[#allocation6 + $0x297]]
        %v2284 = vstv %s2283
        %v2285 = vmul.f32 %v2284, %v2251
        %v2286 = vmul.f32 %v2284, %v2252
        %v2287 = vadd.f32 %v2214, %v2285
        %v2288 = vadd.f32 %v2215, %v2286
        %s2289 = sld [smem:[#allocation6 + $0x317]]
        %v2290 = vstv %s2289
        %v2291 = vmul.f32 %v2290, %v2251
        %v2292 = vmul.f32 %v2290, %v2252
        %v2293 = vadd.f32 %v2220, %v2291
        %v2294 = vadd.f32 %v2221, %v2292
        %s2295 = sld [smem:[#allocation6 + $0x397]]
        %v2296 = vstv %s2295
        %v2297 = vmul.f32 %v2296, %v2251
        %v2298 = vmul.f32 %v2296, %v2252
        %v2299 = vadd.f32 %v2226, %v2297
        %v2300 = vadd.f32 %v2227, %v2298
        %2301 = vrot.lane.b32.xlu0 %v454, 94
        %v2302 = vpop.permute.xlu0 %2301
        %2303 = vrot.lane.b32.xlu0 %v456, 94
        %v2304 = vpop.permute.xlu0 %2303
        %vm2305 = vcmask 769024
        %v2306 = vsel %vm2305, %v2302, %v2304
        %v2310 = vsel %vm2305, %v2304, %v2302
        %s2311 = scalar_lea.vmem [#allocation2], 48
        %v2312 = vld [vmem:[%s2311] ss:$8 sm:$0x3]
        %v2314 = vlaneseq
        %v2315 = vshrl.u32 %v2314, 7
        %v2316 = vsub.s32 0, %v2315
        %v2317 = vrot.slane %v2312, %v2316
        %v2318 = vlaneseq
        %v2319 = vshrl.u32 %v2318, 7
        %v2320 = vsub.s32 1, %v2319
        %v2321 = vrot.slane %v2312, %v2320
        %v2324 = vmul.f32 %v2306, %v2317
        %v2325 = vmul.f32 %v2310, %v2321
        %s2326 = sld [smem:[#allocation6 + $0x18]]
        %v2327 = vstv %s2326
        %v2328 = vmul.f32 %v2327, %v2324
        %v2329 = vmul.f32 %v2327, %v2325
        %v2330 = vadd.f32 %v2257, %v2328
        %v2331 = vadd.f32 %v2258, %v2329
        %s2332 = sld [smem:[#allocation6 + $0x98]]
        %v2333 = vstv %s2332
        %v2334 = vmul.f32 %v2333, %v2324
        %v2335 = vmul.f32 %v2333, %v2325
        %v2336 = vadd.f32 %v2263, %v2334
        %v2337 = vadd.f32 %v2264, %v2335
        %s2338 = sld [smem:[#allocation6 + $0x118]]
        %v2339 = vstv %s2338
        %v2340 = vmul.f32 %v2339, %v2324
        %v2341 = vmul.f32 %v2339, %v2325
        %v2342 = vadd.f32 %v2269, %v2340
        %v2343 = vadd.f32 %v2270, %v2341
        %s2344 = sld [smem:[#allocation6 + $0x198]]
        %v2345 = vstv %s2344
        %v2346 = vmul.f32 %v2345, %v2324
        %v2347 = vmul.f32 %v2345, %v2325
        %v2348 = vadd.f32 %v2275, %v2346
        %v2349 = vadd.f32 %v2276, %v2347
        %s2350 = sld [smem:[#allocation6 + $0x218]]
        %v2351 = vstv %s2350
        %v2352 = vmul.f32 %v2351, %v2324
        %v2353 = vmul.f32 %v2351, %v2325
        %v2354 = vadd.f32 %v2281, %v2352
        %v2355 = vadd.f32 %v2282, %v2353
        %s2356 = sld [smem:[#allocation6 + $0x298]]
        %v2357 = vstv %s2356
        %v2358 = vmul.f32 %v2357, %v2324
        %v2359 = vmul.f32 %v2357, %v2325
        %v2360 = vadd.f32 %v2287, %v2358
        %v2361 = vadd.f32 %v2288, %v2359
        %s2362 = sld [smem:[#allocation6 + $0x318]]
        %v2363 = vstv %s2362
        %v2364 = vmul.f32 %v2363, %v2324
        %v2365 = vmul.f32 %v2363, %v2325
        %v2366 = vadd.f32 %v2293, %v2364
        %v2367 = vadd.f32 %v2294, %v2365
        %s2368 = sld [smem:[#allocation6 + $0x398]]
        %v2369 = vstv %s2368
        %v2370 = vmul.f32 %v2369, %v2324
        %v2371 = vmul.f32 %v2369, %v2325
        %v2372 = vadd.f32 %v2299, %v2370
        %v2373 = vadd.f32 %v2300, %v2371
        %v2374 = vlaneseq
        %v2375 = vshrl.u32 %v2374, 7
        %v2376 = vsub.s32 0, %v2375
        %v2377 = vrot.slane %v424, %v2376
        %v2378 = vlaneseq
        %v2379 = vshrl.u32 %v2378, 7
        %v2380 = vsub.s32 0, %v2379
        %v2381 = vrot.slane %v426, %v2380
        %v2382 = vmul.f32 %v2377, %v2330
        %v2383 = vmul.f32 %v2381, %v2331
        %vm2384 = vcmask 64512
        %v2386 = vsel %vm2384, %v540, 0
        %2388 = vmatprep.subr.mxu0 %v426
        %2389 = vmatpush1.msra.mxu0 %v424
        %2390 = vmatprep.subr.mxu0 0.0
        %2391 = vmatpush1.msra.mxu0 0.0
        %2392 = vmatprep.subr.mxu0 0.0
        %2393 = vmatpush1.msra.mxu0 0.0
        %2394 = vmatprep.subr.mxu0 0.0
        %2395 = vmatpush1.msra.mxu0 0.0
        %2396 = vmatprep.subr.mxu0 0.0
        %2397 = vmatpush1.msra.mxu0 0.0
        %2398 = vmatprep.subr.mxu0 0.0
        %2399 = vmatpush1.msra.mxu0 0.0
        %2400 = vmatprep.subr.mxu0 0.0
        %2401 = vmatpush1.msra.mxu0 0.0
        %2402 = vmatprep.subr.mxu0 0.0
        %2403 = vmatpush1.msra.mxu0 0.0
        %2404 = vmatprep.subr.mxu0 0.0
        %2405 = vmatpush1.msra.mxu0 0.0
        %2406 = vmatprep.subr.mxu0 0.0
        %2407 = vmatpush1.msra.mxu0 0.0
        %2408 = vmatprep.subr.mxu0 0.0
        %2409 = vmatpush1.msra.mxu0 0.0
        %2410 = vmatprep.subr.mxu0 0.0
        %2411 = vmatpush1.msra.mxu0 0.0
        %2412 = vmatprep.subr.mxu0 0.0
        %2413 = vmatpush1.msra.mxu0 0.0
        %2414 = vmatprep.subr.mxu0 0.0
        %2415 = vmatpush1.msra.mxu0 0.0
        %2416 = vmatprep.subr.mxu0 0.0
        %2417 = vmatpush1.msra.mxu0 0.0
        %2418 = vmatprep.subr.mxu0 0.0
        %2419 = vmatpush1.msra.mxu0 0.0
        %2420 = vmatprep.subr.mxu0 0.0
        %2421 = vmatpush1.msra.mxu0 0.0
        %2422 = vmatprep.subr.mxu0 0.0
        %2423 = vmatpush1.msra.mxu0 0.0
        %2424 = vmatprep.subr.mxu0 0.0
        %2425 = vmatpush1.msra.mxu0 0.0
        %2426 = vmatprep.subr.mxu0 0.0
        %2427 = vmatpush1.msra.mxu0 0.0
        %2428 = vmatprep.subr.mxu0 0.0
        %2429 = vmatpush1.msra.mxu0 0.0
        %2430 = vmatprep.subr.mxu0 0.0
        %2431 = vmatpush1.msra.mxu0 0.0
        %2432 = vmatprep.subr.mxu0 0.0
        %2433 = vmatpush1.msra.mxu0 0.0
        %2434 = vmatprep.subr.mxu0 0.0
        %2435 = vmatpush1.msra.mxu0 0.0
        %2436 = vmatprep.subr.mxu0 0.0
        %2437 = vmatpush1.msra.mxu0 0.0
        %2438 = vmatprep.subr.mxu0 0.0
        %2439 = vmatpush1.msra.mxu0 0.0
        %2440 = vmatprep.subr.mxu0 0.0
        %2441 = vmatpush1.msra.mxu0 0.0
        %2442 = vmatprep.subr.mxu0 0.0
        %2443 = vmatpush1.msra.mxu0 0.0
        %2444 = vmatprep.subr.mxu0 0.0
        %2445 = vmatpush1.msra.mxu0 0.0
        %2446 = vmatprep.subr.mxu0 0.0
        %2447 = vmatpush1.msra.mxu0 0.0
        %2448 = vmatprep.subr.mxu0 0.0
        %2449 = vmatpush1.msra.mxu0 0.0
        %2450 = vmatprep.subr.mxu0 0.0
        %2451 = vmatpush1.msra.mxu0 0.0
        %2452 = vmatprep.mubr.f32.mxu0 0.0
        %2453 = vmatmul.mubr.f32.gmra.mrb[0].mxu0 %v2386
        %v2454 = vpop.f32.mrb[0].mxu0
        %v2455 = vadd.f32 %v2382, %v2454
        %v2456 = vpop.f32.mrb[0].mxu0
        %v2457 = vadd.f32 %v2383, %v2456
        %2458 = vdwg.mxu0
        %v2459 = vlaneseq
        %v2460 = vshrl.u32 %v2459, 7
        %v2461 = vsub.s32 1, %v2460
        %v2462 = vrot.slane %v424, %v2461
        %v2463 = vlaneseq
        %v2464 = vshrl.u32 %v2463, 7
        %v2465 = vsub.s32 1, %v2464
        %v2466 = vrot.slane %v426, %v2465
        %v2467 = vmul.f32 %v2462, %v2336
        %v2468 = vmul.f32 %v2466, %v2337
        %v2469 = vadd.f32 %v2455, %v2467
        %v2470 = vadd.f32 %v2457, %v2468
        %v2471 = vlaneseq
        %v2472 = vshrl.u32 %v2471, 7
        %v2473 = vsub.s32 2, %v2472
        %v2474 = vrot.slane %v424, %v2473
        %v2475 = vlaneseq
        %v2476 = vshrl.u32 %v2475, 7
        %v2477 = vsub.s32 2, %v2476
        %v2478 = vrot.slane %v426, %v2477
        %v2479 = vmul.f32 %v2474, %v2342
        %v2480 = vmul.f32 %v2478, %v2343
        %v2481 = vadd.f32 %v2469, %v2479
        %v2482 = vadd.f32 %v2470, %v2480
        %v2483 = vlaneseq
        %v2484 = vshrl.u32 %v2483, 7
        %v2485 = vsub.s32 3, %v2484
        %v2486 = vrot.slane %v424, %v2485
        %v2487 = vlaneseq
        %v2488 = vshrl.u32 %v2487, 7
        %v2489 = vsub.s32 3, %v2488
        %v2490 = vrot.slane %v426, %v2489
        %v2491 = vmul.f32 %v2486, %v2348
        %v2492 = vmul.f32 %v2490, %v2349
        %v2493 = vadd.f32 %v2481, %v2491
        %v2494 = vadd.f32 %v2482, %v2492
        %v2495 = vlaneseq
        %v2496 = vshrl.u32 %v2495, 7
        %v2497 = vsub.s32 4, %v2496
        %v2498 = vrot.slane %v424, %v2497
        %v2499 = vlaneseq
        %v2500 = vshrl.u32 %v2499, 7
        %v2501 = vsub.s32 4, %v2500
        %v2502 = vrot.slane %v426, %v2501
        %v2503 = vmul.f32 %v2498, %v2354
        %v2504 = vmul.f32 %v2502, %v2355
        %v2505 = vadd.f32 %v2493, %v2503
        %v2506 = vadd.f32 %v2494, %v2504
        %v2507 = vlaneseq
        %v2508 = vshrl.u32 %v2507, 7
        %v2509 = vsub.s32 5, %v2508
        %v2510 = vrot.slane %v424, %v2509
        %v2511 = vlaneseq
        %v2512 = vshrl.u32 %v2511, 7
        %v2513 = vsub.s32 5, %v2512
        %v2514 = vrot.slane %v426, %v2513
        %v2515 = vmul.f32 %v2510, %v2360
        %v2516 = vmul.f32 %v2514, %v2361
        %v2517 = vadd.f32 %v2505, %v2515
        %v2518 = vadd.f32 %v2506, %v2516
        %v2519 = vlaneseq
        %v2520 = vshrl.u32 %v2519, 7
        %v2521 = vsub.s32 6, %v2520
        %v2522 = vrot.slane %v424, %v2521
        %v2523 = vlaneseq
        %v2524 = vshrl.u32 %v2523, 7
        %v2525 = vsub.s32 6, %v2524
        %v2526 = vrot.slane %v426, %v2525
        %v2527 = vmul.f32 %v2522, %v2366
        %v2528 = vmul.f32 %v2526, %v2367
        %v2529 = vadd.f32 %v2517, %v2527
        %v2530 = vadd.f32 %v2518, %v2528
        %v2531 = vlaneseq
        %v2532 = vshrl.u32 %v2531, 7
        %v2533 = vsub.s32 7, %v2532
        %v2534 = vrot.slane %v424, %v2533
        %v2535 = vlaneseq
        %v2536 = vshrl.u32 %v2535, 7
        %v2537 = vsub.s32 7, %v2536
        %v2538 = vrot.slane %v426, %v2537
        %v2539 = vmul.f32 %v2534, %v2372
        %v2540 = vmul.f32 %v2538, %v2373
        %v2541 = vadd.f32 %v2529, %v2539
        %v2542 = vadd.f32 %v2530, %v2540
        %2543 = vst [vmem:[%s286] sm:$0xf] %v2541
        %2544 = vst [vmem:[%s286 + $0x8] sm:$0xf] %v2542
        %v2545 = vlaneseq
        %v2546 = vshrl.u32 %v2545, 7
        %v2547 = vsub.s32 0, %v2546
        %v2548 = vrot.slane %v430, %v2547
        %v2549 = vlaneseq
        %v2550 = vshrl.u32 %v2549, 7
        %v2551 = vsub.s32 0, %v2550
        %v2552 = vrot.slane %v432, %v2551
        %v2553 = vmul.f32 %v2548, %v2330
        %v2554 = vmul.f32 %v2552, %v2331
        %2555 = vmatprep.subr.mxu0 %v432
        %2556 = vmatpush1.msra.mxu0 %v430
        %2557 = vmatprep.subr.mxu0 0.0
        %2558 = vmatpush1.msra.mxu0 0.0
        %2559 = vmatprep.subr.mxu0 0.0
        %2560 = vmatpush1.msra.mxu0 0.0
        %2561 = vmatprep.subr.mxu0 0.0
        %2562 = vmatpush1.msra.mxu0 0.0
        %2563 = vmatprep.subr.mxu0 0.0
        %2564 = vmatpush1.msra.mxu0 0.0
        %2565 = vmatprep.subr.mxu0 0.0
        %2566 = vmatpush1.msra.mxu0 0.0
        %2567 = vmatprep.subr.mxu0 0.0
        %2568 = vmatpush1.msra.mxu0 0.0
        %2569 = vmatprep.subr.mxu0 0.0
        %2570 = vmatpush1.msra.mxu0 0.0
        %2571 = vmatprep.subr.mxu0 0.0
        %2572 = vmatpush1.msra.mxu0 0.0
        %2573 = vmatprep.subr.mxu0 0.0
        %2574 = vmatpush1.msra.mxu0 0.0
        %2575 = vmatprep.subr.mxu0 0.0
        %2576 = vmatpush1.msra.mxu0 0.0
        %2577 = vmatprep.subr.mxu0 0.0
        %2578 = vmatpush1.msra.mxu0 0.0
        %2579 = vmatprep.subr.mxu0 0.0
        %2580 = vmatpush1.msra.mxu0 0.0
        %2581 = vmatprep.subr.mxu0 0.0
        %2582 = vmatpush1.msra.mxu0 0.0
        %2583 = vmatprep.subr.mxu0 0.0
        %2584 = vmatpush1.msra.mxu0 0.0
        %2585 = vmatprep.subr.mxu0 0.0
        %2586 = vmatpush1.msra.mxu0 0.0
        %2587 = vmatprep.subr.mxu0 0.0
        %2588 = vmatpush1.msra.mxu0 0.0
        %2589 = vmatprep.subr.mxu0 0.0
        %2590 = vmatpush1.msra.mxu0 0.0
        %2591 = vmatprep.subr.mxu0 0.0
        %2592 = vmatpush1.msra.mxu0 0.0
        %2593 = vmatprep.subr.mxu0 0.0
        %2594 = vmatpush1.msra.mxu0 0.0
        %2595 = vmatprep.subr.mxu0 0.0
        %2596 = vmatpush1.msra.mxu0 0.0
        %2597 = vmatprep.subr.mxu0 0.0
        %2598 = vmatpush1.msra.mxu0 0.0
        %2599 = vmatprep.subr.mxu0 0.0
        %2600 = vmatpush1.msra.mxu0 0.0
        %2601 = vmatprep.subr.mxu0 0.0
        %2602 = vmatpush1.msra.mxu0 0.0
        %2603 = vmatprep.subr.mxu0 0.0
        %2604 = vmatpush1.msra.mxu0 0.0
        %2605 = vmatprep.subr.mxu0 0.0
        %2606 = vmatpush1.msra.mxu0 0.0
        %2607 = vmatprep.subr.mxu0 0.0
        %2608 = vmatpush1.msra.mxu0 0.0
        %2609 = vmatprep.subr.mxu0 0.0
        %2610 = vmatpush1.msra.mxu0 0.0
        %2611 = vmatprep.subr.mxu0 0.0
        %2612 = vmatpush1.msra.mxu0 0.0
        %2613 = vmatprep.subr.mxu0 0.0
        %2614 = vmatpush1.msra.mxu0 0.0
        %2615 = vmatprep.subr.mxu0 0.0
        %2616 = vmatpush1.msra.mxu0 0.0
        %2617 = vmatprep.subr.mxu0 0.0
        %2618 = vmatpush1.msra.mxu0 0.0
        %2619 = vmatprep.mubr.f32.mxu0 0.0
        %2620 = vmatmul.mubr.f32.gmra.mrb[0].mxu0 %v2386
        %v2621 = vpop.f32.mrb[0].mxu0
        %v2622 = vadd.f32 %v2553, %v2621
        %v2623 = vpop.f32.mrb[0].mxu0
        %v2624 = vadd.f32 %v2554, %v2623
        %2625 = vdwg.mxu0
        %v2626 = vlaneseq
        %v2627 = vshrl.u32 %v2626, 7
        %v2628 = vsub.s32 1, %v2627
        %v2629 = vrot.slane %v430, %v2628
        %v2630 = vlaneseq
        %v2631 = vshrl.u32 %v2630, 7
        %v2632 = vsub.s32 1, %v2631
        %v2633 = vrot.slane %v432, %v2632
        %v2634 = vmul.f32 %v2629, %v2336
        %v2635 = vmul.f32 %v2633, %v2337
        %v2636 = vadd.f32 %v2622, %v2634
        %v2637 = vadd.f32 %v2624, %v2635
        %v2638 = vlaneseq
        %v2639 = vshrl.u32 %v2638, 7
        %v2640 = vsub.s32 2, %v2639
        %v2641 = vrot.slane %v430, %v2640
        %v2642 = vlaneseq
        %v2643 = vshrl.u32 %v2642, 7
        %v2644 = vsub.s32 2, %v2643
        %v2645 = vrot.slane %v432, %v2644
        %v2646 = vmul.f32 %v2641, %v2342
        %v2647 = vmul.f32 %v2645, %v2343
        %v2648 = vadd.f32 %v2636, %v2646
        %v2649 = vadd.f32 %v2637, %v2647
        %v2650 = vlaneseq
        %v2651 = vshrl.u32 %v2650, 7
        %v2652 = vsub.s32 3, %v2651
        %v2653 = vrot.slane %v430, %v2652
        %v2654 = vlaneseq
        %v2655 = vshrl.u32 %v2654, 7
        %v2656 = vsub.s32 3, %v2655
        %v2657 = vrot.slane %v432, %v2656
        %v2658 = vmul.f32 %v2653, %v2348
        %v2659 = vmul.f32 %v2657, %v2349
        %v2660 = vadd.f32 %v2648, %v2658
        %v2661 = vadd.f32 %v2649, %v2659
        %v2662 = vlaneseq
        %v2663 = vshrl.u32 %v2662, 7
        %v2664 = vsub.s32 4, %v2663
        %v2665 = vrot.slane %v430, %v2664
        %v2666 = vlaneseq
        %v2667 = vshrl.u32 %v2666, 7
        %v2668 = vsub.s32 4, %v2667
        %v2669 = vrot.slane %v432, %v2668
        %v2670 = vmul.f32 %v2665, %v2354
        %v2671 = vmul.f32 %v2669, %v2355
        %v2672 = vadd.f32 %v2660, %v2670
        %v2673 = vadd.f32 %v2661, %v2671
        %v2674 = vlaneseq
        %v2675 = vshrl.u32 %v2674, 7
        %v2676 = vsub.s32 5, %v2675
        %v2677 = vrot.slane %v430, %v2676
        %v2678 = vlaneseq
        %v2679 = vshrl.u32 %v2678, 7
        %v2680 = vsub.s32 5, %v2679
        %v2681 = vrot.slane %v432, %v2680
        %v2682 = vmul.f32 %v2677, %v2360
        %v2683 = vmul.f32 %v2681, %v2361
        %v2684 = vadd.f32 %v2672, %v2682
        %v2685 = vadd.f32 %v2673, %v2683
        %v2686 = vlaneseq
        %v2687 = vshrl.u32 %v2686, 7
        %v2688 = vsub.s32 6, %v2687
        %v2689 = vrot.slane %v430, %v2688
        %v2690 = vlaneseq
        %v2691 = vshrl.u32 %v2690, 7
        %v2692 = vsub.s32 6, %v2691
        %v2693 = vrot.slane %v432, %v2692
        %v2694 = vmul.f32 %v2689, %v2366
        %v2695 = vmul.f32 %v2693, %v2367
        %v2696 = vadd.f32 %v2684, %v2694
        %v2697 = vadd.f32 %v2685, %v2695
        %v2698 = vlaneseq
        %v2699 = vshrl.u32 %v2698, 7
        %v2700 = vsub.s32 7, %v2699
        %v2701 = vrot.slane %v430, %v2700
        %v2702 = vlaneseq
        %v2703 = vshrl.u32 %v2702, 7
        %v2704 = vsub.s32 7, %v2703
        %v2705 = vrot.slane %v432, %v2704
        %v2706 = vmul.f32 %v2701, %v2372
        %v2707 = vmul.f32 %v2705, %v2373
        %v2708 = vadd.f32 %v2696, %v2706
        %v2709 = vadd.f32 %v2697, %v2707
        %v2712 = vrot.slane %v2708, 4
        %v2713 = vrot.slane %v2709, 4
        %2716 = vst [vmem:[%s286] sm:$0xf0] %v2712
        %2717 = vst [vmem:[%s286 + $0x8] sm:$0xf0] %v2713
        %v2718 = vlaneseq
        %v2719 = vshrl.u32 %v2718, 7
        %v2720 = vsub.s32 0, %v2719
        %v2721 = vrot.slane %v436, %v2720
        %v2722 = vlaneseq
        %v2723 = vshrl.u32 %v2722, 7
        %v2724 = vsub.s32 0, %v2723
        %v2725 = vrot.slane %v438, %v2724
        %v2726 = vmul.f32 %v2721, %v2330
        %v2727 = vmul.f32 %v2725, %v2331
        %2728 = vmatprep.subr.mxu0 %v438
        %2729 = vmatpush1.msra.mxu0 %v436
        %2730 = vmatprep.subr.mxu0 0.0
        %2731 = vmatpush1.msra.mxu0 0.0
        %2732 = vmatprep.subr.mxu0 0.0
        %2733 = vmatpush1.msra.mxu0 0.0
        %2734 = vmatprep.subr.mxu0 0.0
        %2735 = vmatpush1.msra.mxu0 0.0
        %2736 = vmatprep.subr.mxu0 0.0
        %2737 = vmatpush1.msra.mxu0 0.0
        %2738 = vmatprep.subr.mxu0 0.0
        %2739 = vmatpush1.msra.mxu0 0.0
        %2740 = vmatprep.subr.mxu0 0.0
        %2741 = vmatpush1.msra.mxu0 0.0
        %2742 = vmatprep.subr.mxu0 0.0
        %2743 = vmatpush1.msra.mxu0 0.0
        %2744 = vmatprep.subr.mxu0 0.0
        %2745 = vmatpush1.msra.mxu0 0.0
        %2746 = vmatprep.subr.mxu0 0.0
        %2747 = vmatpush1.msra.mxu0 0.0
        %2748 = vmatprep.subr.mxu0 0.0
        %2749 = vmatpush1.msra.mxu0 0.0
        %2750 = vmatprep.subr.mxu0 0.0
        %2751 = vmatpush1.msra.mxu0 0.0
        %2752 = vmatprep.subr.mxu0 0.0
        %2753 = vmatpush1.msra.mxu0 0.0
        %2754 = vmatprep.subr.mxu0 0.0
        %2755 = vmatpush1.msra.mxu0 0.0
        %2756 = vmatprep.subr.mxu0 0.0
        %2757 = vmatpush1.msra.mxu0 0.0
        %2758 = vmatprep.subr.mxu0 0.0
        %2759 = vmatpush1.msra.mxu0 0.0
        %2760 = vmatprep.subr.mxu0 0.0
        %2761 = vmatpush1.msra.mxu0 0.0
        %2762 = vmatprep.subr.mxu0 0.0
        %2763 = vmatpush1.msra.mxu0 0.0
        %2764 = vmatprep.subr.mxu0 0.0
        %2765 = vmatpush1.msra.mxu0 0.0
        %2766 = vmatprep.subr.mxu0 0.0
        %2767 = vmatpush1.msra.mxu0 0.0
        %2768 = vmatprep.subr.mxu0 0.0
        %2769 = vmatpush1.msra.mxu0 0.0
        %2770 = vmatprep.subr.mxu0 0.0
        %2771 = vmatpush1.msra.mxu0 0.0
        %2772 = vmatprep.subr.mxu0 0.0
        %2773 = vmatpush1.msra.mxu0 0.0
        %2774 = vmatprep.subr.mxu0 0.0
        %2775 = vmatpush1.msra.mxu0 0.0
        %2776 = vmatprep.subr.mxu0 0.0
        %2777 = vmatpush1.msra.mxu0 0.0
        %2778 = vmatprep.subr.mxu0 0.0
        %2779 = vmatpush1.msra.mxu0 0.0
        %2780 = vmatprep.subr.mxu0 0.0
        %2781 = vmatpush1.msra.mxu0 0.0
        %2782 = vmatprep.subr.mxu0 0.0
        %2783 = vmatpush1.msra.mxu0 0.0
        %2784 = vmatprep.subr.mxu0 0.0
        %2785 = vmatpush1.msra.mxu0 0.0
        %2786 = vmatprep.subr.mxu0 0.0
        %2787 = vmatpush1.msra.mxu0 0.0
        %2788 = vmatprep.subr.mxu0 0.0
        %2789 = vmatpush1.msra.mxu0 0.0
        %2790 = vmatprep.subr.mxu0 0.0
        %2791 = vmatpush1.msra.mxu0 0.0
        %2792 = vmatprep.mubr.f32.mxu0 0.0
        %2793 = vmatmul.mubr.f32.gmra.mrb[0].mxu0 %v2386
        %v2794 = vpop.f32.mrb[0].mxu0
        %v2795 = vadd.f32 %v2726, %v2794
        %v2796 = vpop.f32.mrb[0].mxu0
        %v2797 = vadd.f32 %v2727, %v2796
        %2798 = vdwg.mxu0
        %v2799 = vlaneseq
        %v2800 = vshrl.u32 %v2799, 7
        %v2801 = vsub.s32 1, %v2800
        %v2802 = vrot.slane %v436, %v2801
        %v2803 = vlaneseq
        %v2804 = vshrl.u32 %v2803, 7
        %v2805 = vsub.s32 1, %v2804
        %v2806 = vrot.slane %v438, %v2805
        %v2807 = vmul.f32 %v2802, %v2336
        %v2808 = vmul.f32 %v2806, %v2337
        %v2809 = vadd.f32 %v2795, %v2807
        %v2810 = vadd.f32 %v2797, %v2808
        %v2811 = vlaneseq
        %v2812 = vshrl.u32 %v2811, 7
        %v2813 = vsub.s32 2, %v2812
        %v2814 = vrot.slane %v436, %v2813
        %v2815 = vlaneseq
        %v2816 = vshrl.u32 %v2815, 7
        %v2817 = vsub.s32 2, %v2816
        %v2818 = vrot.slane %v438, %v2817
        %v2819 = vmul.f32 %v2814, %v2342
        %v2820 = vmul.f32 %v2818, %v2343
        %v2821 = vadd.f32 %v2809, %v2819
        %v2822 = vadd.f32 %v2810, %v2820
        %v2823 = vlaneseq
        %v2824 = vshrl.u32 %v2823, 7
        %v2825 = vsub.s32 3, %v2824
        %v2826 = vrot.slane %v436, %v2825
        %v2827 = vlaneseq
        %v2828 = vshrl.u32 %v2827, 7
        %v2829 = vsub.s32 3, %v2828
        %v2830 = vrot.slane %v438, %v2829
        %v2831 = vmul.f32 %v2826, %v2348
        %v2832 = vmul.f32 %v2830, %v2349
        %v2833 = vadd.f32 %v2821, %v2831
        %v2834 = vadd.f32 %v2822, %v2832
        %v2835 = vlaneseq
        %v2836 = vshrl.u32 %v2835, 7
        %v2837 = vsub.s32 4, %v2836
        %v2838 = vrot.slane %v436, %v2837
        %v2839 = vlaneseq
        %v2840 = vshrl.u32 %v2839, 7
        %v2841 = vsub.s32 4, %v2840
        %v2842 = vrot.slane %v438, %v2841
        %v2843 = vmul.f32 %v2838, %v2354
        %v2844 = vmul.f32 %v2842, %v2355
        %v2845 = vadd.f32 %v2833, %v2843
        %v2846 = vadd.f32 %v2834, %v2844
        %v2847 = vlaneseq
        %v2848 = vshrl.u32 %v2847, 7
        %v2849 = vsub.s32 5, %v2848
        %v2850 = vrot.slane %v436, %v2849
        %v2851 = vlaneseq
        %v2852 = vshrl.u32 %v2851, 7
        %v2853 = vsub.s32 5, %v2852
        %v2854 = vrot.slane %v438, %v2853
        %v2855 = vmul.f32 %v2850, %v2360
        %v2856 = vmul.f32 %v2854, %v2361
        %v2857 = vadd.f32 %v2845, %v2855
        %v2858 = vadd.f32 %v2846, %v2856
        %v2859 = vlaneseq
        %v2860 = vshrl.u32 %v2859, 7
        %v2861 = vsub.s32 6, %v2860
        %v2862 = vrot.slane %v436, %v2861
        %v2863 = vlaneseq
        %v2864 = vshrl.u32 %v2863, 7
        %v2865 = vsub.s32 6, %v2864
        %v2866 = vrot.slane %v438, %v2865
        %v2867 = vmul.f32 %v2862, %v2366
        %v2868 = vmul.f32 %v2866, %v2367
        %v2869 = vadd.f32 %v2857, %v2867
        %v2870 = vadd.f32 %v2858, %v2868
        %v2871 = vlaneseq
        %v2872 = vshrl.u32 %v2871, 7
        %v2873 = vsub.s32 7, %v2872
        %v2874 = vrot.slane %v436, %v2873
        %v2875 = vlaneseq
        %v2876 = vshrl.u32 %v2875, 7
        %v2877 = vsub.s32 7, %v2876
        %v2878 = vrot.slane %v438, %v2877
        %v2879 = vmul.f32 %v2874, %v2372
        %v2880 = vmul.f32 %v2878, %v2373
        %v2881 = vadd.f32 %v2869, %v2879
        %v2882 = vadd.f32 %v2870, %v2880
        %2883 = vst [vmem:[%s286 + $0x10] sm:$0xf] %v2881
        %2884 = vst [vmem:[%s286 + $0x18] sm:$0xf] %v2882
        %v2885 = vlaneseq
        %v2886 = vshrl.u32 %v2885, 7
        %v2887 = vsub.s32 0, %v2886
        %v2888 = vrot.slane %v442, %v2887
        %v2889 = vlaneseq
        %v2890 = vshrl.u32 %v2889, 7
        %v2891 = vsub.s32 0, %v2890
        %v2892 = vrot.slane %v444, %v2891
        %v2893 = vmul.f32 %v2888, %v2330
        %v2894 = vmul.f32 %v2892, %v2331
        %2895 = vmatprep.subr.mxu0 %v444
        %2896 = vmatpush1.msra.mxu0 %v442
        %2897 = vmatprep.subr.mxu0 0.0
        %2898 = vmatpush1.msra.mxu0 0.0
        %2899 = vmatprep.subr.mxu0 0.0
        %2900 = vmatpush1.msra.mxu0 0.0
        %2901 = vmatprep.subr.mxu0 0.0
        %2902 = vmatpush1.msra.mxu0 0.0
        %2903 = vmatprep.subr.mxu0 0.0
        %2904 = vmatpush1.msra.mxu0 0.0
        %2905 = vmatprep.subr.mxu0 0.0
        %2906 = vmatpush1.msra.mxu0 0.0
        %2907 = vmatprep.subr.mxu0 0.0
        %2908 = vmatpush1.msra.mxu0 0.0
        %2909 = vmatprep.subr.mxu0 0.0
        %2910 = vmatpush1.msra.mxu0 0.0
        %2911 = vmatprep.subr.mxu0 0.0
        %2912 = vmatpush1.msra.mxu0 0.0
        %2913 = vmatprep.subr.mxu0 0.0
        %2914 = vmatpush1.msra.mxu0 0.0
        %2915 = vmatprep.subr.mxu0 0.0
        %2916 = vmatpush1.msra.mxu0 0.0
        %2917 = vmatprep.subr.mxu0 0.0
        %2918 = vmatpush1.msra.mxu0 0.0
        %2919 = vmatprep.subr.mxu0 0.0
        %2920 = vmatpush1.msra.mxu0 0.0
        %2921 = vmatprep.subr.mxu0 0.0
        %2922 = vmatpush1.msra.mxu0 0.0
        %2923 = vmatprep.subr.mxu0 0.0
        %2924 = vmatpush1.msra.mxu0 0.0
        %2925 = vmatprep.subr.mxu0 0.0
        %2926 = vmatpush1.msra.mxu0 0.0
        %2927 = vmatprep.subr.mxu0 0.0
        %2928 = vmatpush1.msra.mxu0 0.0
        %2929 = vmatprep.subr.mxu0 0.0
        %2930 = vmatpush1.msra.mxu0 0.0
        %2931 = vmatprep.subr.mxu0 0.0
        %2932 = vmatpush1.msra.mxu0 0.0
        %2933 = vmatprep.subr.mxu0 0.0
        %2934 = vmatpush1.msra.mxu0 0.0
        %2935 = vmatprep.subr.mxu0 0.0
        %2936 = vmatpush1.msra.mxu0 0.0
        %2937 = vmatprep.subr.mxu0 0.0
        %2938 = vmatpush1.msra.mxu0 0.0
        %2939 = vmatprep.subr.mxu0 0.0
        %2940 = vmatpush1.msra.mxu0 0.0
        %2941 = vmatprep.subr.mxu0 0.0
        %2942 = vmatpush1.msra.mxu0 0.0
        %2943 = vmatprep.subr.mxu0 0.0
        %2944 = vmatpush1.msra.mxu0 0.0
        %2945 = vmatprep.subr.mxu0 0.0
        %2946 = vmatpush1.msra.mxu0 0.0
        %2947 = vmatprep.subr.mxu0 0.0
        %2948 = vmatpush1.msra.mxu0 0.0
        %2949 = vmatprep.subr.mxu0 0.0
        %2950 = vmatpush1.msra.mxu0 0.0
        %2951 = vmatprep.subr.mxu0 0.0
        %2952 = vmatpush1.msra.mxu0 0.0
        %2953 = vmatprep.subr.mxu0 0.0
        %2954 = vmatpush1.msra.mxu0 0.0
        %2955 = vmatprep.subr.mxu0 0.0
        %2956 = vmatpush1.msra.mxu0 0.0
        %2957 = vmatprep.subr.mxu0 0.0
        %2958 = vmatpush1.msra.mxu0 0.0
        %2959 = vmatprep.mubr.f32.mxu0 0.0
        %2960 = vmatmul.mubr.f32.gmra.mrb[0].mxu0 %v2386
        %v2961 = vpop.f32.mrb[0].mxu0
        %v2962 = vadd.f32 %v2893, %v2961
        %v2963 = vpop.f32.mrb[0].mxu0
        %v2964 = vadd.f32 %v2894, %v2963
        %2965 = vdwg.mxu0
        %v2966 = vlaneseq
        %v2967 = vshrl.u32 %v2966, 7
        %v2968 = vsub.s32 1, %v2967
        %v2969 = vrot.slane %v442, %v2968
        %v2970 = vlaneseq
        %v2971 = vshrl.u32 %v2970, 7
        %v2972 = vsub.s32 1, %v2971
        %v2973 = vrot.slane %v444, %v2972
        %v2974 = vmul.f32 %v2969, %v2336
        %v2975 = vmul.f32 %v2973, %v2337
        %v2976 = vadd.f32 %v2962, %v2974
        %v2977 = vadd.f32 %v2964, %v2975
        %v2978 = vlaneseq
        %v2979 = vshrl.u32 %v2978, 7
        %v2980 = vsub.s32 2, %v2979
        %v2981 = vrot.slane %v442, %v2980
        %v2982 = vlaneseq
        %v2983 = vshrl.u32 %v2982, 7
        %v2984 = vsub.s32 2, %v2983
        %v2985 = vrot.slane %v444, %v2984
        %v2986 = vmul.f32 %v2981, %v2342
        %v2987 = vmul.f32 %v2985, %v2343
        %v2988 = vadd.f32 %v2976, %v2986
        %v2989 = vadd.f32 %v2977, %v2987
        %v2990 = vlaneseq
        %v2991 = vshrl.u32 %v2990, 7
        %v2992 = vsub.s32 3, %v2991
        %v2993 = vrot.slane %v442, %v2992
        %v2994 = vlaneseq
        %v2995 = vshrl.u32 %v2994, 7
        %v2996 = vsub.s32 3, %v2995
        %v2997 = vrot.slane %v444, %v2996
        %v2998 = vmul.f32 %v2993, %v2348
        %v2999 = vmul.f32 %v2997, %v2349
        %v3000 = vadd.f32 %v2988, %v2998
        %v3001 = vadd.f32 %v2989, %v2999
        %v3002 = vlaneseq
        %v3003 = vshrl.u32 %v3002, 7
        %v3004 = vsub.s32 4, %v3003
        %v3005 = vrot.slane %v442, %v3004
        %v3006 = vlaneseq
        %v3007 = vshrl.u32 %v3006, 7
        %v3008 = vsub.s32 4, %v3007
        %v3009 = vrot.slane %v444, %v3008
        %v3010 = vmul.f32 %v3005, %v2354
        %v3011 = vmul.f32 %v3009, %v2355
        %v3012 = vadd.f32 %v3000, %v3010
        %v3013 = vadd.f32 %v3001, %v3011
        %v3014 = vlaneseq
        %v3015 = vshrl.u32 %v3014, 7
        %v3016 = vsub.s32 5, %v3015
        %v3017 = vrot.slane %v442, %v3016
        %v3018 = vlaneseq
        %v3019 = vshrl.u32 %v3018, 7
        %v3020 = vsub.s32 5, %v3019
        %v3021 = vrot.slane %v444, %v3020
        %v3022 = vmul.f32 %v3017, %v2360
        %v3023 = vmul.f32 %v3021, %v2361
        %v3024 = vadd.f32 %v3012, %v3022
        %v3025 = vadd.f32 %v3013, %v3023
        %v3026 = vlaneseq
        %v3027 = vshrl.u32 %v3026, 7
        %v3028 = vsub.s32 6, %v3027
        %v3029 = vrot.slane %v442, %v3028
        %v3030 = vlaneseq
        %v3031 = vshrl.u32 %v3030, 7
        %v3032 = vsub.s32 6, %v3031
        %v3033 = vrot.slane %v444, %v3032
        %v3034 = vmul.f32 %v3029, %v2366
        %v3035 = vmul.f32 %v3033, %v2367
        %v3036 = vadd.f32 %v3024, %v3034
        %v3037 = vadd.f32 %v3025, %v3035
        %v3038 = vlaneseq
        %v3039 = vshrl.u32 %v3038, 7
        %v3040 = vsub.s32 7, %v3039
        %v3041 = vrot.slane %v442, %v3040
        %v3042 = vlaneseq
        %v3043 = vshrl.u32 %v3042, 7
        %v3044 = vsub.s32 7, %v3043
        %v3045 = vrot.slane %v444, %v3044
        %v3046 = vmul.f32 %v3041, %v2372
        %v3047 = vmul.f32 %v3045, %v2373
        %v3048 = vadd.f32 %v3036, %v3046
        %v3049 = vadd.f32 %v3037, %v3047
        %v3052 = vrot.slane %v3048, 4
        %v3053 = vrot.slane %v3049, 4
        %3056 = vst [vmem:[%s286 + $0x10] sm:$0xf0] %v3052
        %3057 = vst [vmem:[%s286 + $0x18] sm:$0xf0] %v3053
        %s3058 = sand.u32 %s162, 1
        %s3059 = scalar_lea.sflag [#allocation4], %s3058
        %s3060 = sand.u32 %s162, 1
        %s3061 = smul.addr %s3060, 32
        %s3062 = scalar_lea.vmem [#allocation9], %s3061
        // Predicated region
        $region57: #{tpu_custom_call.1} parent=43 // pred_check
          %p3063 = pneg %p172
        $region58: #{tpu_custom_call.1} parent=43 // pred_check_branch
          %3065 = sbr.rel (%p3063) target = $region60
        $region59: #{tpu_custom_call.1} parent=43 // pred_region
          %s3067 = ssub.s32 512, 512
          %3068 = vsyncadd %s3059, %s3067
          %s3069 = smul.addr %s23, 4
          %s3070 = smul.addr %s3069, 128
          %s3071 = scalar_lea.hbm %s6, %s3070
          %s3072 = sshll.u32 %s3062, 4
          %s3073 = int_to_ptr.vmem [resolvable:$true] %s3072
          %3078 = dma.vmem_to_hbm [thread:$0]  %s3073, 512, %s3071, %s3059, 256, 256, 16
        $region60: #{tpu_custom_call.1} parent=43 // pred_fallthru
          _
      $region44: #{tpu_custom_call.1} parent=5 // pred_fallthru
        _
      %p3079 = scmp.le.s32.totalorder 2, %s18
      // Predicated region
      $region61: #{tpu_custom_call.1} parent=5 // pred_check
        %p3080 = pneg %p3079
      $region62: #{tpu_custom_call.1} parent=5 // pred_check_branch
        %3082 = sbr.rel (%p3080) target = $region64
      $region63: #{tpu_custom_call.1} parent=5 // pred_region
        %s3083 = ssub.s32 %s18, 2
        // Predicated region
        $region65: #{tpu_custom_call.1} parent=63 // pred_check
          %p3084 = pneg %p178
        $region66: #{tpu_custom_call.1} parent=63 // pred_check_branch
          %3086 = sbr.rel (%p3084) target = $region68
        $region67: #{tpu_custom_call.1} parent=63 // pred_region
          %s3087 = sand.u32 %s163, 1
          %s3088 = scalar_lea.sflag [#allocation4], %s3087
          %s3089 = sand.u32 %s163, 1
          %s3090 = smul.addr %s3089, 32
          %s3091 = scalar_lea.vmem [#allocation9], %s3090
          %3092 = dma.done %s3088, 512
        $region68: #{tpu_custom_call.1} parent=63 // pred_fallthru
          _
      $region64: #{tpu_custom_call.1} parent=5 // pred_fallthru
        _
    $region6: #{tpu_custom_call.1} parent=1 // loop_footer
      %s22 = sadd.s32 1, %s18
    $region7: #{tpu_custom_call.1} parent=1 // loop_footer_branch
      %17 = sbr.rel target = $region3
    $region8: #{tpu_custom_call.1} parent=1 // loop_exit
      _
    %3093 = vsyncpa [#allocation3], 1
    %s3094 = scalar_lea.sflag [#allocation3], 1
    %3095 = vsyncpa %s3094, 1
    %3096 = vsyncpa [#allocation4], 1
    %s3097 = scalar_lea.sflag [#allocation4], 1
    %3098 = vsyncpa %s3097, 1
    %3099 = vsyncpa [#allocation5], 1
    %s3100 = scalar_lea.sflag [#allocation5], 1
    %3101 = vsyncpa %s3100, 1
    %3102 = vsyncpa [#allocation8], 1

</llo_original>
